<compile_context>
chip_gen: v6e
topology: v6e:2x2x1
jax: 0.10.0
libtpu: 0.0.40
codegen_flags: <defaults>
</compile_context>

<pallas_src>
import functools

import jax
import jax.numpy as jnp
import numpy as np
from jax import lax
from jax.experimental import pallas as pl
from jax.experimental.pallas import tpu as pltpu

NEG_SLOPE = 0.01  # torch.nn.LeakyReLU default negative_slope


def _leaky(x):
    # for slope in (0, 1): leaky_relu(x) == max(x, slope * x)
    return jnp.maximum(x, NEG_SLOPE * x)


def _round_up(x, m):
    return ((x + m - 1) // m) * m


# ---------------------------------------------------------------------------
# Fused CausalConvolutionBlock kernel (one L-tile of one batch element).
#   x_ref   : (1, TL, Cp_in)          current L-tile of the block input
#   w1_ref  : (K, Cp_in, Cp_out)      conv1 weights, one (Cp_in, Cp_out) per tap
#   b1_ref  : (1, Cp_out)             f32
#   w2_ref  : (K, Cp_out, Cp_out)     conv2 weights
#   b2_ref  : (1, Cp_out)             f32
#   [wres_ref : (Cp_in, Cp_out), bres_ref : (1, Cp_out)]   only if has_res
#   o_ref   : (1, TL, Cp_out)
#   [halo_ref : (HALO, Cp_in) VMEM scratch]   persistent halo carry (pad > 0)
# ---------------------------------------------------------------------------
def _block_kernel(x_ref, w1_ref, b1_ref, w2_ref, b2_ref, *rest,
                  K, d, pad, final, has_res):
    idx = 0
    if has_res:
        wres_ref, bres_ref = rest[idx], rest[idx + 1]
        idx += 2
    o_ref = rest[idx]
    idx += 1
    halo_ref = rest[idx] if pad > 0 else None

    TL = o_ref.shape[1]
    TLH = TL + pad                       # rows of h1 needed (tile + conv2 halo)
    j = pl.program_id(1)                 # L-tile index (sequential axis)

    x_cur = x_ref[0]                     # (TL, Cp_in)

    if pad > 0:
        HALO = halo_ref.shape[0]         # round_up(2*pad, 16), may exceed TL

        @pl.when(j == 0)
        def _():                         # t < 0 context is zeros
            halo_ref[...] = jnp.zeros_like(halo_ref)

        xwin = jnp.concatenate([halo_ref[...], x_cur], axis=0)   # (HALO+TL, Cp_in)
        # carry: the next L-tile's halo is the last HALO rows of this window
        halo_ref[...] = xwin[TL:, :]
        extra = HALO - 2 * pad
    else:
        xwin = x_cur
        extra = 0

    # conv1 + chomp1 + bias + LeakyReLU: K accumulated MXU matmuls, f32 acc.
    acc1 = jnp.dot(xwin[extra:extra + TLH, :], w1_ref[0],
                   preferred_element_type=jnp.float32)
    for k in range(1, K):
        s = extra + k * d
        acc1 = acc1 + jnp.dot(xwin[s:s + TLH, :], w1_ref[k],
                              preferred_element_type=jnp.float32)
    h1 = _leaky(acc1 + b1_ref[...])      # (TLH, Cp_out) f32

    # conv2's causal left padding must see true zeros for t < 0 (torch semantics:
    # the padding is applied to conv2's *input*, not conv1 applied to zeros).
    if pad > 0:
        row = lax.broadcasted_iota(jnp.int32, (TLH, 1), 0)
        h1 = jnp.where(row + j * TL >= pad, h1, 0.0)

    # conv2 + chomp2 + bias + LeakyReLU.
    h1c = h1.astype(w2_ref.dtype)
    acc2 = jnp.dot(h1c[0:TL, :], w2_ref[0], preferred_element_type=jnp.float32)
    for k in range(1, K):
        s = k * d
        acc2 = acc2 + jnp.dot(h1c[s:s + TL, :], w2_ref[k],
                              preferred_element_type=jnp.float32)
    out = _leaky(acc2 + b2_ref[...])     # (TL, Cp_out) f32

    # Residual branch: 1x1 conv, or identity (plain add) when in_ch == out_ch.
    if has_res:
        out = out + (jnp.dot(x_cur, wres_ref[...],
                             preferred_element_type=jnp.float32) + bres_ref[...])
    else:
        out = out + x_cur.astype(jnp.float32)

    if final:
        out = _leaky(out)
    o_ref[...] = out.astype(o_ref.dtype)[None]


# ---------------------------------------------------------------------------
# One CausalConvolutionBlock on padded channels-last tensors.
#   x: (B, L_pad, Cp_in) in compute_dtype  ->  (B, L_pad, Cp_out)
# ---------------------------------------------------------------------------
def _run_block(x, pp, *, kernel_size, dilation, final, tile_l, compute_dtype):
    B, L_pad, Cp_in = x.shape
    K = kernel_size
    d = dilation
    pad = (K - 1) * d
    TL = tile_l
    assert L_pad % TL == 0 and TL % 16 == 0
    nL = L_pad // TL
    Cp_out = pp["w1s"].shape[-1]
    assert pp["w1s"].shape == (K, Cp_in, Cp_out)
    has_res = pp["wres_s"] is not None
    assert has_res or Cp_in == Cp_out
    HALO = _round_up(2 * pad, 16)

    kern = functools.partial(_block_kernel, K=K, d=d, pad=pad,
                             final=final, has_res=has_res)

    in_specs = [
        pl.BlockSpec((1, TL, Cp_in), lambda b, j: (b, j, 0)),
        pl.BlockSpec((K, Cp_in, Cp_out), lambda b, j: (0, 0, 0)),
        pl.BlockSpec((1, Cp_out), lambda b, j: (0, 0)),
        pl.BlockSpec((K, Cp_out, Cp_out), lambda b, j: (0, 0, 0)),
        pl.BlockSpec((1, Cp_out), lambda b, j: (0, 0)),
    ]
    args = [x, pp["w1s"], pp["b1p"], pp["w2s"], pp["b2p"]]
    if has_res:
        in_specs += [pl.BlockSpec((Cp_in, Cp_out), lambda b, j: (0, 0)),
                     pl.BlockSpec((1, Cp_out), lambda b, j: (0, 0))]
        args += [pp["wres_s"], pp["bres_p"]]

    scratch = [pltpu.VMEM((HALO, Cp_in), compute_dtype)] if pad > 0 else []
    # L-tile axis carries the halo in VMEM scratch -> must run sequentially.
    dim_sem = ("parallel", "arbitrary") if pad > 0 else ("parallel", "parallel")

    return pl.pallas_call(
        kern,
        grid_spec=pltpu.PrefetchScalarGridSpec(
            num_scalar_prefetch=0,
            grid=(B, nL),
            in_specs=in_specs,
            out_specs=pl.BlockSpec((1, TL, Cp_out), lambda b, j: (b, j, 0)),
            scratch_shapes=scratch),
        out_shape=jax.ShapeDtypeStruct((B, L_pad, Cp_out), compute_dtype),
        compiler_params=pltpu.CompilerParams(
            dimension_semantics=dim_sem,
            vmem_limit_bytes=32 * 1024 * 1024),
    )(*args)


# ---------------------------------------------------------------------------
# Parameter preparation (hoisted out of the jitted forward): pad channels to
# multiples of 128 and keep the K conv taps as a leading axis so each conv is
# K accumulated matmuls.  Call ONCE, then reuse the prepared pytree.
# ---------------------------------------------------------------------------
def prepare_causal_cnn_params(layer_params, compute_dtype=jnp.bfloat16):
    prepared = []
    for p in layer_params:
        w1 = p["w1"]                          # (Cout, Cin, K) — PyTorch layout
        Cout, Cin, K = w1.shape
        Cp_in = _round_up(Cin, 128)
        Cp_out = _round_up(Cout, 128)

        def stack(w, cpi):                    # (co, ci, K) -> (K, cpi, Cp_out)
            co, ci, _ = w.shape
            wt = jnp.transpose(w, (2, 1, 0))                  # (K, ci, co)
            wt = jnp.pad(wt, ((0, 0), (0, cpi - ci), (0, Cp_out - co)))
            return wt.astype(compute_dtype)

        def pad_bias(b):
            return (jnp.pad(b, (0, Cp_out - b.shape[0]))
                    .reshape(1, Cp_out).astype(jnp.float32))

        pp = {"w1s": stack(w1, Cp_in), "b1p": pad_bias(p["b1"]),
              "w2s": stack(p["w2"], Cp_out), "b2p": pad_bias(p["b2"])}
        if p.get("wres") is not None:
            wr = jnp.transpose(p["wres"][:, :, 0])            # (Cin, Cout)
            wr = jnp.pad(wr, ((0, Cp_in - Cin), (0, Cp_out - Cout)))
            pp["wres_s"] = wr.astype(compute_dtype)
            pp["bres_p"] = pad_bias(p["bres"])
        else:
            pp["wres_s"] = None
            pp["bres_p"] = None
        prepared.append(pp)
    return prepared


# ---------------------------------------------------------------------------
# Full CausalCNN wrapper: NCL in, NCL out.  One boundary transpose/pad each way.
# ---------------------------------------------------------------------------
def causal_cnn(x_ncl, prepared_params, layer_cfgs, *, tile_l=1024,
               compute_dtype=jnp.bfloat16):
    B, Cin, L = x_ncl.shape
    TL = min(_round_up(tile_l, 16), _round_up(L, 16))
    L_pad = _round_up(L, TL)
    Cp0 = _round_up(Cin, 128)

    x = jnp.transpose(x_ncl, (0, 2, 1)).astype(compute_dtype)      # (B, L, Cin)
    x = jnp.pad(x, ((0, 0), (0, L_pad - L), (0, Cp0 - Cin)))       # lane/tile pad

    h = x
    for pp, cfg in zip(prepared_params, layer_cfgs):
        h = _run_block(h, pp, kernel_size=cfg["kernel_size"],
                       dilation=cfg["dilation"], final=cfg["final"],
                       tile_l=TL, compute_dtype=compute_dtype)

    Cout = layer_cfgs[-1]["out_channels"]
    out = h[:, :L, :Cout]
    return jnp.transpose(out, (0, 2, 1)).astype(jnp.float32)       # (B, Cout, L)


# ---------------------------------------------------------------------------
# Pure-JAX reference (mirrors the PyTorch modules exactly) for verification.
# ---------------------------------------------------------------------------
def _reference_block(x, p, cfg):
    K, dilation = cfg["kernel_size"], cfg["dilation"]
    pad = (K - 1) * dilation
    L = x.shape[2]

    def conv_chomp(h, w, b):
        y = lax.conv_general_dilated(
            h, w, window_strides=(1,), padding=[(pad, pad)],
            rhs_dilation=(dilation,), dimension_numbers=("NCH", "OIH", "NCH"))
        return y[:, :, :L] + b[None, :, None]

    h = _leaky(conv_chomp(x, p["w1"], p["b1"]))
    h = _leaky(conv_chomp(h, p["w2"], p["b2"]))
    if p.get("wres") is not None:
        res = (jnp.einsum("oi,bil->bol", p["wres"][:, :, 0], x)
               + p["bres"][None, :, None])
    else:
        res = x
    out = h + res
    return _leaky(out) if cfg["final"] else out


def _reference_cnn(x, layer_params, layer_cfgs):
    h = x
    for p, cfg in zip(layer_params, layer_cfgs):
        h = _reference_block(h, p, cfg)
    return h


# ---------------------------------------------------------------------------
# Synthetic parameter init (PyTorch-style uniform) + CausalCNN layer plan.
# ---------------------------------------------------------------------------
def _init_block_params(key, in_ch, out_ch, kernel_size):
    ks = jax.random.split(key, 6)
    b1 = 1.0 / np.sqrt(in_ch * kernel_size)
    b2 = 1.0 / np.sqrt(out_ch * kernel_size)
    br = 1.0 / np.sqrt(in_ch)
    p = {
        "w1": jax.random.uniform(ks[0], (out_ch, in_ch, kernel_size),
                                 jnp.float32, -b1, b1),
        "b1": jax.random.uniform(ks[1], (out_ch,), jnp.float32, -b1, b1),
        "w2": jax.random.uniform(ks[2], (out_ch, out_ch, kernel_size),
                                 jnp.float32, -b2, b2),
        "b2": jax.random.uniform(ks[3], (out_ch,), jnp.float32, -b2, b2),
    }
    if in_ch != out_ch:
        p["wres"] = jax.random.uniform(ks[4], (out_ch, in_ch, 1),
                                       jnp.float32, -br, br)
        p["bres"] = jax.random.uniform(ks[5], (out_ch,), jnp.float32, -br, br)
    else:
        p["wres"] = None
        p["bres"] = None
    return p


def make_causal_cnn(key, in_channels, channels, depth, out_channels, kernel_size):
    """Builds (params, cfgs) matching torch CausalCNN(forward=True)."""
    keys = jax.random.split(key, depth + 1)
    params, cfgs = [], []
    dilation = 1
    for i in range(depth):
        cin = in_channels if i == 0 else channels
        params.append(_init_block_params(keys[i], cin, channels, kernel_size))
        cfgs.append(dict(kernel_size=kernel_size, dilation=dilation, final=False,
                         in_channels=cin, out_channels=channels))
        dilation *= 2
    params.append(_init_block_params(keys[depth], channels, out_channels,
                                     kernel_size))
    cfgs.append(dict(kernel_size=kernel_size, dilation=dilation, final=False,
                     in_channels=channels, out_channels=out_channels))
    return params, cfgs


if __name__ == "__main__":
    B, IN_CH, CH, OUT_CH, DEPTH, KS, L = 2, 4, 8, 6, 3, 3, 48

    key = jax.random.PRNGKey(0)
    k_x, k_p = jax.random.split(key)
    x = jax.random.normal(k_x, (B, IN_CH, L), dtype=jnp.float32)    # (B, C, L)
    params, cfgs = make_causal_cnn(k_p, IN_CH, CH, DEPTH, OUT_CH, KS)

    ref = jax.block_until_ready(_reference_cnn(x, params, cfgs))

    # f32 path; tile_l=16 -> multiple L tiles, and the last block's causal
    # context (2*pad = 32) exceeds TL = 16, exercising the VMEM halo carry
    # decoupled from dilation.
    prep32 = prepare_causal_cnn_params(params, jnp.float32)
    fwd32 = jax.jit(functools.partial(causal_cnn, layer_cfgs=cfgs, tile_l=16,
                                      compute_dtype=jnp.float32))
    out32 = jax.block_until_ready(fwd32(x, prep32))
    assert out32.shape == (B, OUT_CH, L), out32.shape
    np.testing.assert_allclose(np.asarray(out32), np.asarray(ref),
                               rtol=2e-2, atol=2e-2)

    # bf16 default path (bf16-native MXU, half the DMA bytes), looser tolerance.
    prepbf = prepare_causal_cnn_params(params, jnp.bfloat16)
    fwdbf = jax.jit(functools.partial(causal_cnn, layer_cfgs=cfgs, tile_l=16,
                                      compute_dtype=jnp.bfloat16))
    outbf = jax.block_until_ready(fwdbf(x, prepbf))
    np.testing.assert_allclose(np.asarray(outbf), np.asarray(ref),
                               rtol=1e-1, atol=1e-1)

    print("KERNEL_OK")
</pallas_src>

<mosaic_0001>
module attributes {stable_mosaic.version = 11 : i64} {
  func.func @_block_kernel(%arg0: i32, %arg1: i32, %arg2: memref<1x16x128xf32, #tpu.memory_space<vmem>>, %arg3: memref<3x128x128xf32, #tpu.memory_space<vmem>>, %arg4: memref<1x128xf32, #tpu.memory_space<vmem>>, %arg5: memref<3x128x128xf32, #tpu.memory_space<vmem>>, %arg6: memref<1x128xf32, #tpu.memory_space<vmem>>, %arg7: memref<1x16x128xf32, #tpu.memory_space<vmem>>, %arg8: memref<16x128xf32, #tpu.memory_space<vmem>>) attributes {dimension_semantics = [#tpu.dimension_semantics<parallel>, #tpu.dimension_semantics<arbitrary>], iteration_bounds = array<i64: 2, 3>, scalar_prefetch = 0 : i64, scratch_operands = 1 : i64, tpu.core_type = #tpu.core_type<tc>, window_params = [{transform_indices = @transform_0, window_bounds = array<i64: 1, 16, 128>}, {pipeline_mode = #tpu.pipeline_mode<synchronous>, transform_indices = @transform_1, window_bounds = array<i64: 3, 128, 128>}, {pipeline_mode = #tpu.pipeline_mode<synchronous>, transform_indices = @transform_2, window_bounds = array<i64: 1, 128>}, {pipeline_mode = #tpu.pipeline_mode<synchronous>, transform_indices = @transform_3, window_bounds = array<i64: 3, 128, 128>}, {pipeline_mode = #tpu.pipeline_mode<synchronous>, transform_indices = @transform_4, window_bounds = array<i64: 1, 128>}, {transform_indices = @transform_5, window_bounds = array<i64: 1, 16, 128>}]} {
    %c0 = arith.constant 0 : index
    %c0_0 = arith.constant 0 : index
    %c0_1 = arith.constant 0 : index
    %0 = vector.load %arg2[%c0, %c0_0, %c0_1] : memref<1x16x128xf32, #tpu.memory_space<vmem>>, vector<1x16x128xf32>
    %1 = vector.shape_cast %0 : vector<1x16x128xf32> to vector<16x128xf32>
    %c0_i32 = arith.constant 0 : i32
    %2 = arith.cmpi eq, %arg1, %c0_i32 : i32
    %3 = arith.extui %2 : i1 to i32
    %c0_i32_2 = arith.constant 0 : i32
    %4 = arith.cmpi ne, %3, %c0_i32_2 : i32
    scf.if %4 {
      %cst_38 = arith.constant 0.000000e+00 : f32
      %62 = vector.broadcast %cst_38 : f32 to vector<16x128xf32>
      %c0_39 = arith.constant 0 : index
      %c0_40 = arith.constant 0 : index
      %63 = vector.load %arg8[%c0_39, %c0_40] : memref<16x128xf32, #tpu.memory_space<vmem>>, vector<16x128xf32>
      tpu.vector_store %arg8[%c0_39, %c0_40], %62 {strides = array<i32>} : memref<16x128xf32, #tpu.memory_space<vmem>>, vector<16x128xf32>,
    } else {
    }
    %c0_3 = arith.constant 0 : index
    %c0_4 = arith.constant 0 : index
    %5 = vector.load %arg8[%c0_3, %c0_4] : memref<16x128xf32, #tpu.memory_space<vmem>>, vector<16x128xf32>
    %6 = tpu.concatenate %5, %1 in 0 : vector<16x128xf32>, vector<16x128xf32> -> vector<32x128xf32>
    %7 = vector.extract_strided_slice %6 {offsets = [16, 0], sizes = [16, 128], strides = [1, 1]} : vector<32x128xf32> to vector<16x128xf32>
    %c0_5 = arith.constant 0 : index
    %c0_6 = arith.constant 0 : index
    %8 = vector.load %arg8[%c0_5, %c0_6] : memref<16x128xf32, #tpu.memory_space<vmem>>, vector<16x128xf32>
    tpu.vector_store %arg8[%c0_5, %c0_6], %7 {strides = array<i32>} : memref<16x128xf32, #tpu.memory_space<vmem>>, vector<16x128xf32>,
    %9 = vector.extract_strided_slice %6 {offsets = [8, 0], sizes = [20, 128], strides = [1, 1]} : vector<32x128xf32> to vector<20x128xf32>
    %c0_7 = arith.constant 0 : index
    %c0_8 = arith.constant 0 : index
    %c0_9 = arith.constant 0 : index
    %10 = vector.load %arg3[%c0_7, %c0_8, %c0_9] : memref<3x128x128xf32, #tpu.memory_space<vmem>>, vector<1x128x128xf32>
    %11 = vector.shape_cast %10 : vector<1x128x128xf32> to vector<128x128xf32>
    %cst = arith.constant dense<0.000000e+00> : vector<20x128xf32>
    %12 = tpu.matmul %9, %11, %cst {dimension_numbers = #tpu.dot_dimension_numbers<[1], [0], [0], [1], [0, 0, 1, 1], [], []>} : vector<20x128xf32>, vector<128x128xf32>, vector<20x128xf32> -> vector<20x128xf32>
    %13 = vector.extract_strided_slice %6 {offsets = [10, 0], sizes = [20, 128], strides = [1, 1]} : vector<32x128xf32> to vector<20x128xf32>
    %c1 = arith.constant 1 : index
    %c0_10 = arith.constant 0 : index
    %c0_11 = arith.constant 0 : index
    %14 = vector.load %arg3[%c1, %c0_10, %c0_11] : memref<3x128x128xf32, #tpu.memory_space<vmem>>, vector<1x128x128xf32>
    %15 = vector.shape_cast %14 : vector<1x128x128xf32> to vector<128x128xf32>
    %cst_12 = arith.constant dense<0.000000e+00> : vector<20x128xf32>
    %16 = tpu.matmul %13, %15, %cst_12 {dimension_numbers = #tpu.dot_dimension_numbers<[1], [0], [0], [1], [0, 0, 1, 1], [], []>} : vector<20x128xf32>, vector<128x128xf32>, vector<20x128xf32> -> vector<20x128xf32>
    %17 = arith.addf %12, %16 : vector<20x128xf32>
    %18 = vector.extract_strided_slice %6 {offsets = [12, 0], sizes = [20, 128], strides = [1, 1]} : vector<32x128xf32> to vector<20x128xf32>
    %c2 = arith.constant 2 : index
    %c0_13 = arith.constant 0 : index
    %c0_14 = arith.constant 0 : index
    %19 = vector.load %arg3[%c2, %c0_13, %c0_14] : memref<3x128x128xf32, #tpu.memory_space<vmem>>, vector<1x128x128xf32>
    %20 = vector.shape_cast %19 : vector<1x128x128xf32> to vector<128x128xf32>
    %cst_15 = arith.constant dense<0.000000e+00> : vector<20x128xf32>
    %21 = tpu.matmul %18, %20, %cst_15 {dimension_numbers = #tpu.dot_dimension_numbers<[1], [0], [0], [1], [0, 0, 1, 1], [], []>} : vector<20x128xf32>, vector<128x128xf32>, vector<20x128xf32> -> vector<20x128xf32>
    %22 = arith.addf %17, %21 : vector<20x128xf32>
    %c0_16 = arith.constant 0 : index
    %c0_17 = arith.constant 0 : index
    %23 = vector.load %arg4[%c0_16, %c0_17] : memref<1x128xf32, #tpu.memory_space<vmem>>, vector<1x128xf32>
    %24 = vector.broadcast %23 : vector<1x128xf32> to vector<20x128xf32>
    %25 = arith.addf %22, %24 : vector<20x128xf32>
    %cst_18 = arith.constant 0.00999999977 : f32
    %26 = vector.broadcast %cst_18 : f32 to vector<20x128xf32>
    %27 = arith.mulf %26, %25 : vector<20x128xf32>
    %28 = arith.maximumf %25, %27 : vector<20x128xf32>
    %29 = tpu.iota {dimensions = array<i32: 0>} : vector<20x1xi32>
    %c16_i32 = arith.constant 16 : i32
    %30 = arith.muli %arg1, %c16_i32 : i32
    %31 = vector.broadcast %30 : i32 to vector<20x1xi32>
    %32 = arith.addi %29, %31 : vector<20x1xi32>
    %c4_i32 = arith.constant 4 : i32
    %33 = vector.broadcast %c4_i32 : i32 to vector<20x1xi32>
    %34 = arith.cmpi sge, %32, %33 : vector<20x1xi32>
    %cst_19 = arith.constant 0.000000e+00 : f32
    %35 = vector.shape_cast %34 : vector<20x1xi1> to vector<20x1xi1>
    %36 = vector.broadcast %35 : vector<20x1xi1> to vector<20x128xi1>
    %37 = vector.broadcast %cst_19 : f32 to vector<20x128xf32>
    %38 = arith.select %36, %28, %37 : vector<20x128xi1>, vector<20x128xf32>
    %39 = vector.extract_strided_slice %38 {offsets = [0, 0], sizes = [16, 128], strides = [1, 1]} : vector<20x128xf32> to vector<16x128xf32>
    %c0_20 = arith.constant 0 : index
    %c0_21 = arith.constant 0 : index
    %c0_22 = arith.constant 0 : index
    %40 = vector.load %arg5[%c0_20, %c0_21, %c0_22] : memref<3x128x128xf32, #tpu.memory_space<vmem>>, vector<1x128x128xf32>
    %41 = vector.shape_cast %40 : vector<1x128x128xf32> to vector<128x128xf32>
    %cst_23 = arith.constant dense<0.000000e+00> : vector<16x128xf32>
    %42 = tpu.matmul %39, %41, %cst_23 {dimension_numbers = #tpu.dot_dimension_numbers<[1], [0], [0], [1], [0, 0, 1, 1], [], []>} : vector<16x128xf32>, vector<128x128xf32>, vector<16x128xf32> -> vector<16x128xf32>
    %43 = vector.extract_strided_slice %38 {offsets = [2, 0], sizes = [16, 128], strides = [1, 1]} : vector<20x128xf32> to vector<16x128xf32>
    %c1_24 = arith.constant 1 : index
    %c0_25 = arith.constant 0 : index
    %c0_26 = arith.constant 0 : index
    %44 = vector.load %arg5[%c1_24, %c0_25, %c0_26] : memref<3x128x128xf32, #tpu.memory_space<vmem>>, vector<1x128x128xf32>
    %45 = vector.shape_cast %44 : vector<1x128x128xf32> to vector<128x128xf32>
    %cst_27 = arith.constant dense<0.000000e+00> : vector<16x128xf32>
    %46 = tpu.matmul %43, %45, %cst_27 {dimension_numbers = #tpu.dot_dimension_numbers<[1], [0], [0], [1], [0, 0, 1, 1], [], []>} : vector<16x128xf32>, vector<128x128xf32>, vector<16x128xf32> -> vector<16x128xf32>
    %47 = arith.addf %42, %46 : vector<16x128xf32>
    %48 = vector.extract_strided_slice %38 {offsets = [4, 0], sizes = [16, 128], strides = [1, 1]} : vector<20x128xf32> to vector<16x128xf32>
    %c2_28 = arith.constant 2 : index
    %c0_29 = arith.constant 0 : index
    %c0_30 = arith.constant 0 : index
    %49 = vector.load %arg5[%c2_28, %c0_29, %c0_30] : memref<3x128x128xf32, #tpu.memory_space<vmem>>, vector<1x128x128xf32>
    %50 = vector.shape_cast %49 : vector<1x128x128xf32> to vector<128x128xf32>
    %cst_31 = arith.constant dense<0.000000e+00> : vector<16x128xf32>
    %51 = tpu.matmul %48, %50, %cst_31 {dimension_numbers = #tpu.dot_dimension_numbers<[1], [0], [0], [1], [0, 0, 1, 1], [], []>} : vector<16x128xf32>, vector<128x128xf32>, vector<16x128xf32> -> vector<16x128xf32>
    %52 = arith.addf %47, %51 : vector<16x128xf32>
    %c0_32 = arith.constant 0 : index
    %c0_33 = arith.constant 0 : index
    %53 = vector.load %arg6[%c0_32, %c0_33] : memref<1x128xf32, #tpu.memory_space<vmem>>, vector<1x128xf32>
    %54 = vector.broadcast %53 : vector<1x128xf32> to vector<16x128xf32>
    %55 = arith.addf %52, %54 : vector<16x128xf32>
    %cst_34 = arith.constant 0.00999999977 : f32
    %56 = vector.broadcast %cst_34 : f32 to vector<16x128xf32>
    %57 = arith.mulf %56, %55 : vector<16x128xf32>
    %58 = arith.maximumf %55, %57 : vector<16x128xf32>
    %59 = arith.addf %58, %1 : vector<16x128xf32>
    %60 = vector.shape_cast %59 : vector<16x128xf32> to vector<1x16x128xf32>
    %c0_35 = arith.constant 0 : index
    %c0_36 = arith.constant 0 : index
    %c0_37 = arith.constant 0 : index
    %61 = vector.load %arg7[%c0_35, %c0_36, %c0_37] : memref<1x16x128xf32, #tpu.memory_space<vmem>>, vector<1x16x128xf32>
    tpu.vector_store %arg7[%c0_35, %c0_36, %c0_37], %60 {strides = array<i32>} : memref<1x16x128xf32, #tpu.memory_space<vmem>>, vector<1x16x128xf32>,
    return
  }
  func.func @transform_0(%arg0: i32, %arg1: i32) -> (i32, i32, i32) {
    %c0_i32 = arith.constant 0 : i32
    %c0_i32_0 = arith.constant 0 : i32
    return %arg0, %arg1, %c0_i32 : i32, i32, i32
  }
  func.func @transform_1(%arg0: i32, %arg1: i32) -> (i32, i32, i32) {
    %c0_i32 = arith.constant 0 : i32
    %c0_i32_0 = arith.constant 0 : i32
    %c0_i32_1 = arith.constant 0 : i32
    %c0_i32_2 = arith.constant 0 : i32
    return %c0_i32, %c0_i32_0, %c0_i32_1 : i32, i32, i32
  }
  func.func @transform_2(%arg0: i32, %arg1: i32) -> (i32, i32) {
    %c0_i32 = arith.constant 0 : i32
    %c0_i32_0 = arith.constant 0 : i32
    %c0_i32_1 = arith.constant 0 : i32
    return %c0_i32, %c0_i32_0 : i32, i32
  }
  func.func @transform_3(%arg0: i32, %arg1: i32) -> (i32, i32, i32) {
    %c0_i32 = arith.constant 0 : i32
    %c0_i32_0 = arith.constant 0 : i32
    %c0_i32_1 = arith.constant 0 : i32
    %c0_i32_2 = arith.constant 0 : i32
    return %c0_i32, %c0_i32_0, %c0_i32_1 : i32, i32, i32
  }
  func.func @transform_4(%arg0: i32, %arg1: i32) -> (i32, i32) {
    %c0_i32 = arith.constant 0 : i32
    %c0_i32_0 = arith.constant 0 : i32
    %c0_i32_1 = arith.constant 0 : i32
    return %c0_i32, %c0_i32_0 : i32, i32
  }
  func.func @transform_5(%arg0: i32, %arg1: i32) -> (i32, i32, i32) {
    %c0_i32 = arith.constant 0 : i32
    %c0_i32_0 = arith.constant 0 : i32
    return %arg0, %arg1, %c0_i32 : i32, i32, i32
  }
}

module attributes {stable_mosaic.version = 11 : i64} {
  func.func @_block_kernel(%arg0: i32, %arg1: i32, %arg2: memref<1x16x128xf32, #tpu.memory_space<vmem>>, %arg3: memref<3x128x128xf32, #tpu.memory_space<vmem>>, %arg4: memref<1x128xf32, #tpu.memory_space<vmem>>, %arg5: memref<3x128x128xf32, #tpu.memory_space<vmem>>, %arg6: memref<1x128xf32, #tpu.memory_space<vmem>>, %arg7: memref<128x128xf32, #tpu.memory_space<vmem>>, %arg8: memref<1x128xf32, #tpu.memory_space<vmem>>, %arg9: memref<1x16x128xf32, #tpu.memory_space<vmem>>, %arg10: memref<16x128xf32, #tpu.memory_space<vmem>>) attributes {dimension_semantics = [#tpu.dimension_semantics<parallel>, #tpu.dimension_semantics<arbitrary>], iteration_bounds = array<i64: 2, 3>, scalar_prefetch = 0 : i64, scratch_operands = 1 : i64, tpu.core_type = #tpu.core_type<tc>, window_params = [{transform_indices = @transform_0, window_bounds = array<i64: 1, 16, 128>}, {pipeline_mode = #tpu.pipeline_mode<synchronous>, transform_indices = @transform_1, window_bounds = array<i64: 3, 128, 128>}, {pipeline_mode = #tpu.pipeline_mode<synchronous>, transform_indices = @transform_2, window_bounds = array<i64: 1, 128>}, {pipeline_mode = #tpu.pipeline_mode<synchronous>, transform_indices = @transform_3, window_bounds = array<i64: 3, 128, 128>}, {pipeline_mode = #tpu.pipeline_mode<synchronous>, transform_indices = @transform_4, window_bounds = array<i64: 1, 128>}, {pipeline_mode = #tpu.pipeline_mode<synchronous>, transform_indices = @transform_5, window_bounds = array<i64: 128, 128>}, {pipeline_mode = #tpu.pipeline_mode<synchronous>, transform_indices = @transform_6, window_bounds = array<i64: 1, 128>}, {transform_indices = @transform_7, window_bounds = array<i64: 1, 16, 128>}]} {
    %c0 = arith.constant 0 : index
    %c0_0 = arith.constant 0 : index
    %c0_1 = arith.constant 0 : index
    %0 = vector.load %arg2[%c0, %c0_0, %c0_1] : memref<1x16x128xf32, #tpu.memory_space<vmem>>, vector<1x16x128xf32>
    %1 = vector.shape_cast %0 : vector<1x16x128xf32> to vector<16x128xf32>
    %c0_i32 = arith.constant 0 : i32
    %2 = arith.cmpi eq, %arg1, %c0_i32 : i32
    %3 = arith.extui %2 : i1 to i32
    %c0_i32_2 = arith.constant 0 : i32
    %4 = arith.cmpi ne, %3, %c0_i32_2 : i32
    scf.if %4 {
      %cst_43 = arith.constant 0.000000e+00 : f32
      %67 = vector.broadcast %cst_43 : f32 to vector<16x128xf32>
      %c0_44 = arith.constant 0 : index
      %c0_45 = arith.constant 0 : index
      %68 = vector.load %arg10[%c0_44, %c0_45] : memref<16x128xf32, #tpu.memory_space<vmem>>, vector<16x128xf32>
      tpu.vector_store %arg10[%c0_44, %c0_45], %67 {strides = array<i32>} : memref<16x128xf32, #tpu.memory_space<vmem>>, vector<16x128xf32>,
    } else {
    }
    %c0_3 = arith.constant 0 : index
    %c0_4 = arith.constant 0 : index
    %5 = vector.load %arg10[%c0_3, %c0_4] : memref<16x128xf32, #tpu.memory_space<vmem>>, vector<16x128xf32>
    %6 = tpu.concatenate %5, %1 in 0 : vector<16x128xf32>, vector<16x128xf32> -> vector<32x128xf32>
    %7 = vector.extract_strided_slice %6 {offsets = [16, 0], sizes = [16, 128], strides = [1, 1]} : vector<32x128xf32> to vector<16x128xf32>
    %c0_5 = arith.constant 0 : index
    %c0_6 = arith.constant 0 : index
    %8 = vector.load %arg10[%c0_5, %c0_6] : memref<16x128xf32, #tpu.memory_space<vmem>>, vector<16x128xf32>
    tpu.vector_store %arg10[%c0_5, %c0_6], %7 {strides = array<i32>} : memref<16x128xf32, #tpu.memory_space<vmem>>, vector<16x128xf32>,
    %9 = vector.extract_strided_slice %6 {offsets = [12, 0], sizes = [18, 128], strides = [1, 1]} : vector<32x128xf32> to vector<18x128xf32>
    %c0_7 = arith.constant 0 : index
    %c0_8 = arith.constant 0 : index
    %c0_9 = arith.constant 0 : index
    %10 = vector.load %arg3[%c0_7, %c0_8, %c0_9] : memref<3x128x128xf32, #tpu.memory_space<vmem>>, vector<1x128x128xf32>
    %11 = vector.shape_cast %10 : vector<1x128x128xf32> to vector<128x128xf32>
    %cst = arith.constant dense<0.000000e+00> : vector<18x128xf32>
    %12 = tpu.matmul %9, %11, %cst {dimension_numbers = #tpu.dot_dimension_numbers<[1], [0], [0], [1], [0, 0, 1, 1], [], []>} : vector<18x128xf32>, vector<128x128xf32>, vector<18x128xf32> -> vector<18x128xf32>
    %13 = vector.extract_strided_slice %6 {offsets = [13, 0], sizes = [18, 128], strides = [1, 1]} : vector<32x128xf32> to vector<18x128xf32>
    %c1 = arith.constant 1 : index
    %c0_10 = arith.constant 0 : index
    %c0_11 = arith.constant 0 : index
    %14 = vector.load %arg3[%c1, %c0_10, %c0_11] : memref<3x128x128xf32, #tpu.memory_space<vmem>>, vector<1x128x128xf32>
    %15 = vector.shape_cast %14 : vector<1x128x128xf32> to vector<128x128xf32>
    %cst_12 = arith.constant dense<0.000000e+00> : vector<18x128xf32>
    %16 = tpu.matmul %13, %15, %cst_12 {dimension_numbers = #tpu.dot_dimension_numbers<[1], [0], [0], [1], [0, 0, 1, 1], [], []>} : vector<18x128xf32>, vector<128x128xf32>, vector<18x128xf32> -> vector<18x128xf32>
    %17 = arith.addf %12, %16 : vector<18x128xf32>
    %18 = vector.extract_strided_slice %6 {offsets = [14, 0], sizes = [18, 128], strides = [1, 1]} : vector<32x128xf32> to vector<18x128xf32>
    %c2 = arith.constant 2 : index
    %c0_13 = arith.constant 0 : index
    %c0_14 = arith.constant 0 : index
    %19 = vector.load %arg3[%c2, %c0_13, %c0_14] : memref<3x128x128xf32, #tpu.memory_space<vmem>>, vector<1x128x128xf32>
    %20 = vector.shape_cast %19 : vector<1x128x128xf32> to vector<128x128xf32>
    %cst_15 = arith.constant dense<0.000000e+00> : vector<18x128xf32>
    %21 = tpu.matmul %18, %20, %cst_15 {dimension_numbers = #tpu.dot_dimension_numbers<[1], [0], [0], [1], [0, 0, 1, 1], [], []>} : vector<18x128xf32>, vector<128x128xf32>, vector<18x128xf32> -> vector<18x128xf32>
    %22 = arith.addf %17, %21 : vector<18x128xf32>
    %c0_16 = arith.constant 0 : index
    %c0_17 = arith.constant 0 : index
    %23 = vector.load %arg4[%c0_16, %c0_17] : memref<1x128xf32, #tpu.memory_space<vmem>>, vector<1x128xf32>
    %24 = vector.broadcast %23 : vector<1x128xf32> to vector<18x128xf32>
    %25 = arith.addf %22, %24 : vector<18x128xf32>
    %cst_18 = arith.constant 0.00999999977 : f32
    %26 = vector.broadcast %cst_18 : f32 to vector<18x128xf32>
    %27 = arith.mulf %26, %25 : vector<18x128xf32>
    %28 = arith.maximumf %25, %27 : vector<18x128xf32>
    %29 = tpu.iota {dimensions = array<i32: 0>} : vector<18x1xi32>
    %c16_i32 = arith.constant 16 : i32
    %30 = arith.muli %arg1, %c16_i32 : i32
    %31 = vector.broadcast %30 : i32 to vector<18x1xi32>
    %32 = arith.addi %29, %31 : vector<18x1xi32>
    %c2_i32 = arith.constant 2 : i32
    %33 = vector.broadcast %c2_i32 : i32 to vector<18x1xi32>
    %34 = arith.cmpi sge, %32, %33 : vector<18x1xi32>
    %cst_19 = arith.constant 0.000000e+00 : f32
    %35 = vector.shape_cast %34 : vector<18x1xi1> to vector<18x1xi1>
    %36 = vector.broadcast %35 : vector<18x1xi1> to vector<18x128xi1>
    %37 = vector.broadcast %cst_19 : f32 to vector<18x128xf32>
    %38 = arith.select %36, %28, %37 : vector<18x128xi1>, vector<18x128xf32>
    %39 = vector.extract_strided_slice %38 {offsets = [0, 0], sizes = [16, 128], strides = [1, 1]} : vector<18x128xf32> to vector<16x128xf32>
    %c0_20 = arith.constant 0 : index
    %c0_21 = arith.constant 0 : index
    %c0_22 = arith.constant 0 : index
    %40 = vector.load %arg5[%c0_20, %c0_21, %c0_22] : memref<3x128x128xf32, #tpu.memory_space<vmem>>, vector<1x128x128xf32>
    %41 = vector.shape_cast %40 : vector<1x128x128xf32> to vector<128x128xf32>
    %cst_23 = arith.constant dense<0.000000e+00> : vector<16x128xf32>
    %42 = tpu.matmul %39, %41, %cst_23 {dimension_numbers = #tpu.dot_dimension_numbers<[1], [0], [0], [1], [0, 0, 1, 1], [], []>} : vector<16x128xf32>, vector<128x128xf32>, vector<16x128xf32> -> vector<16x128xf32>
    %43 = vector.extract_strided_slice %38 {offsets = [1, 0], sizes = [16, 128], strides = [1, 1]} : vector<18x128xf32> to vector<16x128xf32>
    %c1_24 = arith.constant 1 : index
    %c0_25 = arith.constant 0 : index
    %c0_26 = arith.constant 0 : index
    %44 = vector.load %arg5[%c1_24, %c0_25, %c0_26] : memref<3x128x128xf32, #tpu.memory_space<vmem>>, vector<1x128x128xf32>
    %45 = vector.shape_cast %44 : vector<1x128x128xf32> to vector<128x128xf32>
    %cst_27 = arith.constant dense<0.000000e+00> : vector<16x128xf32>
    %46 = tpu.matmul %43, %45, %cst_27 {dimension_numbers = #tpu.dot_dimension_numbers<[1], [0], [0], [1], [0, 0, 1, 1], [], []>} : vector<16x128xf32>, vector<128x128xf32>, vector<16x128xf32> -> vector<16x128xf32>
    %47 = arith.addf %42, %46 : vector<16x128xf32>
    %48 = vector.extract_strided_slice %38 {offsets = [2, 0], sizes = [16, 128], strides = [1, 1]} : vector<18x128xf32> to vector<16x128xf32>
    %c2_28 = arith.constant 2 : index
    %c0_29 = arith.constant 0 : index
    %c0_30 = arith.constant 0 : index
    %49 = vector.load %arg5[%c2_28, %c0_29, %c0_30] : memref<3x128x128xf32, #tpu.memory_space<vmem>>, vector<1x128x128xf32>
    %50 = vector.shape_cast %49 : vector<1x128x128xf32> to vector<128x128xf32>
    %cst_31 = arith.constant dense<0.000000e+00> : vector<16x128xf32>
    %51 = tpu.matmul %48, %50, %cst_31 {dimension_numbers = #tpu.dot_dimension_numbers<[1], [0], [0], [1], [0, 0, 1, 1], [], []>} : vector<16x128xf32>, vector<128x128xf32>, vector<16x128xf32> -> vector<16x128xf32>
    %52 = arith.addf %47, %51 : vector<16x128xf32>
    %c0_32 = arith.constant 0 : index
    %c0_33 = arith.constant 0 : index
    %53 = vector.load %arg6[%c0_32, %c0_33] : memref<1x128xf32, #tpu.memory_space<vmem>>, vector<1x128xf32>
    %54 = vector.broadcast %53 : vector<1x128xf32> to vector<16x128xf32>
    %55 = arith.addf %52, %54 : vector<16x128xf32>
    %cst_34 = arith.constant 0.00999999977 : f32
    %56 = vector.broadcast %cst_34 : f32 to vector<16x128xf32>
    %57 = arith.mulf %56, %55 : vector<16x128xf32>
    %58 = arith.maximumf %55, %57 : vector<16x128xf32>
    %c0_35 = arith.constant 0 : index
    %c0_36 = arith.constant 0 : index
    %59 = vector.load %arg7[%c0_35, %c0_36] : memref<128x128xf32, #tpu.memory_space<vmem>>, vector<128x128xf32>
    %cst_37 = arith.constant dense<0.000000e+00> : vector<16x128xf32>
    %60 = tpu.matmul %1, %59, %cst_37 {dimension_numbers = #tpu.dot_dimension_numbers<[1], [0], [0], [1], [0, 0, 1, 1], [], []>} : vector<16x128xf32>, vector<128x128xf32>, vector<16x128xf32> -> vector<16x128xf32>
    %c0_38 = arith.constant 0 : index
    %c0_39 = arith.constant 0 : index
    %61 = vector.load %arg8[%c0_38, %c0_39] : memref<1x128xf32, #tpu.memory_space<vmem>>, vector<1x128xf32>
    %62 = vector.broadcast %61 : vector<1x128xf32> to vector<16x128xf32>
    %63 = arith.addf %60, %62 : vector<16x128xf32>
    %64 = arith.addf %58, %63 : vector<16x128xf32>
    %65 = vector.shape_cast %64 : vector<16x128xf32> to vector<1x16x128xf32>
    %c0_40 = arith.constant 0 : index
    %c0_41 = arith.constant 0 : index
    %c0_42 = arith.constant 0 : index
    %66 = vector.load %arg9[%c0_40, %c0_41, %c0_42] : memref<1x16x128xf32, #tpu.memory_space<vmem>>, vector<1x16x128xf32>
    tpu.vector_store %arg9[%c0_40, %c0_41, %c0_42], %65 {strides = array<i32>} : memref<1x16x128xf32, #tpu.memory_space<vmem>>, vector<1x16x128xf32>,
    return
  }
  func.func @transform_0(%arg0: i32, %arg1: i32) -> (i32, i32, i32) {
    %c0_i32 = arith.constant 0 : i32
    %c0_i32_0 = arith.constant 0 : i32
    return %arg0, %arg1, %c0_i32 : i32, i32, i32
  }
  func.func @transform_1(%arg0: i32, %arg1: i32) -> (i32, i32, i32) {
    %c0_i32 = arith.constant 0 : i32
    %c0_i32_0 = arith.constant 0 : i32
    %c0_i32_1 = arith.constant 0 : i32
    %c0_i32_2 = arith.constant 0 : i32
    return %c0_i32, %c0_i32_0, %c0_i32_1 : i32, i32, i32
  }
  func.func @transform_2(%arg0: i32, %arg1: i32) -> (i32, i32) {
    %c0_i32 = arith.constant 0 : i32
    %c0_i32_0 = arith.constant 0 : i32
    %c0_i32_1 = arith.constant 0 : i32
    return %c0_i32, %c0_i32_0 : i32, i32
  }
  func.func @transform_3(%arg0: i32, %arg1: i32) -> (i32, i32, i32) {
    %c0_i32 = arith.constant 0 : i32
    %c0_i32_0 = arith.constant 0 : i32
    %c0_i32_1 = arith.constant 0 : i32
    %c0_i32_2 = arith.constant 0 : i32
    return %c0_i32, %c0_i32_0, %c0_i32_1 : i32, i32, i32
  }
  func.func @transform_4(%arg0: i32, %arg1: i32) -> (i32, i32) {
    %c0_i32 = arith.constant 0 : i32
    %c0_i32_0 = arith.constant 0 : i32
    %c0_i32_1 = arith.constant 0 : i32
    return %c0_i32, %c0_i32_0 : i32, i32
  }
  func.func @transform_5(%arg0: i32, %arg1: i32) -> (i32, i32) {
    %c0_i32 = arith.constant 0 : i32
    %c0_i32_0 = arith.constant 0 : i32
    %c0_i32_1 = arith.constant 0 : i32
    return %c0_i32, %c0_i32_0 : i32, i32
  }
  func.func @transform_6(%arg0: i32, %arg1: i32) -> (i32, i32) {
    %c0_i32 = arith.constant 0 : i32
    %c0_i32_0 = arith.constant 0 : i32
    %c0_i32_1 = arith.constant 0 : i32
    return %c0_i32, %c0_i32_0 : i32, i32
  }
  func.func @transform_7(%arg0: i32, %arg1: i32) -> (i32, i32, i32) {
    %c0_i32 = arith.constant 0 : i32
    %c0_i32_0 = arith.constant 0 : i32
    return %arg0, %arg1, %c0_i32 : i32, i32, i32
  }
}

module attributes {stable_mosaic.version = 11 : i64} {
  func.func @_block_kernel(%arg0: i32, %arg1: i32, %arg2: memref<1x16x128xf32, #tpu.memory_space<vmem>>, %arg3: memref<3x128x128xf32, #tpu.memory_space<vmem>>, %arg4: memref<1x128xf32, #tpu.memory_space<vmem>>, %arg5: memref<3x128x128xf32, #tpu.memory_space<vmem>>, %arg6: memref<1x128xf32, #tpu.memory_space<vmem>>, %arg7: memref<1x16x128xf32, #tpu.memory_space<vmem>>, %arg8: memref<16x128xf32, #tpu.memory_space<vmem>>) attributes {dimension_semantics = [#tpu.dimension_semantics<parallel>, #tpu.dimension_semantics<arbitrary>], iteration_bounds = array<i64: 2, 3>, scalar_prefetch = 0 : i64, scratch_operands = 1 : i64, tpu.core_type = #tpu.core_type<tc>, window_params = [{transform_indices = @transform_0, window_bounds = array<i64: 1, 16, 128>}, {pipeline_mode = #tpu.pipeline_mode<synchronous>, transform_indices = @transform_1, window_bounds = array<i64: 3, 128, 128>}, {pipeline_mode = #tpu.pipeline_mode<synchronous>, transform_indices = @transform_2, window_bounds = array<i64: 1, 128>}, {pipeline_mode = #tpu.pipeline_mode<synchronous>, transform_indices = @transform_3, window_bounds = array<i64: 3, 128, 128>}, {pipeline_mode = #tpu.pipeline_mode<synchronous>, transform_indices = @transform_4, window_bounds = array<i64: 1, 128>}, {transform_indices = @transform_5, window_bounds = array<i64: 1, 16, 128>}]} {
    %c0 = arith.constant 0 : index
    %c0_0 = arith.constant 0 : index
    %c0_1 = arith.constant 0 : index
    %0 = vector.load %arg2[%c0, %c0_0, %c0_1] : memref<1x16x128xf32, #tpu.memory_space<vmem>>, vector<1x16x128xf32>
    %1 = vector.shape_cast %0 : vector<1x16x128xf32> to vector<16x128xf32>
    %c0_i32 = arith.constant 0 : i32
    %2 = arith.cmpi eq, %arg1, %c0_i32 : i32
    %3 = arith.extui %2 : i1 to i32
    %c0_i32_2 = arith.constant 0 : i32
    %4 = arith.cmpi ne, %3, %c0_i32_2 : i32
    scf.if %4 {
      %cst_38 = arith.constant 0.000000e+00 : f32
      %62 = vector.broadcast %cst_38 : f32 to vector<16x128xf32>
      %c0_39 = arith.constant 0 : index
      %c0_40 = arith.constant 0 : index
      %63 = vector.load %arg8[%c0_39, %c0_40] : memref<16x128xf32, #tpu.memory_space<vmem>>, vector<16x128xf32>
      tpu.vector_store %arg8[%c0_39, %c0_40], %62 {strides = array<i32>} : memref<16x128xf32, #tpu.memory_space<vmem>>, vector<16x128xf32>,
    } else {
    }
    %c0_3 = arith.constant 0 : index
    %c0_4 = arith.constant 0 : index
    %5 = vector.load %arg8[%c0_3, %c0_4] : memref<16x128xf32, #tpu.memory_space<vmem>>, vector<16x128xf32>
    %6 = tpu.concatenate %5, %1 in 0 : vector<16x128xf32>, vector<16x128xf32> -> vector<32x128xf32>
    %7 = vector.extract_strided_slice %6 {offsets = [16, 0], sizes = [16, 128], strides = [1, 1]} : vector<32x128xf32> to vector<16x128xf32>
    %c0_5 = arith.constant 0 : index
    %c0_6 = arith.constant 0 : index
    %8 = vector.load %arg8[%c0_5, %c0_6] : memref<16x128xf32, #tpu.memory_space<vmem>>, vector<16x128xf32>
    tpu.vector_store %arg8[%c0_5, %c0_6], %7 {strides = array<i32>} : memref<16x128xf32, #tpu.memory_space<vmem>>, vector<16x128xf32>,
    %9 = vector.extract_strided_slice %6 {offsets = [0, 0], sizes = [24, 128], strides = [1, 1]} : vector<32x128xf32> to vector<24x128xf32>
    %c0_7 = arith.constant 0 : index
    %c0_8 = arith.constant 0 : index
    %c0_9 = arith.constant 0 : index
    %10 = vector.load %arg3[%c0_7, %c0_8, %c0_9] : memref<3x128x128xf32, #tpu.memory_space<vmem>>, vector<1x128x128xf32>
    %11 = vector.shape_cast %10 : vector<1x128x128xf32> to vector<128x128xf32>
    %cst = arith.constant dense<0.000000e+00> : vector<24x128xf32>
    %12 = tpu.matmul %9, %11, %cst {dimension_numbers = #tpu.dot_dimension_numbers<[1], [0], [0], [1], [0, 0, 1, 1], [], []>} : vector<24x128xf32>, vector<128x128xf32>, vector<24x128xf32> -> vector<24x128xf32>
    %13 = vector.extract_strided_slice %6 {offsets = [4, 0], sizes = [24, 128], strides = [1, 1]} : vector<32x128xf32> to vector<24x128xf32>
    %c1 = arith.constant 1 : index
    %c0_10 = arith.constant 0 : index
    %c0_11 = arith.constant 0 : index
    %14 = vector.load %arg3[%c1, %c0_10, %c0_11] : memref<3x128x128xf32, #tpu.memory_space<vmem>>, vector<1x128x128xf32>
    %15 = vector.shape_cast %14 : vector<1x128x128xf32> to vector<128x128xf32>
    %cst_12 = arith.constant dense<0.000000e+00> : vector<24x128xf32>
    %16 = tpu.matmul %13, %15, %cst_12 {dimension_numbers = #tpu.dot_dimension_numbers<[1], [0], [0], [1], [0, 0, 1, 1], [], []>} : vector<24x128xf32>, vector<128x128xf32>, vector<24x128xf32> -> vector<24x128xf32>
    %17 = arith.addf %12, %16 : vector<24x128xf32>
    %18 = vector.extract_strided_slice %6 {offsets = [8, 0], sizes = [24, 128], strides = [1, 1]} : vector<32x128xf32> to vector<24x128xf32>
    %c2 = arith.constant 2 : index
    %c0_13 = arith.constant 0 : index
    %c0_14 = arith.constant 0 : index
    %19 = vector.load %arg3[%c2, %c0_13, %c0_14] : memref<3x128x128xf32, #tpu.memory_space<vmem>>, vector<1x128x128xf32>
    %20 = vector.shape_cast %19 : vector<1x128x128xf32> to vector<128x128xf32>
    %cst_15 = arith.constant dense<0.000000e+00> : vector<24x128xf32>
    %21 = tpu.matmul %18, %20, %cst_15 {dimension_numbers = #tpu.dot_dimension_numbers<[1], [0], [0], [1], [0, 0, 1, 1], [], []>} : vector<24x128xf32>, vector<128x128xf32>, vector<24x128xf32> -> vector<24x128xf32>
    %22 = arith.addf %17, %21 : vector<24x128xf32>
    %c0_16 = arith.constant 0 : index
    %c0_17 = arith.constant 0 : index
    %23 = vector.load %arg4[%c0_16, %c0_17] : memref<1x128xf32, #tpu.memory_space<vmem>>, vector<1x128xf32>
    %24 = vector.broadcast %23 : vector<1x128xf32> to vector<24x128xf32>
    %25 = arith.addf %22, %24 : vector<24x128xf32>
    %cst_18 = arith.constant 0.00999999977 : f32
    %26 = vector.broadcast %cst_18 : f32 to vector<24x128xf32>
    %27 = arith.mulf %26, %25 : vector<24x128xf32>
    %28 = arith.maximumf %25, %27 : vector<24x128xf32>
    %29 = tpu.iota {dimensions = array<i32: 0>} : vector<24x1xi32>
    %c16_i32 = arith.constant 16 : i32
    %30 = arith.muli %arg1, %c16_i32 : i32
    %31 = vector.broadcast %30 : i32 to vector<24x1xi32>
    %32 = arith.addi %29, %31 : vector<24x1xi32>
    %c8_i32 = arith.constant 8 : i32
    %33 = vector.broadcast %c8_i32 : i32 to vector<24x1xi32>
    %34 = arith.cmpi sge, %32, %33 : vector<24x1xi32>
    %cst_19 = arith.constant 0.000000e+00 : f32
    %35 = vector.shape_cast %34 : vector<24x1xi1> to vector<24x1xi1>
    %36 = vector.broadcast %35 : vector<24x1xi1> to vector<24x128xi1>
    %37 = vector.broadcast %cst_19 : f32 to vector<24x128xf32>
    %38 = arith.select %36, %28, %37 : vector<24x128xi1>, vector<24x128xf32>
    %39 = vector.extract_strided_slice %38 {offsets = [0, 0], sizes = [16, 128], strides = [1, 1]} : vector<24x128xf32> to vector<16x128xf32>
    %c0_20 = arith.constant 0 : index
    %c0_21 = arith.constant 0 : index
    %c0_22 = arith.constant 0 : index
    %40 = vector.load %arg5[%c0_20, %c0_21, %c0_22] : memref<3x128x128xf32, #tpu.memory_space<vmem>>, vector<1x128x128xf32>
    %41 = vector.shape_cast %40 : vector<1x128x128xf32> to vector<128x128xf32>
    %cst_23 = arith.constant dense<0.000000e+00> : vector<16x128xf32>
    %42 = tpu.matmul %39, %41, %cst_23 {dimension_numbers = #tpu.dot_dimension_numbers<[1], [0], [0], [1], [0, 0, 1, 1], [], []>} : vector<16x128xf32>, vector<128x128xf32>, vector<16x128xf32> -> vector<16x128xf32>
    %43 = vector.extract_strided_slice %38 {offsets = [4, 0], sizes = [16, 128], strides = [1, 1]} : vector<24x128xf32> to vector<16x128xf32>
    %c1_24 = arith.constant 1 : index
    %c0_25 = arith.constant 0 : index
    %c0_26 = arith.constant 0 : index
    %44 = vector.load %arg5[%c1_24, %c0_25, %c0_26] : memref<3x128x128xf32, #tpu.memory_space<vmem>>, vector<1x128x128xf32>
    %45 = vector.shape_cast %44 : vector<1x128x128xf32> to vector<128x128xf32>
    %cst_27 = arith.constant dense<0.000000e+00> : vector<16x128xf32>
    %46 = tpu.matmul %43, %45, %cst_27 {dimension_numbers = #tpu.dot_dimension_numbers<[1], [0], [0], [1], [0, 0, 1, 1], [], []>} : vector<16x128xf32>, vector<128x128xf32>, vector<16x128xf32> -> vector<16x128xf32>
    %47 = arith.addf %42, %46 : vector<16x128xf32>
    %48 = vector.extract_strided_slice %38 {offsets = [8, 0], sizes = [16, 128], strides = [1, 1]} : vector<24x128xf32> to vector<16x128xf32>
    %c2_28 = arith.constant 2 : index
    %c0_29 = arith.constant 0 : index
    %c0_30 = arith.constant 0 : index
    %49 = vector.load %arg5[%c2_28, %c0_29, %c0_30] : memref<3x128x128xf32, #tpu.memory_space<vmem>>, vector<1x128x128xf32>
    %50 = vector.shape_cast %49 : vector<1x128x128xf32> to vector<128x128xf32>
    %cst_31 = arith.constant dense<0.000000e+00> : vector<16x128xf32>
    %51 = tpu.matmul %48, %50, %cst_31 {dimension_numbers = #tpu.dot_dimension_numbers<[1], [0], [0], [1], [0, 0, 1, 1], [], []>} : vector<16x128xf32>, vector<128x128xf32>, vector<16x128xf32> -> vector<16x128xf32>
    %52 = arith.addf %47, %51 : vector<16x128xf32>
    %c0_32 = arith.constant 0 : index
    %c0_33 = arith.constant 0 : index
    %53 = vector.load %arg6[%c0_32, %c0_33] : memref<1x128xf32, #tpu.memory_space<vmem>>, vector<1x128xf32>
    %54 = vector.broadcast %53 : vector<1x128xf32> to vector<16x128xf32>
    %55 = arith.addf %52, %54 : vector<16x128xf32>
    %cst_34 = arith.constant 0.00999999977 : f32
    %56 = vector.broadcast %cst_34 : f32 to vector<16x128xf32>
    %57 = arith.mulf %56, %55 : vector<16x128xf32>
    %58 = arith.maximumf %55, %57 : vector<16x128xf32>
    %59 = arith.addf %58, %1 : vector<16x128xf32>
    %60 = vector.shape_cast %59 : vector<16x128xf32> to vector<1x16x128xf32>
    %c0_35 = arith.constant 0 : index
    %c0_36 = arith.constant 0 : index
    %c0_37 = arith.constant 0 : index
    %61 = vector.load %arg7[%c0_35, %c0_36, %c0_37] : memref<1x16x128xf32, #tpu.memory_space<vmem>>, vector<1x16x128xf32>
    tpu.vector_store %arg7[%c0_35, %c0_36, %c0_37], %60 {strides = array<i32>} : memref<1x16x128xf32, #tpu.memory_space<vmem>>, vector<1x16x128xf32>,
    return
  }
  func.func @transform_0(%arg0: i32, %arg1: i32) -> (i32, i32, i32) {
    %c0_i32 = arith.constant 0 : i32
    %c0_i32_0 = arith.constant 0 : i32
    return %arg0, %arg1, %c0_i32 : i32, i32, i32
  }
  func.func @transform_1(%arg0: i32, %arg1: i32) -> (i32, i32, i32) {
    %c0_i32 = arith.constant 0 : i32
    %c0_i32_0 = arith.constant 0 : i32
    %c0_i32_1 = arith.constant 0 : i32
    %c0_i32_2 = arith.constant 0 : i32
    return %c0_i32, %c0_i32_0, %c0_i32_1 : i32, i32, i32
  }
  func.func @transform_2(%arg0: i32, %arg1: i32) -> (i32, i32) {
    %c0_i32 = arith.constant 0 : i32
    %c0_i32_0 = arith.constant 0 : i32
    %c0_i32_1 = arith.constant 0 : i32
    return %c0_i32, %c0_i32_0 : i32, i32
  }
  func.func @transform_3(%arg0: i32, %arg1: i32) -> (i32, i32, i32) {
    %c0_i32 = arith.constant 0 : i32
    %c0_i32_0 = arith.constant 0 : i32
    %c0_i32_1 = arith.constant 0 : i32
    %c0_i32_2 = arith.constant 0 : i32
    return %c0_i32, %c0_i32_0, %c0_i32_1 : i32, i32, i32
  }
  func.func @transform_4(%arg0: i32, %arg1: i32) -> (i32, i32) {
    %c0_i32 = arith.constant 0 : i32
    %c0_i32_0 = arith.constant 0 : i32
    %c0_i32_1 = arith.constant 0 : i32
    return %c0_i32, %c0_i32_0 : i32, i32
  }
  func.func @transform_5(%arg0: i32, %arg1: i32) -> (i32, i32, i32) {
    %c0_i32 = arith.constant 0 : i32
    %c0_i32_0 = arith.constant 0 : i32
    return %arg0, %arg1, %c0_i32 : i32, i32, i32
  }
}

module attributes {stable_mosaic.version = 11 : i64} {
  func.func @_block_kernel(%arg0: i32, %arg1: i32, %arg2: memref<1x16x128xf32, #tpu.memory_space<vmem>>, %arg3: memref<3x128x128xf32, #tpu.memory_space<vmem>>, %arg4: memref<1x128xf32, #tpu.memory_space<vmem>>, %arg5: memref<3x128x128xf32, #tpu.memory_space<vmem>>, %arg6: memref<1x128xf32, #tpu.memory_space<vmem>>, %arg7: memref<128x128xf32, #tpu.memory_space<vmem>>, %arg8: memref<1x128xf32, #tpu.memory_space<vmem>>, %arg9: memref<1x16x128xf32, #tpu.memory_space<vmem>>, %arg10: memref<32x128xf32, #tpu.memory_space<vmem>>) attributes {dimension_semantics = [#tpu.dimension_semantics<parallel>, #tpu.dimension_semantics<arbitrary>], iteration_bounds = array<i64: 2, 3>, scalar_prefetch = 0 : i64, scratch_operands = 1 : i64, tpu.core_type = #tpu.core_type<tc>, window_params = [{transform_indices = @transform_0, window_bounds = array<i64: 1, 16, 128>}, {pipeline_mode = #tpu.pipeline_mode<synchronous>, transform_indices = @transform_1, window_bounds = array<i64: 3, 128, 128>}, {pipeline_mode = #tpu.pipeline_mode<synchronous>, transform_indices = @transform_2, window_bounds = array<i64: 1, 128>}, {pipeline_mode = #tpu.pipeline_mode<synchronous>, transform_indices = @transform_3, window_bounds = array<i64: 3, 128, 128>}, {pipeline_mode = #tpu.pipeline_mode<synchronous>, transform_indices = @transform_4, window_bounds = array<i64: 1, 128>}, {pipeline_mode = #tpu.pipeline_mode<synchronous>, transform_indices = @transform_5, window_bounds = array<i64: 128, 128>}, {pipeline_mode = #tpu.pipeline_mode<synchronous>, transform_indices = @transform_6, window_bounds = array<i64: 1, 128>}, {transform_indices = @transform_7, window_bounds = array<i64: 1, 16, 128>}]} {
    %c0 = arith.constant 0 : index
    %c0_0 = arith.constant 0 : index
    %c0_1 = arith.constant 0 : index
    %0 = vector.load %arg2[%c0, %c0_0, %c0_1] : memref<1x16x128xf32, #tpu.memory_space<vmem>>, vector<1x16x128xf32>
    %1 = vector.shape_cast %0 : vector<1x16x128xf32> to vector<16x128xf32>
    %c0_i32 = arith.constant 0 : i32
    %2 = arith.cmpi eq, %arg1, %c0_i32 : i32
    %3 = arith.extui %2 : i1 to i32
    %c0_i32_2 = arith.constant 0 : i32
    %4 = arith.cmpi ne, %3, %c0_i32_2 : i32
    scf.if %4 {
      %cst_44 = arith.constant 0.000000e+00 : f32
      %67 = vector.broadcast %cst_44 : f32 to vector<32x128xf32>
      %c0_45 = arith.constant 0 : index
      %c0_46 = arith.constant 0 : index
      %68 = vector.load %arg10[%c0_45, %c0_46] : memref<32x128xf32, #tpu.memory_space<vmem>>, vector<32x128xf32>
      tpu.vector_store %arg10[%c0_45, %c0_46], %67 {strides = array<i32>} : memref<32x128xf32, #tpu.memory_space<vmem>>, vector<32x128xf32>,
    } else {
    }
    %c0_3 = arith.constant 0 : index
    %c0_4 = arith.constant 0 : index
    %5 = vector.load %arg10[%c0_3, %c0_4] : memref<32x128xf32, #tpu.memory_space<vmem>>, vector<32x128xf32>
    %6 = tpu.concatenate %5, %1 in 0 : vector<32x128xf32>, vector<16x128xf32> -> vector<48x128xf32>
    %7 = vector.extract_strided_slice %6 {offsets = [16, 0], sizes = [32, 128], strides = [1, 1]} : vector<48x128xf32> to vector<32x128xf32>
    %c0_5 = arith.constant 0 : index
    %c0_6 = arith.constant 0 : index
    %8 = vector.load %arg10[%c0_5, %c0_6] : memref<32x128xf32, #tpu.memory_space<vmem>>, vector<32x128xf32>
    tpu.vector_store %arg10[%c0_5, %c0_6], %7 {strides = array<i32>} : memref<32x128xf32, #tpu.memory_space<vmem>>, vector<32x128xf32>,
    %9 = vector.extract_strided_slice %6 {offsets = [0, 0], sizes = [32, 128], strides = [1, 1]} : vector<48x128xf32> to vector<32x128xf32>
    %c0_7 = arith.constant 0 : index
    %c0_8 = arith.constant 0 : index
    %c0_9 = arith.constant 0 : index
    %10 = vector.load %arg3[%c0_7, %c0_8, %c0_9] : memref<3x128x128xf32, #tpu.memory_space<vmem>>, vector<1x128x128xf32>
    %11 = vector.shape_cast %10 : vector<1x128x128xf32> to vector<128x128xf32>
    %cst = arith.constant dense<0.000000e+00> : vector<32x128xf32>
    %12 = tpu.matmul %9, %11, %cst {dimension_numbers = #tpu.dot_dimension_numbers<[1], [0], [0], [1], [0, 0, 1, 1], [], []>} : vector<32x128xf32>, vector<128x128xf32>, vector<32x128xf32> -> vector<32x128xf32>
    %13 = vector.extract_strided_slice %6 {offsets = [8, 0], sizes = [32, 128], strides = [1, 1]} : vector<48x128xf32> to vector<32x128xf32>
    %c1 = arith.constant 1 : index
    %c0_10 = arith.constant 0 : index
    %c0_11 = arith.constant 0 : index
    %14 = vector.load %arg3[%c1, %c0_10, %c0_11] : memref<3x128x128xf32, #tpu.memory_space<vmem>>, vector<1x128x128xf32>
    %15 = vector.shape_cast %14 : vector<1x128x128xf32> to vector<128x128xf32>
    %cst_12 = arith.constant dense<0.000000e+00> : vector<32x128xf32>
    %16 = tpu.matmul %13, %15, %cst_12 {dimension_numbers = #tpu.dot_dimension_numbers<[1], [0], [0], [1], [0, 0, 1, 1], [], []>} : vector<32x128xf32>, vector<128x128xf32>, vector<32x128xf32> -> vector<32x128xf32>
    %17 = arith.addf %12, %16 : vector<32x128xf32>
    %18 = vector.extract_strided_slice %6 {offsets = [16, 0], sizes = [32, 128], strides = [1, 1]} : vector<48x128xf32> to vector<32x128xf32>
    %c2 = arith.constant 2 : index
    %c0_13 = arith.constant 0 : index
    %c0_14 = arith.constant 0 : index
    %19 = vector.load %arg3[%c2, %c0_13, %c0_14] : memref<3x128x128xf32, #tpu.memory_space<vmem>>, vector<1x128x128xf32>
    %20 = vector.shape_cast %19 : vector<1x128x128xf32> to vector<128x128xf32>
    %cst_15 = arith.constant dense<0.000000e+00> : vector<32x128xf32>
    %21 = tpu.matmul %18, %20, %cst_15 {dimension_numbers = #tpu.dot_dimension_numbers<[1], [0], [0], [1], [0, 0, 1, 1], [], []>} : vector<32x128xf32>, vector<128x128xf32>, vector<32x128xf32> -> vector<32x128xf32>
    %22 = arith.addf %17, %21 : vector<32x128xf32>
    %c0_16 = arith.constant 0 : index
    %c0_17 = arith.constant 0 : index
    %23 = vector.load %arg4[%c0_16, %c0_17] : memref<1x128xf32, #tpu.memory_space<vmem>>, vector<1x128xf32>
    %24 = vector.broadcast %23 : vector<1x128xf32> to vector<32x128xf32>
    %25 = arith.addf %22, %24 : vector<32x128xf32>
    %cst_18 = arith.constant 0.00999999977 : f32
    %26 = vector.broadcast %cst_18 : f32 to vector<32x128xf32>
    %27 = arith.mulf %26, %25 : vector<32x128xf32>
    %28 = arith.maximumf %25, %27 : vector<32x128xf32>
    %29 = tpu.iota {dimensions = array<i32: 0>} : vector<32x1xi32>
    %c16_i32 = arith.constant 16 : i32
    %30 = arith.muli %arg1, %c16_i32 : i32
    %31 = vector.broadcast %30 : i32 to vector<32x1xi32>
    %32 = arith.addi %29, %31 : vector<32x1xi32>
    %c16_i32_19 = arith.constant 16 : i32
    %33 = vector.broadcast %c16_i32_19 : i32 to vector<32x1xi32>
    %34 = arith.cmpi sge, %32, %33 : vector<32x1xi32>
    %cst_20 = arith.constant 0.000000e+00 : f32
    %35 = vector.shape_cast %34 : vector<32x1xi1> to vector<32x1xi1>
    %36 = vector.broadcast %35 : vector<32x1xi1> to vector<32x128xi1>
    %37 = vector.broadcast %cst_20 : f32 to vector<32x128xf32>
    %38 = arith.select %36, %28, %37 : vector<32x128xi1>, vector<32x128xf32>
    %39 = vector.extract_strided_slice %38 {offsets = [0, 0], sizes = [16, 128], strides = [1, 1]} : vector<32x128xf32> to vector<16x128xf32>
    %c0_21 = arith.constant 0 : index
    %c0_22 = arith.constant 0 : index
    %c0_23 = arith.constant 0 : index
    %40 = vector.load %arg5[%c0_21, %c0_22, %c0_23] : memref<3x128x128xf32, #tpu.memory_space<vmem>>, vector<1x128x128xf32>
    %41 = vector.shape_cast %40 : vector<1x128x128xf32> to vector<128x128xf32>
    %cst_24 = arith.constant dense<0.000000e+00> : vector<16x128xf32>
    %42 = tpu.matmul %39, %41, %cst_24 {dimension_numbers = #tpu.dot_dimension_numbers<[1], [0], [0], [1], [0, 0, 1, 1], [], []>} : vector<16x128xf32>, vector<128x128xf32>, vector<16x128xf32> -> vector<16x128xf32>
    %43 = vector.extract_strided_slice %38 {offsets = [8, 0], sizes = [16, 128], strides = [1, 1]} : vector<32x128xf32> to vector<16x128xf32>
    %c1_25 = arith.constant 1 : index
    %c0_26 = arith.constant 0 : index
    %c0_27 = arith.constant 0 : index
    %44 = vector.load %arg5[%c1_25, %c0_26, %c0_27] : memref<3x128x128xf32, #tpu.memory_space<vmem>>, vector<1x128x128xf32>
    %45 = vector.shape_cast %44 : vector<1x128x128xf32> to vector<128x128xf32>
    %cst_28 = arith.constant dense<0.000000e+00> : vector<16x128xf32>
    %46 = tpu.matmul %43, %45, %cst_28 {dimension_numbers = #tpu.dot_dimension_numbers<[1], [0], [0], [1], [0, 0, 1, 1], [], []>} : vector<16x128xf32>, vector<128x128xf32>, vector<16x128xf32> -> vector<16x128xf32>
    %47 = arith.addf %42, %46 : vector<16x128xf32>
    %48 = vector.extract_strided_slice %38 {offsets = [16, 0], sizes = [16, 128], strides = [1, 1]} : vector<32x128xf32> to vector<16x128xf32>
    %c2_29 = arith.constant 2 : index
    %c0_30 = arith.constant 0 : index
    %c0_31 = arith.constant 0 : index
    %49 = vector.load %arg5[%c2_29, %c0_30, %c0_31] : memref<3x128x128xf32, #tpu.memory_space<vmem>>, vector<1x128x128xf32>
    %50 = vector.shape_cast %49 : vector<1x128x128xf32> to vector<128x128xf32>
    %cst_32 = arith.constant dense<0.000000e+00> : vector<16x128xf32>
    %51 = tpu.matmul %48, %50, %cst_32 {dimension_numbers = #tpu.dot_dimension_numbers<[1], [0], [0], [1], [0, 0, 1, 1], [], []>} : vector<16x128xf32>, vector<128x128xf32>, vector<16x128xf32> -> vector<16x128xf32>
    %52 = arith.addf %47, %51 : vector<16x128xf32>
    %c0_33 = arith.constant 0 : index
    %c0_34 = arith.constant 0 : index
    %53 = vector.load %arg6[%c0_33, %c0_34] : memref<1x128xf32, #tpu.memory_space<vmem>>, vector<1x128xf32>
    %54 = vector.broadcast %53 : vector<1x128xf32> to vector<16x128xf32>
    %55 = arith.addf %52, %54 : vector<16x128xf32>
    %cst_35 = arith.constant 0.00999999977 : f32
    %56 = vector.broadcast %cst_35 : f32 to vector<16x128xf32>
    %57 = arith.mulf %56, %55 : vector<16x128xf32>
    %58 = arith.maximumf %55, %57 : vector<16x128xf32>
    %c0_36 = arith.constant 0 : index
    %c0_37 = arith.constant 0 : index
    %59 = vector.load %arg7[%c0_36, %c0_37] : memref<128x128xf32, #tpu.memory_space<vmem>>, vector<128x128xf32>
    %cst_38 = arith.constant dense<0.000000e+00> : vector<16x128xf32>
    %60 = tpu.matmul %1, %59, %cst_38 {dimension_numbers = #tpu.dot_dimension_numbers<[1], [0], [0], [1], [0, 0, 1, 1], [], []>} : vector<16x128xf32>, vector<128x128xf32>, vector<16x128xf32> -> vector<16x128xf32>
    %c0_39 = arith.constant 0 : index
    %c0_40 = arith.constant 0 : index
    %61 = vector.load %arg8[%c0_39, %c0_40] : memref<1x128xf32, #tpu.memory_space<vmem>>, vector<1x128xf32>
    %62 = vector.broadcast %61 : vector<1x128xf32> to vector<16x128xf32>
    %63 = arith.addf %60, %62 : vector<16x128xf32>
    %64 = arith.addf %58, %63 : vector<16x128xf32>
    %65 = vector.shape_cast %64 : vector<16x128xf32> to vector<1x16x128xf32>
    %c0_41 = arith.constant 0 : index
    %c0_42 = arith.constant 0 : index
    %c0_43 = arith.constant 0 : index
    %66 = vector.load %arg9[%c0_41, %c0_42, %c0_43] : memref<1x16x128xf32, #tpu.memory_space<vmem>>, vector<1x16x128xf32>
    tpu.vector_store %arg9[%c0_41, %c0_42, %c0_43], %65 {strides = array<i32>} : memref<1x16x128xf32, #tpu.memory_space<vmem>>, vector<1x16x128xf32>,
    return
  }
  func.func @transform_0(%arg0: i32, %arg1: i32) -> (i32, i32, i32) {
    %c0_i32 = arith.constant 0 : i32
    %c0_i32_0 = arith.constant 0 : i32
    return %arg0, %arg1, %c0_i32 : i32, i32, i32
  }
  func.func @transform_1(%arg0: i32, %arg1: i32) -> (i32, i32, i32) {
    %c0_i32 = arith.constant 0 : i32
    %c0_i32_0 = arith.constant 0 : i32
    %c0_i32_1 = arith.constant 0 : i32
    %c0_i32_2 = arith.constant 0 : i32
    return %c0_i32, %c0_i32_0, %c0_i32_1 : i32, i32, i32
  }
  func.func @transform_2(%arg0: i32, %arg1: i32) -> (i32, i32) {
    %c0_i32 = arith.constant 0 : i32
    %c0_i32_0 = arith.constant 0 : i32
    %c0_i32_1 = arith.constant 0 : i32
    return %c0_i32, %c0_i32_0 : i32, i32
  }
  func.func @transform_3(%arg0: i32, %arg1: i32) -> (i32, i32, i32) {
    %c0_i32 = arith.constant 0 : i32
    %c0_i32_0 = arith.constant 0 : i32
    %c0_i32_1 = arith.constant 0 : i32
    %c0_i32_2 = arith.constant 0 : i32
    return %c0_i32, %c0_i32_0, %c0_i32_1 : i32, i32, i32
  }
  func.func @transform_4(%arg0: i32, %arg1: i32) -> (i32, i32) {
    %c0_i32 = arith.constant 0 : i32
    %c0_i32_0 = arith.constant 0 : i32
    %c0_i32_1 = arith.constant 0 : i32
    return %c0_i32, %c0_i32_0 : i32, i32
  }
  func.func @transform_5(%arg0: i32, %arg1: i32) -> (i32, i32) {
    %c0_i32 = arith.constant 0 : i32
    %c0_i32_0 = arith.constant 0 : i32
    %c0_i32_1 = arith.constant 0 : i32
    return %c0_i32, %c0_i32_0 : i32, i32
  }
  func.func @transform_6(%arg0: i32, %arg1: i32) -> (i32, i32) {
    %c0_i32 = arith.constant 0 : i32
    %c0_i32_0 = arith.constant 0 : i32
    %c0_i32_1 = arith.constant 0 : i32
    return %c0_i32, %c0_i32_0 : i32, i32
  }
  func.func @transform_7(%arg0: i32, %arg1: i32) -> (i32, i32, i32) {
    %c0_i32 = arith.constant 0 : i32
    %c0_i32_0 = arith.constant 0 : i32
    return %arg0, %arg1, %c0_i32 : i32, i32, i32
  }
}

</mosaic_0001>

<llo_original>
// kernel: causal_cnn.5
$region0: #{causal_cnn.5}
  #allocation0 [shape = 'u32[]', space=smem, size = 0x4, offset = 0x4, fixed_abs, tag = 'smem constant byte address 0x4 - core index']
  #allocation1 [shape = 'u32[144,128]{1,0:T(1,128)}', space=vmem, size = 0x12000, scoped, tag = 'internal scratch']
  #allocation2 [shape = 'f32[16,128]{1,0:T(8,128)}', space=vmem, size = 0x2000, scoped, tag = 'scratch operand']
  %s0 = inlined_call_operand.vmem [shape: f32[2,48,128], index: 0, kind: input, shape index: {}]
  %s1 = inlined_call_operand.vmem [shape: f32[3,128,128], index: 1, kind: input, shape index: {}]
  %s2 = inlined_call_operand.vmem [shape: f32[1,128], index: 2, kind: input, shape index: {}]
  %s3 = inlined_call_operand.vmem [shape: f32[3,128,128], index: 3, kind: input, shape index: {}]
  %s4 = inlined_call_operand.vmem [shape: f32[1,128], index: 4, kind: input, shape index: {}]
  %s5 = inlined_call_operand.vmem [shape: f32[2,48,128], index: 5, kind: output, shape index: {}]
  %s6 = sld [smem:[#allocation0]]
  $region57: #{causal_cnn.5} parent=0
    _
  %s8 = ssub.s32 1, %s6
  %s9 = scalar_select 0, %s8, %s6
  loop: start=0, step=1, limit=8
  $region2: #{causal_cnn.5} parent=0 // loop_pre_header
    _
  $region3: #{causal_cnn.5} parent=0 // loop_header
    %s11 = sphi 0, %s15
    %p12 = scmp.ge.s32.totalorder %s11, 8
    %s18 = sphi 0, %s30
    %s19 = sphi 0, %s26
    %s20 = sphi 0, %s18
    %s21 = sphi 0, %s19
    %s22 = sphi 0, %s20
    %s23 = sphi 0, %s21
    %s35 = sphi 0, %s37
    %s38 = sphi 0, %s35
    %s39 = sphi 0, %s38
    %s55 = sphi 0, %s39
    %s59 = sphi 0, %s59
    %s61 = sphi 0, %s59
    %s62 = sphi 0, %s61
    %s76 = sphi 0, %s62
    %s80 = sphi 0, %s80
    %s82 = sphi 0, %s80
    %s83 = sphi 0, %s82
    %s97 = sphi 0, %s83
    %s101 = sphi 0, %s101
    %s103 = sphi 0, %s101
    %s104 = sphi 0, %s103
    %s118 = sphi 0, %s104
    %s122 = sphi 0, %s122
    %s124 = sphi 0, %s122
    %s125 = sphi 0, %s124
    %s139 = sphi 0, %s125
    %s147 = sphi 0, %s149
    %s150 = sphi 0, %s147
    %s151 = sphi 0, %s150
    %s167 = sphi 0, %s151
  $region4: #{causal_cnn.5} parent=0 // loop_header_branch
    %14 = sbr.rel (%p12) target = $region8
  $region5: #{causal_cnn.5} parent=0 // loop_body
    %s16 = ssub.s32 %s11, 1
    %s17 = ssub.s32 %s11, 2
    %s24 = sadd.s32 1, %s19
    %p25 = scmp.ge.s32.totalorder %s24, 3
    %s26 = scalar_select %p25, 0, %s24
    %s27 = sadd.s32 1, %s18
    %s28 = scalar_select %p25, %s27, %s18
    %p29 = scmp.ge.s32.totalorder %s28, 2
    %s30 = scalar_select %p29, 0, %s28
    %s31 = ssub.s32 %s18, %s30
    %s32 = ssub.s32 %s19, %s26
    %s33 = sor.u32 %s31, %s32
    %p34 = scmp.eq.s32.totalorder %s33, 0
    %s36 = sadd.s32 %s35, 1
    %s37 = scalar_select %p34, %s35, %s36
    %p40 = pneg %p34
    %p41 = scmp.eq.s32.totalorder %s11, 5
    %p42 = por %p40, %p41
    %p43 = scmp.ne.s32.totalorder %s35, %s38
    %p44 = scmp.eq.s32.totalorder %s11, 0
    %p45 = por %p43, %p44
    %p46 = scmp.ne.s32.totalorder %s35, %s38
    %p47 = scmp.eq.s32.totalorder %s16, 5
    %p48 = por %p46, %p47
    %p49 = scmp.ne.s32.totalorder %s38, %s39
    %p50 = scmp.eq.s32.totalorder %s16, 0
    %p51 = por %p49, %p50
    %p52 = scmp.ne.s32.totalorder %s38, %s39
    %p53 = scmp.eq.s32.totalorder %s17, 5
    %p54 = por %p52, %p53
    %p56 = scmp.ne.s32.totalorder %s39, %s55
    %p57 = scmp.eq.s32.totalorder %s17, 0
    %p58 = por %p56, %p57
    %s60 = sadd.s32 %s59, 1
    %p63 = scmp.eq.s32.totalorder %s11, 5
    %p64 = scmp.ne.s32.totalorder %s59, %s61
    %p65 = scmp.eq.s32.totalorder %s11, 0
    %p66 = por %p64, %p65
    %p67 = scmp.ne.s32.totalorder %s59, %s61
    %p68 = scmp.eq.s32.totalorder %s16, 5
    %p69 = por %p67, %p68
    %p70 = scmp.ne.s32.totalorder %s61, %s62
    %p71 = scmp.eq.s32.totalorder %s16, 0
    %p72 = por %p70, %p71
    %p73 = scmp.ne.s32.totalorder %s61, %s62
    %p74 = scmp.eq.s32.totalorder %s17, 5
    %p75 = por %p73, %p74
    %p77 = scmp.ne.s32.totalorder %s62, %s76
    %p78 = scmp.eq.s32.totalorder %s17, 0
    %p79 = por %p77, %p78
    %s81 = sadd.s32 %s80, 1
    %p84 = scmp.eq.s32.totalorder %s11, 5
    %p85 = scmp.ne.s32.totalorder %s80, %s82
    %p86 = scmp.eq.s32.totalorder %s11, 0
    %p87 = por %p85, %p86
    %p88 = scmp.ne.s32.totalorder %s80, %s82
    %p89 = scmp.eq.s32.totalorder %s16, 5
    %p90 = por %p88, %p89
    %p91 = scmp.ne.s32.totalorder %s82, %s83
    %p92 = scmp.eq.s32.totalorder %s16, 0
    %p93 = por %p91, %p92
    %p94 = scmp.ne.s32.totalorder %s82, %s83
    %p95 = scmp.eq.s32.totalorder %s17, 5
    %p96 = por %p94, %p95
    %p98 = scmp.ne.s32.totalorder %s83, %s97
    %p99 = scmp.eq.s32.totalorder %s17, 0
    %p100 = por %p98, %p99
    %s102 = sadd.s32 %s101, 1
    %p105 = scmp.eq.s32.totalorder %s11, 5
    %p106 = scmp.ne.s32.totalorder %s101, %s103
    %p107 = scmp.eq.s32.totalorder %s11, 0
    %p108 = por %p106, %p107
    %p109 = scmp.ne.s32.totalorder %s101, %s103
    %p110 = scmp.eq.s32.totalorder %s16, 5
    %p111 = por %p109, %p110
    %p112 = scmp.ne.s32.totalorder %s103, %s104
    %p113 = scmp.eq.s32.totalorder %s16, 0
    %p114 = por %p112, %p113
    %p115 = scmp.ne.s32.totalorder %s103, %s104
    %p116 = scmp.eq.s32.totalorder %s17, 5
    %p117 = por %p115, %p116
    %p119 = scmp.ne.s32.totalorder %s104, %s118
    %p120 = scmp.eq.s32.totalorder %s17, 0
    %p121 = por %p119, %p120
    %s123 = sadd.s32 %s122, 1
    %p126 = scmp.eq.s32.totalorder %s11, 5
    %p127 = scmp.ne.s32.totalorder %s122, %s124
    %p128 = scmp.eq.s32.totalorder %s11, 0
    %p129 = por %p127, %p128
    %p130 = scmp.ne.s32.totalorder %s122, %s124
    %p131 = scmp.eq.s32.totalorder %s16, 5
    %p132 = por %p130, %p131
    %p133 = scmp.ne.s32.totalorder %s124, %s125
    %p134 = scmp.eq.s32.totalorder %s16, 0
    %p135 = por %p133, %p134
    %p136 = scmp.ne.s32.totalorder %s124, %s125
    %p137 = scmp.eq.s32.totalorder %s17, 5
    %p138 = por %p136, %p137
    %p140 = scmp.ne.s32.totalorder %s125, %s139
    %p141 = scmp.eq.s32.totalorder %s17, 0
    %p142 = por %p140, %p141
    %s143 = ssub.s32 %s18, %s30
    %s144 = ssub.s32 %s19, %s26
    %s145 = sor.u32 %s143, %s144
    %p146 = scmp.eq.s32.totalorder %s145, 0
    %s148 = sadd.s32 %s147, 1
    %s149 = scalar_select %p146, %s147, %s148
    %p152 = pneg %p146
    %p153 = scmp.eq.s32.totalorder %s11, 5
    %p154 = por %p152, %p153
    %p155 = scmp.ne.s32.totalorder %s147, %s150
    %p156 = scmp.eq.s32.totalorder %s11, 0
    %p157 = por %p155, %p156
    %p158 = scmp.ne.s32.totalorder %s147, %s150
    %p159 = scmp.eq.s32.totalorder %s16, 5
    %p160 = por %p158, %p159
    %p161 = scmp.ne.s32.totalorder %s150, %s151
    %p162 = scmp.eq.s32.totalorder %s16, 0
    %p163 = por %p161, %p162
    %p164 = scmp.ne.s32.totalorder %s150, %s151
    %p165 = scmp.eq.s32.totalorder %s17, 5
    %p166 = por %p164, %p165
    %p168 = scmp.ne.s32.totalorder %s151, %s167
    %p169 = scmp.eq.s32.totalorder %s17, 0
    %p170 = por %p168, %p169
    %p171 = scmp.le.s32.totalorder 1, %s11
    %p172 = scmp.lt.s32.totalorder %s11, 7
    %p173 = pnand %p171, %p172
    %p174 = pneg %p173
    // Predicated region
    $region9: #{causal_cnn.5} parent=5 // pred_check
      _
    $region10: #{causal_cnn.5} parent=5 // pred_check_branch
      %176 = sbr.rel (%p173) target = $region12
    $region11: #{causal_cnn.5} parent=5 // pred_region
      %s177 = ssub.s32 %s11, 1
      // Predicated region
      $region13: #{causal_cnn.5} parent=11 // pred_check
        %p178 = pneg %p72
      $region14: #{causal_cnn.5} parent=11 // pred_check_branch
        %180 = sbr.rel (%p178) target = $region16
      $region15: #{causal_cnn.5} parent=11 // pred_region
        _
      $region16: #{causal_cnn.5} parent=11 // pred_fallthru
        _
      // Predicated region
      $region17: #{causal_cnn.5} parent=11 // pred_check
        %p181 = pneg %p93
      $region18: #{causal_cnn.5} parent=11 // pred_check_branch
        %183 = sbr.rel (%p181) target = $region20
      $region19: #{causal_cnn.5} parent=11 // pred_region
        _
      $region20: #{causal_cnn.5} parent=11 // pred_fallthru
        _
      // Predicated region
      $region21: #{causal_cnn.5} parent=11 // pred_check
        %p184 = pneg %p114
      $region22: #{causal_cnn.5} parent=11 // pred_check_branch
        %186 = sbr.rel (%p184) target = $region24
      $region23: #{causal_cnn.5} parent=11 // pred_region
        _
      $region24: #{causal_cnn.5} parent=11 // pred_fallthru
        _
      // Predicated region
      $region25: #{causal_cnn.5} parent=11 // pred_check
        %p187 = pneg %p135
      $region26: #{causal_cnn.5} parent=11 // pred_check_branch
        %189 = sbr.rel (%p187) target = $region28
      $region27: #{causal_cnn.5} parent=11 // pred_region
        _
      $region28: #{causal_cnn.5} parent=11 // pred_fallthru
        _
    $region12: #{causal_cnn.5} parent=5 // pred_fallthru
      _
    %p190 = scmp.lt.s32.totalorder %s11, 6
    // Predicated region
    $region29: #{causal_cnn.5} parent=5 // pred_check
      %p191 = pneg %p190
    $region30: #{causal_cnn.5} parent=5 // pred_check_branch
      %193 = sbr.rel (%p191) target = $region32
    $region31: #{causal_cnn.5} parent=5 // pred_region
      // Predicated region
      $region33: #{causal_cnn.5} parent=31 // pred_check
        %p194 = pneg %p45
      $region34: #{causal_cnn.5} parent=31 // pred_check_branch
        %196 = sbr.rel (%p194) target = $region36
      $region35: #{causal_cnn.5} parent=31 // pred_region
        %s197 = smul.u32 2, %s19
        %p198 = scmp.lt.s32.totalorder %s18, 1
        %s199 = scalar_select %p198, %s18, 1
        %p200 = scmp.lt.s32.totalorder %s197, 5
        %s201 = scalar_select %p200, %s197, 5
        %s202 = smul.addr %s199, 6
        %s203 = sadd.s32 %s201, %s202
        %s204 = smul.addr %s203, 8
        %s205 = scalar_lea.vmem %s0, %s204
        %s206 = smul.u32 2, %s19
      $region36: #{causal_cnn.5} parent=31 // pred_fallthru
        _
    $region32: #{causal_cnn.5} parent=5 // pred_fallthru
      _
    %p207 = scmp.le.s32.totalorder 1, %s11
    %p208 = scmp.lt.s32.totalorder %s11, 7
    %p209 = pnand %p207, %p208
    %p210 = pneg %p209
    // Predicated region
    $region37: #{causal_cnn.5} parent=5 // pred_check
      _
    $region38: #{causal_cnn.5} parent=5 // pred_check_branch
      %212 = sbr.rel (%p209) target = $region40
    $region39: #{causal_cnn.5} parent=5 // pred_region
      %s213 = ssub.s32 %s11, 1
      %s214 = smul.u32 2, %s21
      %p215 = scmp.lt.s32.totalorder %s20, 1
      %s216 = scalar_select %p215, %s20, 1
      %p217 = scmp.lt.s32.totalorder %s214, 5
      %s218 = scalar_select %p217, %s214, 5
      %s219 = smul.addr %s216, 6
      %s220 = sadd.s32 %s218, %s219
      %s221 = smul.addr %s220, 8
      %s222 = scalar_lea.vmem %s0, %s221
      %p223 = pneg %p51
      %p224 = pneg %p48
      %p225 = pneg %p72
      %p226 = pneg %p69
      %p227 = pneg %p93
      %p228 = pneg %p90
      %p229 = pneg %p114
      %p230 = pneg %p111
      %p231 = pneg %p135
      %p232 = pneg %p132
      %p233 = pneg %p163
      %p234 = pneg %p160
      %s235 = smul.u32 2, %s21
      %p236 = scmp.lt.s32.totalorder %s20, 1
      %s237 = scalar_select %p236, %s20, 1
      %p238 = scmp.lt.s32.totalorder %s235, 5
      %s239 = scalar_select %p238, %s235, 5
      %s240 = smul.addr %s237, 6
      %s241 = sadd.s32 %s239, %s240
      %s242 = smul.addr %s241, 8
      %s243 = scalar_lea.vmem %s5, %s242
      %s244 = smul.u32 2, %s21
      %p245 = scmp.lt.s32.totalorder %s20, 1
      %s246 = scalar_select %p245, %s20, 1
      %p247 = scmp.lt.s32.totalorder %s244, 5
      %s248 = scalar_select %p247, %s244, 5
      %s249 = smul.addr %s246, 6
      %s250 = sadd.s32 %s248, %s249
      %s251 = smul.addr %s250, 8
      %s252 = scalar_lea.vmem %s0, %s251
      %s253 = smul.u32 2, %s21
      %s254 = smul.u32 2, %s21
      %p255 = scmp.lt.s32.totalorder %s20, 1
      %s256 = scalar_select %p255, %s20, 1
      %p257 = scmp.lt.s32.totalorder %s254, 5
      %s258 = scalar_select %p257, %s254, 5
      %s259 = smul.addr %s256, 6
      %s260 = sadd.s32 %s258, %s259
      %s261 = smul.addr %s260, 8
      %s262 = scalar_lea.vmem %s5, %s261
      %s263 = smul.u32 2, %s21
      %v264 = vld [vmem:[%s252] sm:$0xff]
      %v265 = vld [vmem:[%s252 + $0x8] sm:$0xff]
      %p266 = scmp.eq.s32.totalorder %s21, 0
      // Predicated region
      $region41: #{causal_cnn.5} parent=39 // pred_check
        %p267 = pneg %p266
      $region42: #{causal_cnn.5} parent=39 // pred_check_branch
        %269 = sbr.rel (%p267) target = $region44
      $region43: #{causal_cnn.5} parent=39 // pred_region
        %270 = vst [vmem:[#allocation2] sm:$0xff] 0.0
        %271 = vst [vmem:[#allocation2 + $0x8] sm:$0xff] 0.0
      $region44: #{causal_cnn.5} parent=39 // pred_fallthru
        _
      %v272 = vld [vmem:[#allocation2 + $0x8] sm:$0xff]
      %273 = vst [vmem:[#allocation2] sm:$0xff] %v264
      %274 = vst [vmem:[#allocation2 + $0x8] sm:$0xff] %v265
      %v275 = vld [vmem:[%s1] sm:$0xff]
      %v276 = vld [vmem:[%s1 + $0x8] sm:$0xff]
      %v277 = vld [vmem:[%s1 + $0x10] sm:$0xff]
      %v278 = vld [vmem:[%s1 + $0x18] sm:$0xff]
      %v279 = vld [vmem:[%s1 + $0x20] sm:$0xff]
      %v280 = vld [vmem:[%s1 + $0x28] sm:$0xff]
      %v281 = vld [vmem:[%s1 + $0x30] sm:$0xff]
      %v282 = vld [vmem:[%s1 + $0x38] sm:$0xff]
      %v283 = vld [vmem:[%s1 + $0x40] sm:$0xff]
      %v284 = vld [vmem:[%s1 + $0x48] sm:$0xff]
      %v285 = vld [vmem:[%s1 + $0x50] sm:$0xff]
      %v286 = vld [vmem:[%s1 + $0x58] sm:$0xff]
      %v287 = vld [vmem:[%s1 + $0x60] sm:$0xff]
      %v288 = vld [vmem:[%s1 + $0x68] sm:$0xff]
      %v289 = vld [vmem:[%s1 + $0x70] sm:$0xff]
      %v290 = vld [vmem:[%s1 + $0x78] sm:$0xff]
      %s291 = scalar_lea.vmem %s1, 128
      %v292 = vld [vmem:[%s291] sm:$0xff]
      %v293 = vld [vmem:[%s291 + $0x8] sm:$0xff]
      %v294 = vld [vmem:[%s291 + $0x10] sm:$0xff]
      %v295 = vld [vmem:[%s291 + $0x18] sm:$0xff]
      %v296 = vld [vmem:[%s291 + $0x20] sm:$0xff]
      %v297 = vld [vmem:[%s291 + $0x28] sm:$0xff]
      %v298 = vld [vmem:[%s291 + $0x30] sm:$0xff]
      %v299 = vld [vmem:[%s291 + $0x38] sm:$0xff]
      %v300 = vld [vmem:[%s291 + $0x40] sm:$0xff]
      %v301 = vld [vmem:[%s291 + $0x48] sm:$0xff]
      %v302 = vld [vmem:[%s291 + $0x50] sm:$0xff]
      %v303 = vld [vmem:[%s291 + $0x58] sm:$0xff]
      %v304 = vld [vmem:[%s291 + $0x60] sm:$0xff]
      %v305 = vld [vmem:[%s291 + $0x68] sm:$0xff]
      %v306 = vld [vmem:[%s291 + $0x70] sm:$0xff]
      %v307 = vld [vmem:[%s291 + $0x78] sm:$0xff]
      %vm311 = vcmask 1045504
      %v312 = vrot.slane %v272, 2
      %v313 = vrot.slane %v264, 2
      %v314 = vsel %vm311, %v312, %v313
      %v315 = vrot.slane %v265, 2
      %v316 = vsel %vm311, %v313, %v315
      %320 = vmatprep.subr.mxu0 0.0
      %321 = vmatpush1.msra.mxu0 %v307
      %322 = vmatprep.subr.mxu0 0.0
      %323 = vmatpush1.msra.mxu0 %v306
      %324 = vmatprep.subr.mxu0 0.0
      %325 = vmatpush1.msra.mxu0 %v305
      %326 = vmatprep.subr.mxu0 0.0
      %327 = vmatpush1.msra.mxu0 %v304
      %328 = vmatprep.subr.mxu0 0.0
      %329 = vmatpush1.msra.mxu0 %v303
      %330 = vmatprep.subr.mxu0 0.0
      %331 = vmatpush1.msra.mxu0 %v302
      %332 = vmatprep.subr.mxu0 0.0
      %333 = vmatpush1.msra.mxu0 %v301
      %334 = vmatprep.subr.mxu0 0.0
      %335 = vmatpush1.msra.mxu0 %v300
      %336 = vmatprep.subr.mxu0 0.0
      %337 = vmatpush1.msra.mxu0 %v299
      %338 = vmatprep.subr.mxu0 0.0
      %339 = vmatpush1.msra.mxu0 %v298
      %340 = vmatprep.subr.mxu0 0.0
      %341 = vmatpush1.msra.mxu0 %v297
      %342 = vmatprep.subr.mxu0 0.0
      %343 = vmatpush1.msra.mxu0 %v296
      %344 = vmatprep.subr.mxu0 0.0
      %345 = vmatpush1.msra.mxu0 %v295
      %346 = vmatprep.subr.mxu0 0.0
      %347 = vmatpush1.msra.mxu0 %v294
      %348 = vmatprep.subr.mxu0 0.0
      %349 = vmatpush1.msra.mxu0 %v293
      %350 = vmatprep.subr.mxu0 0.0
      %351 = vmatpush1.msra.mxu0 %v292
      %352 = vmatprep.subr.mxu0 0.0
      %353 = vmatpush2.msra.mxu0 0.0
      %354 = vmatprep.subr.mxu0 0.0
      %355 = vmatpush2.msra.mxu0 0.0
      %356 = vmatprep.subr.mxu0 0.0
      %357 = vmatpush2.msra.mxu0 0.0
      %358 = vmatprep.subr.mxu0 0.0
      %359 = vmatpush2.msra.mxu0 0.0
      %360 = vmatprep.subr.mxu0 0.0
      %361 = vmatpush2.msra.mxu0 0.0
      %362 = vmatprep.subr.mxu0 0.0
      %363 = vmatpush2.msra.mxu0 0.0
      %364 = vmatprep.subr.mxu0 0.0
      %365 = vmatpush2.msra.mxu0 0.0
      %366 = vmatprep.subr.mxu0 0.0
      %367 = vmatpush2.msra.mxu0 0.0
      %368 = vmatprep.subr.mxu0 0.0
      %369 = vmatpush2.msra.mxu0 0.0
      %370 = vmatprep.subr.mxu0 0.0
      %371 = vmatpush2.msra.mxu0 0.0
      %372 = vmatprep.subr.mxu0 0.0
      %373 = vmatpush2.msra.mxu0 0.0
      %374 = vmatprep.subr.mxu0 0.0
      %375 = vmatpush2.msra.mxu0 0.0
      %376 = vmatprep.subr.mxu0 0.0
      %377 = vmatpush2.msra.mxu0 0.0
      %378 = vmatprep.subr.mxu0 0.0
      %379 = vmatpush2.msra.mxu0 0.0
      %380 = vmatprep.subr.mxu0 0.0
      %381 = vmatpush2.msra.mxu0 0.0
      %382 = vmatprep.subr.mxu0 0.0
      %383 = vmatpush2.msra.mxu0 0.0
      %384 = vmatprep.mubr.f32.mxu0 0.0
      %385 = vmatmul.mubr.f32.gmra.mxu0 %v314
      %v386 = vpop.f32.mrf.mxu0
      %v387 = vadd.f32 0.0, %v386
      %v388 = vpop.f32.mrf.mxu0
      %389 = vmatprep.mubr.f32.mxu0 0.0
      %390 = vmatmul.mubr.f32.gmra.mxu0 %v316
      %v391 = vpop.f32.mrf.mxu0
      %v392 = vadd.f32 0.0, %v391
      %v393 = vpop.f32.mrf.mxu0
      %394 = vmatprep.mubr.f32.mxu0 0.0
      %395 = vmatmul.mubr.f32.gmra.mxu0 %v315
      %v396 = vpop.f32.mrf.mxu0
      %v397 = vadd.f32 0.0, %v396
      %v398 = vpop.f32.mrf.mxu0
      %399 = vdwg.mxu0
      %400 = vmatprep.subr.mxu0 0.0
      %401 = vmatpush1.msra.mxu0 %v290
      %402 = vmatprep.subr.mxu0 0.0
      %403 = vmatpush1.msra.mxu0 %v289
      %404 = vmatprep.subr.mxu0 0.0
      %405 = vmatpush1.msra.mxu0 %v288
      %406 = vmatprep.subr.mxu0 0.0
      %407 = vmatpush1.msra.mxu0 %v287
      %408 = vmatprep.subr.mxu0 0.0
      %409 = vmatpush1.msra.mxu0 %v286
      %410 = vmatprep.subr.mxu0 0.0
      %411 = vmatpush1.msra.mxu0 %v285
      %412 = vmatprep.subr.mxu0 0.0
      %413 = vmatpush1.msra.mxu0 %v284
      %414 = vmatprep.subr.mxu0 0.0
      %415 = vmatpush1.msra.mxu0 %v283
      %416 = vmatprep.subr.mxu0 0.0
      %417 = vmatpush1.msra.mxu0 %v282
      %418 = vmatprep.subr.mxu0 0.0
      %419 = vmatpush1.msra.mxu0 %v281
      %420 = vmatprep.subr.mxu0 0.0
      %421 = vmatpush1.msra.mxu0 %v280
      %422 = vmatprep.subr.mxu0 0.0
      %423 = vmatpush1.msra.mxu0 %v279
      %424 = vmatprep.subr.mxu0 0.0
      %425 = vmatpush1.msra.mxu0 %v278
      %426 = vmatprep.subr.mxu0 0.0
      %427 = vmatpush1.msra.mxu0 %v277
      %428 = vmatprep.subr.mxu0 0.0
      %429 = vmatpush1.msra.mxu0 %v276
      %430 = vmatprep.subr.mxu0 0.0
      %431 = vmatpush1.msra.mxu0 %v275
      %432 = vmatprep.subr.mxu0 0.0
      %433 = vmatpush2.msra.mxu0 0.0
      %434 = vmatprep.subr.mxu0 0.0
      %435 = vmatpush2.msra.mxu0 0.0
      %436 = vmatprep.subr.mxu0 0.0
      %437 = vmatpush2.msra.mxu0 0.0
      %438 = vmatprep.subr.mxu0 0.0
      %439 = vmatpush2.msra.mxu0 0.0
      %440 = vmatprep.subr.mxu0 0.0
      %441 = vmatpush2.msra.mxu0 0.0
      %442 = vmatprep.subr.mxu0 0.0
      %443 = vmatpush2.msra.mxu0 0.0
      %444 = vmatprep.subr.mxu0 0.0
      %445 = vmatpush2.msra.mxu0 0.0
      %446 = vmatprep.subr.mxu0 0.0
      %447 = vmatpush2.msra.mxu0 0.0
      %448 = vmatprep.subr.mxu0 0.0
      %449 = vmatpush2.msra.mxu0 0.0
      %450 = vmatprep.subr.mxu0 0.0
      %451 = vmatpush2.msra.mxu0 0.0
      %452 = vmatprep.subr.mxu0 0.0
      %453 = vmatpush2.msra.mxu0 0.0
      %454 = vmatprep.subr.mxu0 0.0
      %455 = vmatpush2.msra.mxu0 0.0
      %456 = vmatprep.subr.mxu0 0.0
      %457 = vmatpush2.msra.mxu0 0.0
      %458 = vmatprep.subr.mxu0 0.0
      %459 = vmatpush2.msra.mxu0 0.0
      %460 = vmatprep.subr.mxu0 0.0
      %461 = vmatpush2.msra.mxu0 0.0
      %462 = vmatprep.subr.mxu0 0.0
      %463 = vmatpush2.msra.mxu0 0.0
      %464 = vmatprep.mubr.f32.mxu0 0.0
      %465 = vmatmul.mubr.f32.gmra.mxu0 %v272
      %v466 = vpop.f32.mrf.mxu0
      %v467 = vadd.f32 %v387, %v466
      %v468 = vpop.f32.mrf.mxu0
      %469 = vmatprep.mubr.f32.mxu0 0.0
      %470 = vmatmul.mubr.f32.gmra.mxu0 %v264
      %v471 = vpop.f32.mrf.mxu0
      %v472 = vadd.f32 %v392, %v471
      %v473 = vpop.f32.mrf.mxu0
      %474 = vmatprep.mubr.f32.mxu0 0.0
      %475 = vmatmul.mubr.f32.gmra.mxu0 %v265
      %v476 = vpop.f32.mrf.mxu0
      %v477 = vadd.f32 %v397, %v476
      %v478 = vpop.f32.mrf.mxu0
      %479 = vdwg.mxu0
      %s480 = scalar_lea.vmem %s1, 256
      %v481 = vld [vmem:[%s480] sm:$0xff]
      %v482 = vld [vmem:[%s480 + $0x8] sm:$0xff]
      %v483 = vld [vmem:[%s480 + $0x10] sm:$0xff]
      %v484 = vld [vmem:[%s480 + $0x18] sm:$0xff]
      %v485 = vld [vmem:[%s480 + $0x20] sm:$0xff]
      %v486 = vld [vmem:[%s480 + $0x28] sm:$0xff]
      %v487 = vld [vmem:[%s480 + $0x30] sm:$0xff]
      %v488 = vld [vmem:[%s480 + $0x38] sm:$0xff]
      %v489 = vld [vmem:[%s480 + $0x40] sm:$0xff]
      %v490 = vld [vmem:[%s480 + $0x48] sm:$0xff]
      %v491 = vld [vmem:[%s480 + $0x50] sm:$0xff]
      %v492 = vld [vmem:[%s480 + $0x58] sm:$0xff]
      %v493 = vld [vmem:[%s480 + $0x60] sm:$0xff]
      %v494 = vld [vmem:[%s480 + $0x68] sm:$0xff]
      %v495 = vld [vmem:[%s480 + $0x70] sm:$0xff]
      %v496 = vld [vmem:[%s480 + $0x78] sm:$0xff]
      %vm497 = vcmask 1043456
      %v498 = vrot.slane %v272, 4
      %v499 = vrot.slane %v264, 4
      %v500 = vsel %vm497, %v498, %v499
      %v501 = vrot.slane %v265, 4
      %v502 = vsel %vm497, %v499, %v501
      %506 = vmatprep.subr.mxu0 0.0
      %507 = vmatpush1.msra.mxu0 %v496
      %508 = vmatprep.subr.mxu0 0.0
      %509 = vmatpush1.msra.mxu0 %v495
      %510 = vmatprep.subr.mxu0 0.0
      %511 = vmatpush1.msra.mxu0 %v494
      %512 = vmatprep.subr.mxu0 0.0
      %513 = vmatpush1.msra.mxu0 %v493
      %514 = vmatprep.subr.mxu0 0.0
      %515 = vmatpush1.msra.mxu0 %v492
      %516 = vmatprep.subr.mxu0 0.0
      %517 = vmatpush1.msra.mxu0 %v491
      %518 = vmatprep.subr.mxu0 0.0
      %519 = vmatpush1.msra.mxu0 %v490
      %520 = vmatprep.subr.mxu0 0.0
      %521 = vmatpush1.msra.mxu0 %v489
      %522 = vmatprep.subr.mxu0 0.0
      %523 = vmatpush1.msra.mxu0 %v488
      %524 = vmatprep.subr.mxu0 0.0
      %525 = vmatpush1.msra.mxu0 %v487
      %526 = vmatprep.subr.mxu0 0.0
      %527 = vmatpush1.msra.mxu0 %v486
      %528 = vmatprep.subr.mxu0 0.0
      %529 = vmatpush1.msra.mxu0 %v485
      %530 = vmatprep.subr.mxu0 0.0
      %531 = vmatpush1.msra.mxu0 %v484
      %532 = vmatprep.subr.mxu0 0.0
      %533 = vmatpush1.msra.mxu0 %v483
      %534 = vmatprep.subr.mxu0 0.0
      %535 = vmatpush1.msra.mxu0 %v482
      %536 = vmatprep.subr.mxu0 0.0
      %537 = vmatpush1.msra.mxu0 %v481
      %538 = vmatprep.subr.mxu0 0.0
      %539 = vmatpush2.msra.mxu0 0.0
      %540 = vmatprep.subr.mxu0 0.0
      %541 = vmatpush2.msra.mxu0 0.0
      %542 = vmatprep.subr.mxu0 0.0
      %543 = vmatpush2.msra.mxu0 0.0
      %544 = vmatprep.subr.mxu0 0.0
      %545 = vmatpush2.msra.mxu0 0.0
      %546 = vmatprep.subr.mxu0 0.0
      %547 = vmatpush2.msra.mxu0 0.0
      %548 = vmatprep.subr.mxu0 0.0
      %549 = vmatpush2.msra.mxu0 0.0
      %550 = vmatprep.subr.mxu0 0.0
      %551 = vmatpush2.msra.mxu0 0.0
      %552 = vmatprep.subr.mxu0 0.0
      %553 = vmatpush2.msra.mxu0 0.0
      %554 = vmatprep.subr.mxu0 0.0
      %555 = vmatpush2.msra.mxu0 0.0
      %556 = vmatprep.subr.mxu0 0.0
      %557 = vmatpush2.msra.mxu0 0.0
      %558 = vmatprep.subr.mxu0 0.0
      %559 = vmatpush2.msra.mxu0 0.0
      %560 = vmatprep.subr.mxu0 0.0
      %561 = vmatpush2.msra.mxu0 0.0
      %562 = vmatprep.subr.mxu0 0.0
      %563 = vmatpush2.msra.mxu0 0.0
      %564 = vmatprep.subr.mxu0 0.0
      %565 = vmatpush2.msra.mxu0 0.0
      %566 = vmatprep.subr.mxu0 0.0
      %567 = vmatpush2.msra.mxu0 0.0
      %568 = vmatprep.subr.mxu0 0.0
      %569 = vmatpush2.msra.mxu0 0.0
      %570 = vmatprep.mubr.f32.mxu0 0.0
      %571 = vmatmul.mubr.f32.gmra.mxu0 %v500
      %v572 = vpop.f32.mrf.mxu0
      %v573 = vadd.f32 0.0, %v572
      %v574 = vpop.f32.mrf.mxu0
      %575 = vmatprep.mubr.f32.mxu0 0.0
      %576 = vmatmul.mubr.f32.gmra.mxu0 %v502
      %v577 = vpop.f32.mrf.mxu0
      %v578 = vadd.f32 0.0, %v577
      %v579 = vpop.f32.mrf.mxu0
      %580 = vmatprep.mubr.f32.mxu0 0.0
      %581 = vmatmul.mubr.f32.gmra.mxu0 %v501
      %v582 = vpop.f32.mrf.mxu0
      %v583 = vadd.f32 0.0, %v582
      %v584 = vpop.f32.mrf.mxu0
      %585 = vdwg.mxu0
      %v586 = vadd.f32 %v467, %v573
      %v587 = vadd.f32 %v472, %v578
      %v588 = vadd.f32 %v477, %v583
      %v589 = vld [vmem:[%s2] sm:$0x1]
      %v591 = vlaneseq
      %v592 = vshrl.u32 %v591, 7
      %v593 = vsub.s32 0, %v592
      %v594 = vrot.slane %v589, %v593
      %v596 = vadd.f32 %v586, %v594
      %v597 = vadd.f32 %v587, %v594
      %v598 = vadd.f32 %v588, %v594
      %v599 = vmul.f32 %v596, 0.01
      %v600 = vmul.f32 %v597, 0.01
      %v601 = vmul.f32 %v598, 0.01
      %v602 = vmax.f32 %v596, %v599
      %v603 = vmax.f32 %v597, %v600
      %v604 = vmax.f32 %v598, %v601
      %v605 = vlaneseq
      %v606 = vshrl.u32 %v605, 7
      %v607 = vadd.s32 %v606, 8
      %v608 = vadd.s32 %v606, 16
      %s609 = smul.u32 %s21, 16
      %v610 = vstv %s609
      %v611 = vadd.s32 %v606, %v610
      %v612 = vadd.s32 %v607, %v610
      %v613 = vadd.s32 %v608, %v610
      %vm614 = vcmp.ge.s32.totalorder %v611, 4
      %vm615 = vcmp.ge.s32.totalorder %v612, 4
      %vm616 = vcmp.ge.s32.totalorder %v613, 4
      %v617 = vsel %vm614, 1, 0
      %v618 = vsel %vm615, 1, 0
      %v619 = vsel %vm616, 1, 0
      %vm620 = vcmp.eq.s32.totalorder %v617, 1
      %vm621 = vcmp.eq.s32.totalorder %v618, 1
      %vm622 = vcmp.eq.s32.totalorder %v619, 1
      %v623 = vsel %vm620, %v602, 0.0
      %v624 = vsel %vm621, %v603, 0.0
      %v625 = vsel %vm622, %v604, 0.0
      %v626 = vld [vmem:[%s3] sm:$0xff]
      %v627 = vld [vmem:[%s3 + $0x8] sm:$0xff]
      %v628 = vld [vmem:[%s3 + $0x10] sm:$0xff]
      %v629 = vld [vmem:[%s3 + $0x18] sm:$0xff]
      %v630 = vld [vmem:[%s3 + $0x20] sm:$0xff]
      %v631 = vld [vmem:[%s3 + $0x28] sm:$0xff]
      %v632 = vld [vmem:[%s3 + $0x30] sm:$0xff]
      %v633 = vld [vmem:[%s3 + $0x38] sm:$0xff]
      %v634 = vld [vmem:[%s3 + $0x40] sm:$0xff]
      %v635 = vld [vmem:[%s3 + $0x48] sm:$0xff]
      %v636 = vld [vmem:[%s3 + $0x50] sm:$0xff]
      %v637 = vld [vmem:[%s3 + $0x58] sm:$0xff]
      %v638 = vld [vmem:[%s3 + $0x60] sm:$0xff]
      %v639 = vld [vmem:[%s3 + $0x68] sm:$0xff]
      %v640 = vld [vmem:[%s3 + $0x70] sm:$0xff]
      %v641 = vld [vmem:[%s3 + $0x78] sm:$0xff]
      %s642 = scalar_lea.vmem %s3, 128
      %v643 = vld [vmem:[%s642] sm:$0xff]
      %v644 = vld [vmem:[%s642 + $0x8] sm:$0xff]
      %v645 = vld [vmem:[%s642 + $0x10] sm:$0xff]
      %v646 = vld [vmem:[%s642 + $0x18] sm:$0xff]
      %v647 = vld [vmem:[%s642 + $0x20] sm:$0xff]
      %v648 = vld [vmem:[%s642 + $0x28] sm:$0xff]
      %v649 = vld [vmem:[%s642 + $0x30] sm:$0xff]
      %v650 = vld [vmem:[%s642 + $0x38] sm:$0xff]
      %v651 = vld [vmem:[%s642 + $0x40] sm:$0xff]
      %v652 = vld [vmem:[%s642 + $0x48] sm:$0xff]
      %v653 = vld [vmem:[%s642 + $0x50] sm:$0xff]
      %v654 = vld [vmem:[%s642 + $0x58] sm:$0xff]
      %v655 = vld [vmem:[%s642 + $0x60] sm:$0xff]
      %v656 = vld [vmem:[%s642 + $0x68] sm:$0xff]
      %v657 = vld [vmem:[%s642 + $0x70] sm:$0xff]
      %v658 = vld [vmem:[%s642 + $0x78] sm:$0xff]
      %v662 = vrot.slane %v623, 2
      %v663 = vrot.slane %v624, 2
      %v664 = vsel %vm311, %v662, %v663
      %v665 = vrot.slane %v625, 2
      %v666 = vsel %vm311, %v663, %v665
      %669 = vmatprep.subr.mxu0 0.0
      %670 = vmatpush1.msra.mxu0 %v658
      %671 = vmatprep.subr.mxu0 0.0
      %672 = vmatpush1.msra.mxu0 %v657
      %673 = vmatprep.subr.mxu0 0.0
      %674 = vmatpush1.msra.mxu0 %v656
      %675 = vmatprep.subr.mxu0 0.0
      %676 = vmatpush1.msra.mxu0 %v655
      %677 = vmatprep.subr.mxu0 0.0
      %678 = vmatpush1.msra.mxu0 %v654
      %679 = vmatprep.subr.mxu0 0.0
      %680 = vmatpush1.msra.mxu0 %v653
      %681 = vmatprep.subr.mxu0 0.0
      %682 = vmatpush1.msra.mxu0 %v652
      %683 = vmatprep.subr.mxu0 0.0
      %684 = vmatpush1.msra.mxu0 %v651
      %685 = vmatprep.subr.mxu0 0.0
      %686 = vmatpush1.msra.mxu0 %v650
      %687 = vmatprep.subr.mxu0 0.0
      %688 = vmatpush1.msra.mxu0 %v649
      %689 = vmatprep.subr.mxu0 0.0
      %690 = vmatpush1.msra.mxu0 %v648
      %691 = vmatprep.subr.mxu0 0.0
      %692 = vmatpush1.msra.mxu0 %v647
      %693 = vmatprep.subr.mxu0 0.0
      %694 = vmatpush1.msra.mxu0 %v646
      %695 = vmatprep.subr.mxu0 0.0
      %696 = vmatpush1.msra.mxu0 %v645
      %697 = vmatprep.subr.mxu0 0.0
      %698 = vmatpush1.msra.mxu0 %v644
      %699 = vmatprep.subr.mxu0 0.0
      %700 = vmatpush1.msra.mxu0 %v643
      %701 = vmatprep.subr.mxu0 0.0
      %702 = vmatpush2.msra.mxu0 0.0
      %703 = vmatprep.subr.mxu0 0.0
      %704 = vmatpush2.msra.mxu0 0.0
      %705 = vmatprep.subr.mxu0 0.0
      %706 = vmatpush2.msra.mxu0 0.0
      %707 = vmatprep.subr.mxu0 0.0
      %708 = vmatpush2.msra.mxu0 0.0
      %709 = vmatprep.subr.mxu0 0.0
      %710 = vmatpush2.msra.mxu0 0.0
      %711 = vmatprep.subr.mxu0 0.0
      %712 = vmatpush2.msra.mxu0 0.0
      %713 = vmatprep.subr.mxu0 0.0
      %714 = vmatpush2.msra.mxu0 0.0
      %715 = vmatprep.subr.mxu0 0.0
      %716 = vmatpush2.msra.mxu0 0.0
      %717 = vmatprep.subr.mxu0 0.0
      %718 = vmatpush2.msra.mxu0 0.0
      %719 = vmatprep.subr.mxu0 0.0
      %720 = vmatpush2.msra.mxu0 0.0
      %721 = vmatprep.subr.mxu0 0.0
      %722 = vmatpush2.msra.mxu0 0.0
      %723 = vmatprep.subr.mxu0 0.0
      %724 = vmatpush2.msra.mxu0 0.0
      %725 = vmatprep.subr.mxu0 0.0
      %726 = vmatpush2.msra.mxu0 0.0
      %727 = vmatprep.subr.mxu0 0.0
      %728 = vmatpush2.msra.mxu0 0.0
      %729 = vmatprep.subr.mxu0 0.0
      %730 = vmatpush2.msra.mxu0 0.0
      %731 = vmatprep.subr.mxu0 0.0
      %732 = vmatpush2.msra.mxu0 0.0
      %733 = vmatprep.mubr.f32.mxu0 0.0
      %734 = vmatmul.mubr.f32.gmra.mxu0 %v664
      %v735 = vpop.f32.mrf.mxu0
      %v736 = vadd.f32 0.0, %v735
      %v737 = vpop.f32.mrf.mxu0
      %738 = vmatprep.mubr.f32.mxu0 0.0
      %739 = vmatmul.mubr.f32.gmra.mxu0 %v666
      %v740 = vpop.f32.mrf.mxu0
      %v741 = vadd.f32 0.0, %v740
      %v742 = vpop.f32.mrf.mxu0
      %743 = vdwg.mxu0
      %744 = vmatprep.subr.mxu0 0.0
      %745 = vmatpush1.msra.mxu0 %v641
      %746 = vmatprep.subr.mxu0 0.0
      %747 = vmatpush1.msra.mxu0 %v640
      %748 = vmatprep.subr.mxu0 0.0
      %749 = vmatpush1.msra.mxu0 %v639
      %750 = vmatprep.subr.mxu0 0.0
      %751 = vmatpush1.msra.mxu0 %v638
      %752 = vmatprep.subr.mxu0 0.0
      %753 = vmatpush1.msra.mxu0 %v637
      %754 = vmatprep.subr.mxu0 0.0
      %755 = vmatpush1.msra.mxu0 %v636
      %756 = vmatprep.subr.mxu0 0.0
      %757 = vmatpush1.msra.mxu0 %v635
      %758 = vmatprep.subr.mxu0 0.0
      %759 = vmatpush1.msra.mxu0 %v634
      %760 = vmatprep.subr.mxu0 0.0
      %761 = vmatpush1.msra.mxu0 %v633
      %762 = vmatprep.subr.mxu0 0.0
      %763 = vmatpush1.msra.mxu0 %v632
      %764 = vmatprep.subr.mxu0 0.0
      %765 = vmatpush1.msra.mxu0 %v631
      %766 = vmatprep.subr.mxu0 0.0
      %767 = vmatpush1.msra.mxu0 %v630
      %768 = vmatprep.subr.mxu0 0.0
      %769 = vmatpush1.msra.mxu0 %v629
      %770 = vmatprep.subr.mxu0 0.0
      %771 = vmatpush1.msra.mxu0 %v628
      %772 = vmatprep.subr.mxu0 0.0
      %773 = vmatpush1.msra.mxu0 %v627
      %774 = vmatprep.subr.mxu0 0.0
      %775 = vmatpush1.msra.mxu0 %v626
      %776 = vmatprep.subr.mxu0 0.0
      %777 = vmatpush2.msra.mxu0 0.0
      %778 = vmatprep.subr.mxu0 0.0
      %779 = vmatpush2.msra.mxu0 0.0
      %780 = vmatprep.subr.mxu0 0.0
      %781 = vmatpush2.msra.mxu0 0.0
      %782 = vmatprep.subr.mxu0 0.0
      %783 = vmatpush2.msra.mxu0 0.0
      %784 = vmatprep.subr.mxu0 0.0
      %785 = vmatpush2.msra.mxu0 0.0
      %786 = vmatprep.subr.mxu0 0.0
      %787 = vmatpush2.msra.mxu0 0.0
      %788 = vmatprep.subr.mxu0 0.0
      %789 = vmatpush2.msra.mxu0 0.0
      %790 = vmatprep.subr.mxu0 0.0
      %791 = vmatpush2.msra.mxu0 0.0
      %792 = vmatprep.subr.mxu0 0.0
      %793 = vmatpush2.msra.mxu0 0.0
      %794 = vmatprep.subr.mxu0 0.0
      %795 = vmatpush2.msra.mxu0 0.0
      %796 = vmatprep.subr.mxu0 0.0
      %797 = vmatpush2.msra.mxu0 0.0
      %798 = vmatprep.subr.mxu0 0.0
      %799 = vmatpush2.msra.mxu0 0.0
      %800 = vmatprep.subr.mxu0 0.0
      %801 = vmatpush2.msra.mxu0 0.0
      %802 = vmatprep.subr.mxu0 0.0
      %803 = vmatpush2.msra.mxu0 0.0
      %804 = vmatprep.subr.mxu0 0.0
      %805 = vmatpush2.msra.mxu0 0.0
      %806 = vmatprep.subr.mxu0 0.0
      %807 = vmatpush2.msra.mxu0 0.0
      %808 = vmatprep.mubr.f32.mxu0 0.0
      %809 = vmatmul.mubr.f32.gmra.mxu0 %v623
      %v810 = vpop.f32.mrf.mxu0
      %v811 = vadd.f32 %v736, %v810
      %v812 = vpop.f32.mrf.mxu0
      %813 = vmatprep.mubr.f32.mxu0 0.0
      %814 = vmatmul.mubr.f32.gmra.mxu0 %v624
      %v815 = vpop.f32.mrf.mxu0
      %v816 = vadd.f32 %v741, %v815
      %v817 = vpop.f32.mrf.mxu0
      %818 = vdwg.mxu0
      %s819 = scalar_lea.vmem %s3, 256
      %v820 = vld [vmem:[%s819] sm:$0xff]
      %v821 = vld [vmem:[%s819 + $0x8] sm:$0xff]
      %v822 = vld [vmem:[%s819 + $0x10] sm:$0xff]
      %v823 = vld [vmem:[%s819 + $0x18] sm:$0xff]
      %v824 = vld [vmem:[%s819 + $0x20] sm:$0xff]
      %v825 = vld [vmem:[%s819 + $0x28] sm:$0xff]
      %v826 = vld [vmem:[%s819 + $0x30] sm:$0xff]
      %v827 = vld [vmem:[%s819 + $0x38] sm:$0xff]
      %v828 = vld [vmem:[%s819 + $0x40] sm:$0xff]
      %v829 = vld [vmem:[%s819 + $0x48] sm:$0xff]
      %v830 = vld [vmem:[%s819 + $0x50] sm:$0xff]
      %v831 = vld [vmem:[%s819 + $0x58] sm:$0xff]
      %v832 = vld [vmem:[%s819 + $0x60] sm:$0xff]
      %v833 = vld [vmem:[%s819 + $0x68] sm:$0xff]
      %v834 = vld [vmem:[%s819 + $0x70] sm:$0xff]
      %v835 = vld [vmem:[%s819 + $0x78] sm:$0xff]
      %v836 = vrot.slane %v623, 4
      %v837 = vrot.slane %v624, 4
      %v838 = vsel %vm497, %v836, %v837
      %v839 = vrot.slane %v625, 4
      %v840 = vsel %vm497, %v837, %v839
      %843 = vmatprep.subr.mxu0 0.0
      %844 = vmatpush1.msra.mxu0 %v835
      %845 = vmatprep.subr.mxu0 0.0
      %846 = vmatpush1.msra.mxu0 %v834
      %847 = vmatprep.subr.mxu0 0.0
      %848 = vmatpush1.msra.mxu0 %v833
      %849 = vmatprep.subr.mxu0 0.0
      %850 = vmatpush1.msra.mxu0 %v832
      %851 = vmatprep.subr.mxu0 0.0
      %852 = vmatpush1.msra.mxu0 %v831
      %853 = vmatprep.subr.mxu0 0.0
      %854 = vmatpush1.msra.mxu0 %v830
      %855 = vmatprep.subr.mxu0 0.0
      %856 = vmatpush1.msra.mxu0 %v829
      %857 = vmatprep.subr.mxu0 0.0
      %858 = vmatpush1.msra.mxu0 %v828
      %859 = vmatprep.subr.mxu0 0.0
      %860 = vmatpush1.msra.mxu0 %v827
      %861 = vmatprep.subr.mxu0 0.0
      %862 = vmatpush1.msra.mxu0 %v826
      %863 = vmatprep.subr.mxu0 0.0
      %864 = vmatpush1.msra.mxu0 %v825
      %865 = vmatprep.subr.mxu0 0.0
      %866 = vmatpush1.msra.mxu0 %v824
      %867 = vmatprep.subr.mxu0 0.0
      %868 = vmatpush1.msra.mxu0 %v823
      %869 = vmatprep.subr.mxu0 0.0
      %870 = vmatpush1.msra.mxu0 %v822
      %871 = vmatprep.subr.mxu0 0.0
      %872 = vmatpush1.msra.mxu0 %v821
      %873 = vmatprep.subr.mxu0 0.0
      %874 = vmatpush1.msra.mxu0 %v820
      %875 = vmatprep.subr.mxu0 0.0
      %876 = vmatpush2.msra.mxu0 0.0
      %877 = vmatprep.subr.mxu0 0.0
      %878 = vmatpush2.msra.mxu0 0.0
      %879 = vmatprep.subr.mxu0 0.0
      %880 = vmatpush2.msra.mxu0 0.0
      %881 = vmatprep.subr.mxu0 0.0
      %882 = vmatpush2.msra.mxu0 0.0
      %883 = vmatprep.subr.mxu0 0.0
      %884 = vmatpush2.msra.mxu0 0.0
      %885 = vmatprep.subr.mxu0 0.0
      %886 = vmatpush2.msra.mxu0 0.0
      %887 = vmatprep.subr.mxu0 0.0
      %888 = vmatpush2.msra.mxu0 0.0
      %889 = vmatprep.subr.mxu0 0.0
      %890 = vmatpush2.msra.mxu0 0.0
      %891 = vmatprep.subr.mxu0 0.0
      %892 = vmatpush2.msra.mxu0 0.0
      %893 = vmatprep.subr.mxu0 0.0
      %894 = vmatpush2.msra.mxu0 0.0
      %895 = vmatprep.subr.mxu0 0.0
      %896 = vmatpush2.msra.mxu0 0.0
      %897 = vmatprep.subr.mxu0 0.0
      %898 = vmatpush2.msra.mxu0 0.0
      %899 = vmatprep.subr.mxu0 0.0
      %900 = vmatpush2.msra.mxu0 0.0
      %901 = vmatprep.subr.mxu0 0.0
      %902 = vmatpush2.msra.mxu0 0.0
      %903 = vmatprep.subr.mxu0 0.0
      %904 = vmatpush2.msra.mxu0 0.0
      %905 = vmatprep.subr.mxu0 0.0
      %906 = vmatpush2.msra.mxu0 0.0
      %907 = vmatprep.mubr.f32.mxu0 0.0
      %908 = vmatmul.mubr.f32.gmra.mxu0 %v838
      %v909 = vpop.f32.mrf.mxu0
      %v910 = vadd.f32 0.0, %v909
      %v911 = vpop.f32.mrf.mxu0
      %912 = vmatprep.mubr.f32.mxu0 0.0
      %913 = vmatmul.mubr.f32.gmra.mxu0 %v840
      %v914 = vpop.f32.mrf.mxu0
      %v915 = vadd.f32 0.0, %v914
      %v916 = vpop.f32.mrf.mxu0
      %917 = vdwg.mxu0
      %v918 = vadd.f32 %v811, %v910
      %v919 = vadd.f32 %v816, %v915
      %v920 = vld [vmem:[%s4] sm:$0x1]
      %v922 = vlaneseq
      %v923 = vshrl.u32 %v922, 7
      %v924 = vsub.s32 0, %v923
      %v925 = vrot.slane %v920, %v924
      %v927 = vadd.f32 %v918, %v925
      %v928 = vadd.f32 %v919, %v925
      %v929 = vmul.f32 %v927, 0.01
      %v930 = vmul.f32 %v928, 0.01
      %v931 = vmax.f32 %v927, %v929
      %v932 = vmax.f32 %v928, %v930
      %v933 = vadd.f32 %v931, %v264
      %v934 = vadd.f32 %v932, %v265
      %935 = vst [vmem:[%s262] sm:$0xff] %v933
      %936 = vst [vmem:[%s262 + $0x8] sm:$0xff] %v934
      %s937 = smul.u32 2, %s21
      %p938 = scmp.lt.s32.totalorder %s20, 1
      %s939 = scalar_select %p938, %s20, 1
      %p940 = scmp.lt.s32.totalorder %s937, 5
      %s941 = scalar_select %p940, %s937, 5
      %s942 = smul.addr %s939, 6
      %s943 = sadd.s32 %s941, %s942
      %s944 = smul.addr %s943, 8
      %s945 = scalar_lea.vmem %s5, %s944
      // Predicated region
      $region45: #{causal_cnn.5} parent=39 // pred_check
        %p946 = pneg %p160
      $region46: #{causal_cnn.5} parent=39 // pred_check_branch
        %948 = sbr.rel (%p946) target = $region48
      $region47: #{causal_cnn.5} parent=39 // pred_region
        %s949 = smul.u32 2, %s21
      $region48: #{causal_cnn.5} parent=39 // pred_fallthru
        _
    $region40: #{causal_cnn.5} parent=5 // pred_fallthru
      _
    %p950 = scmp.le.s32.totalorder 2, %s11
    // Predicated region
    $region49: #{causal_cnn.5} parent=5 // pred_check
      %p951 = pneg %p950
    $region50: #{causal_cnn.5} parent=5 // pred_check_branch
      %953 = sbr.rel (%p951) target = $region52
    $region51: #{causal_cnn.5} parent=5 // pred_region
      %s954 = ssub.s32 %s11, 2
      // Predicated region
      $region53: #{causal_cnn.5} parent=51 // pred_check
        %p955 = pneg %p166
      $region54: #{causal_cnn.5} parent=51 // pred_check_branch
        %957 = sbr.rel (%p955) target = $region56
      $region55: #{causal_cnn.5} parent=51 // pred_region
        %s958 = smul.u32 2, %s23
        %p959 = scmp.lt.s32.totalorder %s22, 1
        %s960 = scalar_select %p959, %s22, 1
        %p961 = scmp.lt.s32.totalorder %s958, 5
        %s962 = scalar_select %p961, %s958, 5
        %s963 = smul.addr %s960, 6
        %s964 = sadd.s32 %s962, %s963
        %s965 = smul.addr %s964, 8
        %s966 = scalar_lea.vmem %s5, %s965
      $region56: #{causal_cnn.5} parent=51 // pred_fallthru
        _
    $region52: #{causal_cnn.5} parent=5 // pred_fallthru
      _
  $region6: #{causal_cnn.5} parent=0 // loop_footer
    %s15 = sadd.s32 1, %s11
  $region7: #{causal_cnn.5} parent=0 // loop_footer_branch
    %10 = sbr.rel target = $region3
  $region8: #{causal_cnn.5} parent=0 // loop_exit
    _

// kernel: causal_cnn.6
$region0: #{causal_cnn.6}
  #allocation0 [shape = 'u32[]', space=smem, size = 0x4, offset = 0x4, fixed_abs, tag = 'smem constant byte address 0x4 - core index']
  #allocation1 [shape = 'u32[144,128]{1,0:T(1,128)}', space=vmem, size = 0x12000, scoped, tag = 'internal scratch']
  #allocation2 [shape = 'f32[16,128]{1,0:T(8,128)}', space=vmem, size = 0x2000, scoped, tag = 'scratch operand']
  %s0 = inlined_call_operand.vmem [shape: f32[2,48,128], index: 0, kind: input, shape index: {}]
  %s1 = inlined_call_operand.vmem [shape: f32[3,128,128], index: 1, kind: input, shape index: {}]
  %s2 = inlined_call_operand.vmem [shape: f32[1,128], index: 2, kind: input, shape index: {}]
  %s3 = inlined_call_operand.vmem [shape: f32[3,128,128], index: 3, kind: input, shape index: {}]
  %s4 = inlined_call_operand.vmem [shape: f32[1,128], index: 4, kind: input, shape index: {}]
  %s5 = inlined_call_operand.vmem [shape: f32[2,48,128], index: 5, kind: output, shape index: {}]
  %s6 = sld [smem:[#allocation0]]
  $region57: #{causal_cnn.6} parent=0
    _
  %s8 = ssub.s32 1, %s6
  %s9 = scalar_select 0, %s8, %s6
  loop: start=0, step=1, limit=8
  $region2: #{causal_cnn.6} parent=0 // loop_pre_header
    _
  $region3: #{causal_cnn.6} parent=0 // loop_header
    %s11 = sphi 0, %s15
    %p12 = scmp.ge.s32.totalorder %s11, 8
    %s18 = sphi 0, %s30
    %s19 = sphi 0, %s26
    %s20 = sphi 0, %s18
    %s21 = sphi 0, %s19
    %s22 = sphi 0, %s20
    %s23 = sphi 0, %s21
    %s35 = sphi 0, %s37
    %s38 = sphi 0, %s35
    %s39 = sphi 0, %s38
    %s55 = sphi 0, %s39
    %s59 = sphi 0, %s59
    %s61 = sphi 0, %s59
    %s62 = sphi 0, %s61
    %s76 = sphi 0, %s62
    %s80 = sphi 0, %s80
    %s82 = sphi 0, %s80
    %s83 = sphi 0, %s82
    %s97 = sphi 0, %s83
    %s101 = sphi 0, %s101
    %s103 = sphi 0, %s101
    %s104 = sphi 0, %s103
    %s118 = sphi 0, %s104
    %s122 = sphi 0, %s122
    %s124 = sphi 0, %s122
    %s125 = sphi 0, %s124
    %s139 = sphi 0, %s125
    %s147 = sphi 0, %s149
    %s150 = sphi 0, %s147
    %s151 = sphi 0, %s150
    %s167 = sphi 0, %s151
  $region4: #{causal_cnn.6} parent=0 // loop_header_branch
    %14 = sbr.rel (%p12) target = $region8
  $region5: #{causal_cnn.6} parent=0 // loop_body
    %s16 = ssub.s32 %s11, 1
    %s17 = ssub.s32 %s11, 2
    %s24 = sadd.s32 1, %s19
    %p25 = scmp.ge.s32.totalorder %s24, 3
    %s26 = scalar_select %p25, 0, %s24
    %s27 = sadd.s32 1, %s18
    %s28 = scalar_select %p25, %s27, %s18
    %p29 = scmp.ge.s32.totalorder %s28, 2
    %s30 = scalar_select %p29, 0, %s28
    %s31 = ssub.s32 %s18, %s30
    %s32 = ssub.s32 %s19, %s26
    %s33 = sor.u32 %s31, %s32
    %p34 = scmp.eq.s32.totalorder %s33, 0
    %s36 = sadd.s32 %s35, 1
    %s37 = scalar_select %p34, %s35, %s36
    %p40 = pneg %p34
    %p41 = scmp.eq.s32.totalorder %s11, 5
    %p42 = por %p40, %p41
    %p43 = scmp.ne.s32.totalorder %s35, %s38
    %p44 = scmp.eq.s32.totalorder %s11, 0
    %p45 = por %p43, %p44
    %p46 = scmp.ne.s32.totalorder %s35, %s38
    %p47 = scmp.eq.s32.totalorder %s16, 5
    %p48 = por %p46, %p47
    %p49 = scmp.ne.s32.totalorder %s38, %s39
    %p50 = scmp.eq.s32.totalorder %s16, 0
    %p51 = por %p49, %p50
    %p52 = scmp.ne.s32.totalorder %s38, %s39
    %p53 = scmp.eq.s32.totalorder %s17, 5
    %p54 = por %p52, %p53
    %p56 = scmp.ne.s32.totalorder %s39, %s55
    %p57 = scmp.eq.s32.totalorder %s17, 0
    %p58 = por %p56, %p57
    %s60 = sadd.s32 %s59, 1
    %p63 = scmp.eq.s32.totalorder %s11, 5
    %p64 = scmp.ne.s32.totalorder %s59, %s61
    %p65 = scmp.eq.s32.totalorder %s11, 0
    %p66 = por %p64, %p65
    %p67 = scmp.ne.s32.totalorder %s59, %s61
    %p68 = scmp.eq.s32.totalorder %s16, 5
    %p69 = por %p67, %p68
    %p70 = scmp.ne.s32.totalorder %s61, %s62
    %p71 = scmp.eq.s32.totalorder %s16, 0
    %p72 = por %p70, %p71
    %p73 = scmp.ne.s32.totalorder %s61, %s62
    %p74 = scmp.eq.s32.totalorder %s17, 5
    %p75 = por %p73, %p74
    %p77 = scmp.ne.s32.totalorder %s62, %s76
    %p78 = scmp.eq.s32.totalorder %s17, 0
    %p79 = por %p77, %p78
    %s81 = sadd.s32 %s80, 1
    %p84 = scmp.eq.s32.totalorder %s11, 5
    %p85 = scmp.ne.s32.totalorder %s80, %s82
    %p86 = scmp.eq.s32.totalorder %s11, 0
    %p87 = por %p85, %p86
    %p88 = scmp.ne.s32.totalorder %s80, %s82
    %p89 = scmp.eq.s32.totalorder %s16, 5
    %p90 = por %p88, %p89
    %p91 = scmp.ne.s32.totalorder %s82, %s83
    %p92 = scmp.eq.s32.totalorder %s16, 0
    %p93 = por %p91, %p92
    %p94 = scmp.ne.s32.totalorder %s82, %s83
    %p95 = scmp.eq.s32.totalorder %s17, 5
    %p96 = por %p94, %p95
    %p98 = scmp.ne.s32.totalorder %s83, %s97
    %p99 = scmp.eq.s32.totalorder %s17, 0
    %p100 = por %p98, %p99
    %s102 = sadd.s32 %s101, 1
    %p105 = scmp.eq.s32.totalorder %s11, 5
    %p106 = scmp.ne.s32.totalorder %s101, %s103
    %p107 = scmp.eq.s32.totalorder %s11, 0
    %p108 = por %p106, %p107
    %p109 = scmp.ne.s32.totalorder %s101, %s103
    %p110 = scmp.eq.s32.totalorder %s16, 5
    %p111 = por %p109, %p110
    %p112 = scmp.ne.s32.totalorder %s103, %s104
    %p113 = scmp.eq.s32.totalorder %s16, 0
    %p114 = por %p112, %p113
    %p115 = scmp.ne.s32.totalorder %s103, %s104
    %p116 = scmp.eq.s32.totalorder %s17, 5
    %p117 = por %p115, %p116
    %p119 = scmp.ne.s32.totalorder %s104, %s118
    %p120 = scmp.eq.s32.totalorder %s17, 0
    %p121 = por %p119, %p120
    %s123 = sadd.s32 %s122, 1
    %p126 = scmp.eq.s32.totalorder %s11, 5
    %p127 = scmp.ne.s32.totalorder %s122, %s124
    %p128 = scmp.eq.s32.totalorder %s11, 0
    %p129 = por %p127, %p128
    %p130 = scmp.ne.s32.totalorder %s122, %s124
    %p131 = scmp.eq.s32.totalorder %s16, 5
    %p132 = por %p130, %p131
    %p133 = scmp.ne.s32.totalorder %s124, %s125
    %p134 = scmp.eq.s32.totalorder %s16, 0
    %p135 = por %p133, %p134
    %p136 = scmp.ne.s32.totalorder %s124, %s125
    %p137 = scmp.eq.s32.totalorder %s17, 5
    %p138 = por %p136, %p137
    %p140 = scmp.ne.s32.totalorder %s125, %s139
    %p141 = scmp.eq.s32.totalorder %s17, 0
    %p142 = por %p140, %p141
    %s143 = ssub.s32 %s18, %s30
    %s144 = ssub.s32 %s19, %s26
    %s145 = sor.u32 %s143, %s144
    %p146 = scmp.eq.s32.totalorder %s145, 0
    %s148 = sadd.s32 %s147, 1
    %s149 = scalar_select %p146, %s147, %s148
    %p152 = pneg %p146
    %p153 = scmp.eq.s32.totalorder %s11, 5
    %p154 = por %p152, %p153
    %p155 = scmp.ne.s32.totalorder %s147, %s150
    %p156 = scmp.eq.s32.totalorder %s11, 0
    %p157 = por %p155, %p156
    %p158 = scmp.ne.s32.totalorder %s147, %s150
    %p159 = scmp.eq.s32.totalorder %s16, 5
    %p160 = por %p158, %p159
    %p161 = scmp.ne.s32.totalorder %s150, %s151
    %p162 = scmp.eq.s32.totalorder %s16, 0
    %p163 = por %p161, %p162
    %p164 = scmp.ne.s32.totalorder %s150, %s151
    %p165 = scmp.eq.s32.totalorder %s17, 5
    %p166 = por %p164, %p165
    %p168 = scmp.ne.s32.totalorder %s151, %s167
    %p169 = scmp.eq.s32.totalorder %s17, 0
    %p170 = por %p168, %p169
    %p171 = scmp.le.s32.totalorder 1, %s11
    %p172 = scmp.lt.s32.totalorder %s11, 7
    %p173 = pnand %p171, %p172
    %p174 = pneg %p173
    // Predicated region
    $region9: #{causal_cnn.6} parent=5 // pred_check
      _
    $region10: #{causal_cnn.6} parent=5 // pred_check_branch
      %176 = sbr.rel (%p173) target = $region12
    $region11: #{causal_cnn.6} parent=5 // pred_region
      %s177 = ssub.s32 %s11, 1
      // Predicated region
      $region13: #{causal_cnn.6} parent=11 // pred_check
        %p178 = pneg %p72
      $region14: #{causal_cnn.6} parent=11 // pred_check_branch
        %180 = sbr.rel (%p178) target = $region16
      $region15: #{causal_cnn.6} parent=11 // pred_region
        _
      $region16: #{causal_cnn.6} parent=11 // pred_fallthru
        _
      // Predicated region
      $region17: #{causal_cnn.6} parent=11 // pred_check
        %p181 = pneg %p93
      $region18: #{causal_cnn.6} parent=11 // pred_check_branch
        %183 = sbr.rel (%p181) target = $region20
      $region19: #{causal_cnn.6} parent=11 // pred_region
        _
      $region20: #{causal_cnn.6} parent=11 // pred_fallthru
        _
      // Predicated region
      $region21: #{causal_cnn.6} parent=11 // pred_check
        %p184 = pneg %p114
      $region22: #{causal_cnn.6} parent=11 // pred_check_branch
        %186 = sbr.rel (%p184) target = $region24
      $region23: #{causal_cnn.6} parent=11 // pred_region
        _
      $region24: #{causal_cnn.6} parent=11 // pred_fallthru
        _
      // Predicated region
      $region25: #{causal_cnn.6} parent=11 // pred_check
        %p187 = pneg %p135
      $region26: #{causal_cnn.6} parent=11 // pred_check_branch
        %189 = sbr.rel (%p187) target = $region28
      $region27: #{causal_cnn.6} parent=11 // pred_region
        _
      $region28: #{causal_cnn.6} parent=11 // pred_fallthru
        _
    $region12: #{causal_cnn.6} parent=5 // pred_fallthru
      _
    %p190 = scmp.lt.s32.totalorder %s11, 6
    // Predicated region
    $region29: #{causal_cnn.6} parent=5 // pred_check
      %p191 = pneg %p190
    $region30: #{causal_cnn.6} parent=5 // pred_check_branch
      %193 = sbr.rel (%p191) target = $region32
    $region31: #{causal_cnn.6} parent=5 // pred_region
      // Predicated region
      $region33: #{causal_cnn.6} parent=31 // pred_check
        %p194 = pneg %p45
      $region34: #{causal_cnn.6} parent=31 // pred_check_branch
        %196 = sbr.rel (%p194) target = $region36
      $region35: #{causal_cnn.6} parent=31 // pred_region
        %s197 = smul.u32 2, %s19
        %p198 = scmp.lt.s32.totalorder %s18, 1
        %s199 = scalar_select %p198, %s18, 1
        %p200 = scmp.lt.s32.totalorder %s197, 5
        %s201 = scalar_select %p200, %s197, 5
        %s202 = smul.addr %s199, 6
        %s203 = sadd.s32 %s201, %s202
        %s204 = smul.addr %s203, 8
        %s205 = scalar_lea.vmem %s0, %s204
        %s206 = smul.u32 2, %s19
      $region36: #{causal_cnn.6} parent=31 // pred_fallthru
        _
    $region32: #{causal_cnn.6} parent=5 // pred_fallthru
      _
    %p207 = scmp.le.s32.totalorder 1, %s11
    %p208 = scmp.lt.s32.totalorder %s11, 7
    %p209 = pnand %p207, %p208
    %p210 = pneg %p209
    // Predicated region
    $region37: #{causal_cnn.6} parent=5 // pred_check
      _
    $region38: #{causal_cnn.6} parent=5 // pred_check_branch
      %212 = sbr.rel (%p209) target = $region40
    $region39: #{causal_cnn.6} parent=5 // pred_region
      %s213 = ssub.s32 %s11, 1
      %s214 = smul.u32 2, %s21
      %p215 = scmp.lt.s32.totalorder %s20, 1
      %s216 = scalar_select %p215, %s20, 1
      %p217 = scmp.lt.s32.totalorder %s214, 5
      %s218 = scalar_select %p217, %s214, 5
      %s219 = smul.addr %s216, 6
      %s220 = sadd.s32 %s218, %s219
      %s221 = smul.addr %s220, 8
      %s222 = scalar_lea.vmem %s0, %s221
      %p223 = pneg %p51
      %p224 = pneg %p48
      %p225 = pneg %p72
      %p226 = pneg %p69
      %p227 = pneg %p93
      %p228 = pneg %p90
      %p229 = pneg %p114
      %p230 = pneg %p111
      %p231 = pneg %p135
      %p232 = pneg %p132
      %p233 = pneg %p163
      %p234 = pneg %p160
      %s235 = smul.u32 2, %s21
      %p236 = scmp.lt.s32.totalorder %s20, 1
      %s237 = scalar_select %p236, %s20, 1
      %p238 = scmp.lt.s32.totalorder %s235, 5
      %s239 = scalar_select %p238, %s235, 5
      %s240 = smul.addr %s237, 6
      %s241 = sadd.s32 %s239, %s240
      %s242 = smul.addr %s241, 8
      %s243 = scalar_lea.vmem %s5, %s242
      %s244 = smul.u32 2, %s21
      %p245 = scmp.lt.s32.totalorder %s20, 1
      %s246 = scalar_select %p245, %s20, 1
      %p247 = scmp.lt.s32.totalorder %s244, 5
      %s248 = scalar_select %p247, %s244, 5
      %s249 = smul.addr %s246, 6
      %s250 = sadd.s32 %s248, %s249
      %s251 = smul.addr %s250, 8
      %s252 = scalar_lea.vmem %s0, %s251
      %s253 = smul.u32 2, %s21
      %s254 = smul.u32 2, %s21
      %p255 = scmp.lt.s32.totalorder %s20, 1
      %s256 = scalar_select %p255, %s20, 1
      %p257 = scmp.lt.s32.totalorder %s254, 5
      %s258 = scalar_select %p257, %s254, 5
      %s259 = smul.addr %s256, 6
      %s260 = sadd.s32 %s258, %s259
      %s261 = smul.addr %s260, 8
      %s262 = scalar_lea.vmem %s5, %s261
      %s263 = smul.u32 2, %s21
      %v264 = vld [vmem:[%s252] sm:$0xff]
      %v265 = vld [vmem:[%s252 + $0x8] sm:$0xff]
      %p266 = scmp.eq.s32.totalorder %s21, 0
      // Predicated region
      $region41: #{causal_cnn.6} parent=39 // pred_check
        %p267 = pneg %p266
      $region42: #{causal_cnn.6} parent=39 // pred_check_branch
        %269 = sbr.rel (%p267) target = $region44
      $region43: #{causal_cnn.6} parent=39 // pred_region
        %270 = vst [vmem:[#allocation2] sm:$0xff] 0.0
        %271 = vst [vmem:[#allocation2 + $0x8] sm:$0xff] 0.0
      $region44: #{causal_cnn.6} parent=39 // pred_fallthru
        _
      %v272 = vld [vmem:[#allocation2] sm:$0xff]
      %v273 = vld [vmem:[#allocation2 + $0x8] sm:$0xff]
      %274 = vst [vmem:[#allocation2] sm:$0xff] %v264
      %275 = vst [vmem:[#allocation2 + $0x8] sm:$0xff] %v265
      %v276 = vld [vmem:[%s1] sm:$0xff]
      %v277 = vld [vmem:[%s1 + $0x8] sm:$0xff]
      %v278 = vld [vmem:[%s1 + $0x10] sm:$0xff]
      %v279 = vld [vmem:[%s1 + $0x18] sm:$0xff]
      %v280 = vld [vmem:[%s1 + $0x20] sm:$0xff]
      %v281 = vld [vmem:[%s1 + $0x28] sm:$0xff]
      %v282 = vld [vmem:[%s1 + $0x30] sm:$0xff]
      %v283 = vld [vmem:[%s1 + $0x38] sm:$0xff]
      %v284 = vld [vmem:[%s1 + $0x40] sm:$0xff]
      %v285 = vld [vmem:[%s1 + $0x48] sm:$0xff]
      %v286 = vld [vmem:[%s1 + $0x50] sm:$0xff]
      %v287 = vld [vmem:[%s1 + $0x58] sm:$0xff]
      %v288 = vld [vmem:[%s1 + $0x60] sm:$0xff]
      %v289 = vld [vmem:[%s1 + $0x68] sm:$0xff]
      %v290 = vld [vmem:[%s1 + $0x70] sm:$0xff]
      %v291 = vld [vmem:[%s1 + $0x78] sm:$0xff]
      %s292 = scalar_lea.vmem %s1, 128
      %v293 = vld [vmem:[%s292] sm:$0xff]
      %v294 = vld [vmem:[%s292 + $0x8] sm:$0xff]
      %v295 = vld [vmem:[%s292 + $0x10] sm:$0xff]
      %v296 = vld [vmem:[%s292 + $0x18] sm:$0xff]
      %v297 = vld [vmem:[%s292 + $0x20] sm:$0xff]
      %v298 = vld [vmem:[%s292 + $0x28] sm:$0xff]
      %v299 = vld [vmem:[%s292 + $0x30] sm:$0xff]
      %v300 = vld [vmem:[%s292 + $0x38] sm:$0xff]
      %v301 = vld [vmem:[%s292 + $0x40] sm:$0xff]
      %v302 = vld [vmem:[%s292 + $0x48] sm:$0xff]
      %v303 = vld [vmem:[%s292 + $0x50] sm:$0xff]
      %v304 = vld [vmem:[%s292 + $0x58] sm:$0xff]
      %v305 = vld [vmem:[%s292 + $0x60] sm:$0xff]
      %v306 = vld [vmem:[%s292 + $0x68] sm:$0xff]
      %v307 = vld [vmem:[%s292 + $0x70] sm:$0xff]
      %v308 = vld [vmem:[%s292 + $0x78] sm:$0xff]
      %vm313 = vcmask 1043456
      %v314 = vrot.slane %v272, 4
      %v315 = vrot.slane %v273, 4
      %v316 = vsel %vm313, %v314, %v315
      %v317 = vrot.slane %v264, 4
      %v318 = vsel %vm313, %v315, %v317
      %v319 = vrot.slane %v265, 4
      %v320 = vsel %vm313, %v317, %v319
      %324 = vmatprep.subr.mxu0 0.0
      %325 = vmatpush1.msra.mxu0 %v308
      %326 = vmatprep.subr.mxu0 0.0
      %327 = vmatpush1.msra.mxu0 %v307
      %328 = vmatprep.subr.mxu0 0.0
      %329 = vmatpush1.msra.mxu0 %v306
      %330 = vmatprep.subr.mxu0 0.0
      %331 = vmatpush1.msra.mxu0 %v305
      %332 = vmatprep.subr.mxu0 0.0
      %333 = vmatpush1.msra.mxu0 %v304
      %334 = vmatprep.subr.mxu0 0.0
      %335 = vmatpush1.msra.mxu0 %v303
      %336 = vmatprep.subr.mxu0 0.0
      %337 = vmatpush1.msra.mxu0 %v302
      %338 = vmatprep.subr.mxu0 0.0
      %339 = vmatpush1.msra.mxu0 %v301
      %340 = vmatprep.subr.mxu0 0.0
      %341 = vmatpush1.msra.mxu0 %v300
      %342 = vmatprep.subr.mxu0 0.0
      %343 = vmatpush1.msra.mxu0 %v299
      %344 = vmatprep.subr.mxu0 0.0
      %345 = vmatpush1.msra.mxu0 %v298
      %346 = vmatprep.subr.mxu0 0.0
      %347 = vmatpush1.msra.mxu0 %v297
      %348 = vmatprep.subr.mxu0 0.0
      %349 = vmatpush1.msra.mxu0 %v296
      %350 = vmatprep.subr.mxu0 0.0
      %351 = vmatpush1.msra.mxu0 %v295
      %352 = vmatprep.subr.mxu0 0.0
      %353 = vmatpush1.msra.mxu0 %v294
      %354 = vmatprep.subr.mxu0 0.0
      %355 = vmatpush1.msra.mxu0 %v293
      %356 = vmatprep.subr.mxu0 0.0
      %357 = vmatpush2.msra.mxu0 0.0
      %358 = vmatprep.subr.mxu0 0.0
      %359 = vmatpush2.msra.mxu0 0.0
      %360 = vmatprep.subr.mxu0 0.0
      %361 = vmatpush2.msra.mxu0 0.0
      %362 = vmatprep.subr.mxu0 0.0
      %363 = vmatpush2.msra.mxu0 0.0
      %364 = vmatprep.subr.mxu0 0.0
      %365 = vmatpush2.msra.mxu0 0.0
      %366 = vmatprep.subr.mxu0 0.0
      %367 = vmatpush2.msra.mxu0 0.0
      %368 = vmatprep.subr.mxu0 0.0
      %369 = vmatpush2.msra.mxu0 0.0
      %370 = vmatprep.subr.mxu0 0.0
      %371 = vmatpush2.msra.mxu0 0.0
      %372 = vmatprep.subr.mxu0 0.0
      %373 = vmatpush2.msra.mxu0 0.0
      %374 = vmatprep.subr.mxu0 0.0
      %375 = vmatpush2.msra.mxu0 0.0
      %376 = vmatprep.subr.mxu0 0.0
      %377 = vmatpush2.msra.mxu0 0.0
      %378 = vmatprep.subr.mxu0 0.0
      %379 = vmatpush2.msra.mxu0 0.0
      %380 = vmatprep.subr.mxu0 0.0
      %381 = vmatpush2.msra.mxu0 0.0
      %382 = vmatprep.subr.mxu0 0.0
      %383 = vmatpush2.msra.mxu0 0.0
      %384 = vmatprep.subr.mxu0 0.0
      %385 = vmatpush2.msra.mxu0 0.0
      %386 = vmatprep.subr.mxu0 0.0
      %387 = vmatpush2.msra.mxu0 0.0
      %388 = vmatprep.mubr.f32.mxu0 0.0
      %389 = vmatmul.mubr.f32.gmra.mxu0 %v316
      %v390 = vpop.f32.mrf.mxu0
      %v391 = vadd.f32 0.0, %v390
      %v392 = vpop.f32.mrf.mxu0
      %393 = vmatprep.mubr.f32.mxu0 0.0
      %394 = vmatmul.mubr.f32.gmra.mxu0 %v318
      %v395 = vpop.f32.mrf.mxu0
      %v396 = vadd.f32 0.0, %v395
      %v397 = vpop.f32.mrf.mxu0
      %398 = vmatprep.mubr.f32.mxu0 0.0
      %399 = vmatmul.mubr.f32.gmra.mxu0 %v320
      %v400 = vpop.f32.mrf.mxu0
      %v401 = vadd.f32 0.0, %v400
      %v402 = vpop.f32.mrf.mxu0
      %403 = vdwg.mxu0
      %404 = vmatprep.subr.mxu0 0.0
      %405 = vmatpush1.msra.mxu0 %v291
      %406 = vmatprep.subr.mxu0 0.0
      %407 = vmatpush1.msra.mxu0 %v290
      %408 = vmatprep.subr.mxu0 0.0
      %409 = vmatpush1.msra.mxu0 %v289
      %410 = vmatprep.subr.mxu0 0.0
      %411 = vmatpush1.msra.mxu0 %v288
      %412 = vmatprep.subr.mxu0 0.0
      %413 = vmatpush1.msra.mxu0 %v287
      %414 = vmatprep.subr.mxu0 0.0
      %415 = vmatpush1.msra.mxu0 %v286
      %416 = vmatprep.subr.mxu0 0.0
      %417 = vmatpush1.msra.mxu0 %v285
      %418 = vmatprep.subr.mxu0 0.0
      %419 = vmatpush1.msra.mxu0 %v284
      %420 = vmatprep.subr.mxu0 0.0
      %421 = vmatpush1.msra.mxu0 %v283
      %422 = vmatprep.subr.mxu0 0.0
      %423 = vmatpush1.msra.mxu0 %v282
      %424 = vmatprep.subr.mxu0 0.0
      %425 = vmatpush1.msra.mxu0 %v281
      %426 = vmatprep.subr.mxu0 0.0
      %427 = vmatpush1.msra.mxu0 %v280
      %428 = vmatprep.subr.mxu0 0.0
      %429 = vmatpush1.msra.mxu0 %v279
      %430 = vmatprep.subr.mxu0 0.0
      %431 = vmatpush1.msra.mxu0 %v278
      %432 = vmatprep.subr.mxu0 0.0
      %433 = vmatpush1.msra.mxu0 %v277
      %434 = vmatprep.subr.mxu0 0.0
      %435 = vmatpush1.msra.mxu0 %v276
      %436 = vmatprep.subr.mxu0 0.0
      %437 = vmatpush2.msra.mxu0 0.0
      %438 = vmatprep.subr.mxu0 0.0
      %439 = vmatpush2.msra.mxu0 0.0
      %440 = vmatprep.subr.mxu0 0.0
      %441 = vmatpush2.msra.mxu0 0.0
      %442 = vmatprep.subr.mxu0 0.0
      %443 = vmatpush2.msra.mxu0 0.0
      %444 = vmatprep.subr.mxu0 0.0
      %445 = vmatpush2.msra.mxu0 0.0
      %446 = vmatprep.subr.mxu0 0.0
      %447 = vmatpush2.msra.mxu0 0.0
      %448 = vmatprep.subr.mxu0 0.0
      %449 = vmatpush2.msra.mxu0 0.0
      %450 = vmatprep.subr.mxu0 0.0
      %451 = vmatpush2.msra.mxu0 0.0
      %452 = vmatprep.subr.mxu0 0.0
      %453 = vmatpush2.msra.mxu0 0.0
      %454 = vmatprep.subr.mxu0 0.0
      %455 = vmatpush2.msra.mxu0 0.0
      %456 = vmatprep.subr.mxu0 0.0
      %457 = vmatpush2.msra.mxu0 0.0
      %458 = vmatprep.subr.mxu0 0.0
      %459 = vmatpush2.msra.mxu0 0.0
      %460 = vmatprep.subr.mxu0 0.0
      %461 = vmatpush2.msra.mxu0 0.0
      %462 = vmatprep.subr.mxu0 0.0
      %463 = vmatpush2.msra.mxu0 0.0
      %464 = vmatprep.subr.mxu0 0.0
      %465 = vmatpush2.msra.mxu0 0.0
      %466 = vmatprep.subr.mxu0 0.0
      %467 = vmatpush2.msra.mxu0 0.0
      %468 = vmatprep.mubr.f32.mxu0 0.0
      %469 = vmatmul.mubr.f32.gmra.mxu0 %v272
      %v470 = vpop.f32.mrf.mxu0
      %v471 = vadd.f32 %v391, %v470
      %v472 = vpop.f32.mrf.mxu0
      %473 = vmatprep.mubr.f32.mxu0 0.0
      %474 = vmatmul.mubr.f32.gmra.mxu0 %v273
      %v475 = vpop.f32.mrf.mxu0
      %v476 = vadd.f32 %v396, %v475
      %v477 = vpop.f32.mrf.mxu0
      %478 = vmatprep.mubr.f32.mxu0 0.0
      %479 = vmatmul.mubr.f32.gmra.mxu0 %v264
      %v480 = vpop.f32.mrf.mxu0
      %v481 = vadd.f32 %v401, %v480
      %v482 = vpop.f32.mrf.mxu0
      %483 = vdwg.mxu0
      %s484 = scalar_lea.vmem %s1, 256
      %v485 = vld [vmem:[%s484] sm:$0xff]
      %v486 = vld [vmem:[%s484 + $0x8] sm:$0xff]
      %v487 = vld [vmem:[%s484 + $0x10] sm:$0xff]
      %v488 = vld [vmem:[%s484 + $0x18] sm:$0xff]
      %v489 = vld [vmem:[%s484 + $0x20] sm:$0xff]
      %v490 = vld [vmem:[%s484 + $0x28] sm:$0xff]
      %v491 = vld [vmem:[%s484 + $0x30] sm:$0xff]
      %v492 = vld [vmem:[%s484 + $0x38] sm:$0xff]
      %v493 = vld [vmem:[%s484 + $0x40] sm:$0xff]
      %v494 = vld [vmem:[%s484 + $0x48] sm:$0xff]
      %v495 = vld [vmem:[%s484 + $0x50] sm:$0xff]
      %v496 = vld [vmem:[%s484 + $0x58] sm:$0xff]
      %v497 = vld [vmem:[%s484 + $0x60] sm:$0xff]
      %v498 = vld [vmem:[%s484 + $0x68] sm:$0xff]
      %v499 = vld [vmem:[%s484 + $0x70] sm:$0xff]
      %v500 = vld [vmem:[%s484 + $0x78] sm:$0xff]
      %501 = vmatprep.subr.mxu0 0.0
      %502 = vmatpush1.msra.mxu0 %v500
      %503 = vmatprep.subr.mxu0 0.0
      %504 = vmatpush1.msra.mxu0 %v499
      %505 = vmatprep.subr.mxu0 0.0
      %506 = vmatpush1.msra.mxu0 %v498
      %507 = vmatprep.subr.mxu0 0.0
      %508 = vmatpush1.msra.mxu0 %v497
      %509 = vmatprep.subr.mxu0 0.0
      %510 = vmatpush1.msra.mxu0 %v496
      %511 = vmatprep.subr.mxu0 0.0
      %512 = vmatpush1.msra.mxu0 %v495
      %513 = vmatprep.subr.mxu0 0.0
      %514 = vmatpush1.msra.mxu0 %v494
      %515 = vmatprep.subr.mxu0 0.0
      %516 = vmatpush1.msra.mxu0 %v493
      %517 = vmatprep.subr.mxu0 0.0
      %518 = vmatpush1.msra.mxu0 %v492
      %519 = vmatprep.subr.mxu0 0.0
      %520 = vmatpush1.msra.mxu0 %v491
      %521 = vmatprep.subr.mxu0 0.0
      %522 = vmatpush1.msra.mxu0 %v490
      %523 = vmatprep.subr.mxu0 0.0
      %524 = vmatpush1.msra.mxu0 %v489
      %525 = vmatprep.subr.mxu0 0.0
      %526 = vmatpush1.msra.mxu0 %v488
      %527 = vmatprep.subr.mxu0 0.0
      %528 = vmatpush1.msra.mxu0 %v487
      %529 = vmatprep.subr.mxu0 0.0
      %530 = vmatpush1.msra.mxu0 %v486
      %531 = vmatprep.subr.mxu0 0.0
      %532 = vmatpush1.msra.mxu0 %v485
      %533 = vmatprep.subr.mxu0 0.0
      %534 = vmatpush2.msra.mxu0 0.0
      %535 = vmatprep.subr.mxu0 0.0
      %536 = vmatpush2.msra.mxu0 0.0
      %537 = vmatprep.subr.mxu0 0.0
      %538 = vmatpush2.msra.mxu0 0.0
      %539 = vmatprep.subr.mxu0 0.0
      %540 = vmatpush2.msra.mxu0 0.0
      %541 = vmatprep.subr.mxu0 0.0
      %542 = vmatpush2.msra.mxu0 0.0
      %543 = vmatprep.subr.mxu0 0.0
      %544 = vmatpush2.msra.mxu0 0.0
      %545 = vmatprep.subr.mxu0 0.0
      %546 = vmatpush2.msra.mxu0 0.0
      %547 = vmatprep.subr.mxu0 0.0
      %548 = vmatpush2.msra.mxu0 0.0
      %549 = vmatprep.subr.mxu0 0.0
      %550 = vmatpush2.msra.mxu0 0.0
      %551 = vmatprep.subr.mxu0 0.0
      %552 = vmatpush2.msra.mxu0 0.0
      %553 = vmatprep.subr.mxu0 0.0
      %554 = vmatpush2.msra.mxu0 0.0
      %555 = vmatprep.subr.mxu0 0.0
      %556 = vmatpush2.msra.mxu0 0.0
      %557 = vmatprep.subr.mxu0 0.0
      %558 = vmatpush2.msra.mxu0 0.0
      %559 = vmatprep.subr.mxu0 0.0
      %560 = vmatpush2.msra.mxu0 0.0
      %561 = vmatprep.subr.mxu0 0.0
      %562 = vmatpush2.msra.mxu0 0.0
      %563 = vmatprep.subr.mxu0 0.0
      %564 = vmatpush2.msra.mxu0 0.0
      %565 = vmatprep.mubr.f32.mxu0 0.0
      %566 = vmatmul.mubr.f32.gmra.mxu0 %v273
      %v567 = vpop.f32.mrf.mxu0
      %v568 = vadd.f32 0.0, %v567
      %v569 = vpop.f32.mrf.mxu0
      %570 = vmatprep.mubr.f32.mxu0 0.0
      %571 = vmatmul.mubr.f32.gmra.mxu0 %v264
      %v572 = vpop.f32.mrf.mxu0
      %v573 = vadd.f32 0.0, %v572
      %v574 = vpop.f32.mrf.mxu0
      %575 = vmatprep.mubr.f32.mxu0 0.0
      %576 = vmatmul.mubr.f32.gmra.mxu0 %v265
      %v577 = vpop.f32.mrf.mxu0
      %v578 = vadd.f32 0.0, %v577
      %v579 = vpop.f32.mrf.mxu0
      %580 = vdwg.mxu0
      %v581 = vadd.f32 %v471, %v568
      %v582 = vadd.f32 %v476, %v573
      %v583 = vadd.f32 %v481, %v578
      %v584 = vld [vmem:[%s2] sm:$0x1]
      %v586 = vlaneseq
      %v587 = vshrl.u32 %v586, 7
      %v588 = vsub.s32 0, %v587
      %v589 = vrot.slane %v584, %v588
      %v591 = vadd.f32 %v581, %v589
      %v592 = vadd.f32 %v582, %v589
      %v593 = vadd.f32 %v583, %v589
      %v594 = vmul.f32 %v591, 0.01
      %v595 = vmul.f32 %v592, 0.01
      %v596 = vmul.f32 %v593, 0.01
      %v597 = vmax.f32 %v591, %v594
      %v598 = vmax.f32 %v592, %v595
      %v599 = vmax.f32 %v593, %v596
      %v600 = vlaneseq
      %v601 = vshrl.u32 %v600, 7
      %v602 = vadd.s32 %v601, 8
      %v603 = vadd.s32 %v601, 16
      %s604 = smul.u32 %s21, 16
      %v605 = vstv %s604
      %v606 = vadd.s32 %v601, %v605
      %v607 = vadd.s32 %v602, %v605
      %v608 = vadd.s32 %v603, %v605
      %vm609 = vcmp.ge.s32.totalorder %v606, 8
      %vm610 = vcmp.ge.s32.totalorder %v607, 8
      %vm611 = vcmp.ge.s32.totalorder %v608, 8
      %v612 = vsel %vm609, 1, 0
      %v613 = vsel %vm610, 1, 0
      %v614 = vsel %vm611, 1, 0
      %vm615 = vcmp.eq.s32.totalorder %v612, 1
      %vm616 = vcmp.eq.s32.totalorder %v613, 1
      %vm617 = vcmp.eq.s32.totalorder %v614, 1
      %v618 = vsel %vm615, %v597, 0.0
      %v619 = vsel %vm616, %v598, 0.0
      %v620 = vsel %vm617, %v599, 0.0
      %v621 = vld [vmem:[%s3] sm:$0xff]
      %v622 = vld [vmem:[%s3 + $0x8] sm:$0xff]
      %v623 = vld [vmem:[%s3 + $0x10] sm:$0xff]
      %v624 = vld [vmem:[%s3 + $0x18] sm:$0xff]
      %v625 = vld [vmem:[%s3 + $0x20] sm:$0xff]
      %v626 = vld [vmem:[%s3 + $0x28] sm:$0xff]
      %v627 = vld [vmem:[%s3 + $0x30] sm:$0xff]
      %v628 = vld [vmem:[%s3 + $0x38] sm:$0xff]
      %v629 = vld [vmem:[%s3 + $0x40] sm:$0xff]
      %v630 = vld [vmem:[%s3 + $0x48] sm:$0xff]
      %v631 = vld [vmem:[%s3 + $0x50] sm:$0xff]
      %v632 = vld [vmem:[%s3 + $0x58] sm:$0xff]
      %v633 = vld [vmem:[%s3 + $0x60] sm:$0xff]
      %v634 = vld [vmem:[%s3 + $0x68] sm:$0xff]
      %v635 = vld [vmem:[%s3 + $0x70] sm:$0xff]
      %v636 = vld [vmem:[%s3 + $0x78] sm:$0xff]
      %s637 = scalar_lea.vmem %s3, 128
      %v638 = vld [vmem:[%s637] sm:$0xff]
      %v639 = vld [vmem:[%s637 + $0x8] sm:$0xff]
      %v640 = vld [vmem:[%s637 + $0x10] sm:$0xff]
      %v641 = vld [vmem:[%s637 + $0x18] sm:$0xff]
      %v642 = vld [vmem:[%s637 + $0x20] sm:$0xff]
      %v643 = vld [vmem:[%s637 + $0x28] sm:$0xff]
      %v644 = vld [vmem:[%s637 + $0x30] sm:$0xff]
      %v645 = vld [vmem:[%s637 + $0x38] sm:$0xff]
      %v646 = vld [vmem:[%s637 + $0x40] sm:$0xff]
      %v647 = vld [vmem:[%s637 + $0x48] sm:$0xff]
      %v648 = vld [vmem:[%s637 + $0x50] sm:$0xff]
      %v649 = vld [vmem:[%s637 + $0x58] sm:$0xff]
      %v650 = vld [vmem:[%s637 + $0x60] sm:$0xff]
      %v651 = vld [vmem:[%s637 + $0x68] sm:$0xff]
      %v652 = vld [vmem:[%s637 + $0x70] sm:$0xff]
      %v653 = vld [vmem:[%s637 + $0x78] sm:$0xff]
      %v657 = vrot.slane %v618, 4
      %v658 = vrot.slane %v619, 4
      %v659 = vsel %vm313, %v657, %v658
      %v660 = vrot.slane %v620, 4
      %v661 = vsel %vm313, %v658, %v660
      %664 = vmatprep.subr.mxu0 0.0
      %665 = vmatpush1.msra.mxu0 %v653
      %666 = vmatprep.subr.mxu0 0.0
      %667 = vmatpush1.msra.mxu0 %v652
      %668 = vmatprep.subr.mxu0 0.0
      %669 = vmatpush1.msra.mxu0 %v651
      %670 = vmatprep.subr.mxu0 0.0
      %671 = vmatpush1.msra.mxu0 %v650
      %672 = vmatprep.subr.mxu0 0.0
      %673 = vmatpush1.msra.mxu0 %v649
      %674 = vmatprep.subr.mxu0 0.0
      %675 = vmatpush1.msra.mxu0 %v648
      %676 = vmatprep.subr.mxu0 0.0
      %677 = vmatpush1.msra.mxu0 %v647
      %678 = vmatprep.subr.mxu0 0.0
      %679 = vmatpush1.msra.mxu0 %v646
      %680 = vmatprep.subr.mxu0 0.0
      %681 = vmatpush1.msra.mxu0 %v645
      %682 = vmatprep.subr.mxu0 0.0
      %683 = vmatpush1.msra.mxu0 %v644
      %684 = vmatprep.subr.mxu0 0.0
      %685 = vmatpush1.msra.mxu0 %v643
      %686 = vmatprep.subr.mxu0 0.0
      %687 = vmatpush1.msra.mxu0 %v642
      %688 = vmatprep.subr.mxu0 0.0
      %689 = vmatpush1.msra.mxu0 %v641
      %690 = vmatprep.subr.mxu0 0.0
      %691 = vmatpush1.msra.mxu0 %v640
      %692 = vmatprep.subr.mxu0 0.0
      %693 = vmatpush1.msra.mxu0 %v639
      %694 = vmatprep.subr.mxu0 0.0
      %695 = vmatpush1.msra.mxu0 %v638
      %696 = vmatprep.subr.mxu0 0.0
      %697 = vmatpush2.msra.mxu0 0.0
      %698 = vmatprep.subr.mxu0 0.0
      %699 = vmatpush2.msra.mxu0 0.0
      %700 = vmatprep.subr.mxu0 0.0
      %701 = vmatpush2.msra.mxu0 0.0
      %702 = vmatprep.subr.mxu0 0.0
      %703 = vmatpush2.msra.mxu0 0.0
      %704 = vmatprep.subr.mxu0 0.0
      %705 = vmatpush2.msra.mxu0 0.0
      %706 = vmatprep.subr.mxu0 0.0
      %707 = vmatpush2.msra.mxu0 0.0
      %708 = vmatprep.subr.mxu0 0.0
      %709 = vmatpush2.msra.mxu0 0.0
      %710 = vmatprep.subr.mxu0 0.0
      %711 = vmatpush2.msra.mxu0 0.0
      %712 = vmatprep.subr.mxu0 0.0
      %713 = vmatpush2.msra.mxu0 0.0
      %714 = vmatprep.subr.mxu0 0.0
      %715 = vmatpush2.msra.mxu0 0.0
      %716 = vmatprep.subr.mxu0 0.0
      %717 = vmatpush2.msra.mxu0 0.0
      %718 = vmatprep.subr.mxu0 0.0
      %719 = vmatpush2.msra.mxu0 0.0
      %720 = vmatprep.subr.mxu0 0.0
      %721 = vmatpush2.msra.mxu0 0.0
      %722 = vmatprep.subr.mxu0 0.0
      %723 = vmatpush2.msra.mxu0 0.0
      %724 = vmatprep.subr.mxu0 0.0
      %725 = vmatpush2.msra.mxu0 0.0
      %726 = vmatprep.subr.mxu0 0.0
      %727 = vmatpush2.msra.mxu0 0.0
      %728 = vmatprep.mubr.f32.mxu0 0.0
      %729 = vmatmul.mubr.f32.gmra.mxu0 %v659
      %v730 = vpop.f32.mrf.mxu0
      %v731 = vadd.f32 0.0, %v730
      %v732 = vpop.f32.mrf.mxu0
      %733 = vmatprep.mubr.f32.mxu0 0.0
      %734 = vmatmul.mubr.f32.gmra.mxu0 %v661
      %v735 = vpop.f32.mrf.mxu0
      %v736 = vadd.f32 0.0, %v735
      %v737 = vpop.f32.mrf.mxu0
      %738 = vdwg.mxu0
      %739 = vmatprep.subr.mxu0 0.0
      %740 = vmatpush1.msra.mxu0 %v636
      %741 = vmatprep.subr.mxu0 0.0
      %742 = vmatpush1.msra.mxu0 %v635
      %743 = vmatprep.subr.mxu0 0.0
      %744 = vmatpush1.msra.mxu0 %v634
      %745 = vmatprep.subr.mxu0 0.0
      %746 = vmatpush1.msra.mxu0 %v633
      %747 = vmatprep.subr.mxu0 0.0
      %748 = vmatpush1.msra.mxu0 %v632
      %749 = vmatprep.subr.mxu0 0.0
      %750 = vmatpush1.msra.mxu0 %v631
      %751 = vmatprep.subr.mxu0 0.0
      %752 = vmatpush1.msra.mxu0 %v630
      %753 = vmatprep.subr.mxu0 0.0
      %754 = vmatpush1.msra.mxu0 %v629
      %755 = vmatprep.subr.mxu0 0.0
      %756 = vmatpush1.msra.mxu0 %v628
      %757 = vmatprep.subr.mxu0 0.0
      %758 = vmatpush1.msra.mxu0 %v627
      %759 = vmatprep.subr.mxu0 0.0
      %760 = vmatpush1.msra.mxu0 %v626
      %761 = vmatprep.subr.mxu0 0.0
      %762 = vmatpush1.msra.mxu0 %v625
      %763 = vmatprep.subr.mxu0 0.0
      %764 = vmatpush1.msra.mxu0 %v624
      %765 = vmatprep.subr.mxu0 0.0
      %766 = vmatpush1.msra.mxu0 %v623
      %767 = vmatprep.subr.mxu0 0.0
      %768 = vmatpush1.msra.mxu0 %v622
      %769 = vmatprep.subr.mxu0 0.0
      %770 = vmatpush1.msra.mxu0 %v621
      %771 = vmatprep.subr.mxu0 0.0
      %772 = vmatpush2.msra.mxu0 0.0
      %773 = vmatprep.subr.mxu0 0.0
      %774 = vmatpush2.msra.mxu0 0.0
      %775 = vmatprep.subr.mxu0 0.0
      %776 = vmatpush2.msra.mxu0 0.0
      %777 = vmatprep.subr.mxu0 0.0
      %778 = vmatpush2.msra.mxu0 0.0
      %779 = vmatprep.subr.mxu0 0.0
      %780 = vmatpush2.msra.mxu0 0.0
      %781 = vmatprep.subr.mxu0 0.0
      %782 = vmatpush2.msra.mxu0 0.0
      %783 = vmatprep.subr.mxu0 0.0
      %784 = vmatpush2.msra.mxu0 0.0
      %785 = vmatprep.subr.mxu0 0.0
      %786 = vmatpush2.msra.mxu0 0.0
      %787 = vmatprep.subr.mxu0 0.0
      %788 = vmatpush2.msra.mxu0 0.0
      %789 = vmatprep.subr.mxu0 0.0
      %790 = vmatpush2.msra.mxu0 0.0
      %791 = vmatprep.subr.mxu0 0.0
      %792 = vmatpush2.msra.mxu0 0.0
      %793 = vmatprep.subr.mxu0 0.0
      %794 = vmatpush2.msra.mxu0 0.0
      %795 = vmatprep.subr.mxu0 0.0
      %796 = vmatpush2.msra.mxu0 0.0
      %797 = vmatprep.subr.mxu0 0.0
      %798 = vmatpush2.msra.mxu0 0.0
      %799 = vmatprep.subr.mxu0 0.0
      %800 = vmatpush2.msra.mxu0 0.0
      %801 = vmatprep.subr.mxu0 0.0
      %802 = vmatpush2.msra.mxu0 0.0
      %803 = vmatprep.mubr.f32.mxu0 0.0
      %804 = vmatmul.mubr.f32.gmra.mxu0 %v618
      %v805 = vpop.f32.mrf.mxu0
      %v806 = vadd.f32 %v731, %v805
      %v807 = vpop.f32.mrf.mxu0
      %808 = vmatprep.mubr.f32.mxu0 0.0
      %809 = vmatmul.mubr.f32.gmra.mxu0 %v619
      %v810 = vpop.f32.mrf.mxu0
      %v811 = vadd.f32 %v736, %v810
      %v812 = vpop.f32.mrf.mxu0
      %813 = vdwg.mxu0
      %s814 = scalar_lea.vmem %s3, 256
      %v815 = vld [vmem:[%s814] sm:$0xff]
      %v816 = vld [vmem:[%s814 + $0x8] sm:$0xff]
      %v817 = vld [vmem:[%s814 + $0x10] sm:$0xff]
      %v818 = vld [vmem:[%s814 + $0x18] sm:$0xff]
      %v819 = vld [vmem:[%s814 + $0x20] sm:$0xff]
      %v820 = vld [vmem:[%s814 + $0x28] sm:$0xff]
      %v821 = vld [vmem:[%s814 + $0x30] sm:$0xff]
      %v822 = vld [vmem:[%s814 + $0x38] sm:$0xff]
      %v823 = vld [vmem:[%s814 + $0x40] sm:$0xff]
      %v824 = vld [vmem:[%s814 + $0x48] sm:$0xff]
      %v825 = vld [vmem:[%s814 + $0x50] sm:$0xff]
      %v826 = vld [vmem:[%s814 + $0x58] sm:$0xff]
      %v827 = vld [vmem:[%s814 + $0x60] sm:$0xff]
      %v828 = vld [vmem:[%s814 + $0x68] sm:$0xff]
      %v829 = vld [vmem:[%s814 + $0x70] sm:$0xff]
      %v830 = vld [vmem:[%s814 + $0x78] sm:$0xff]
      %831 = vmatprep.subr.mxu0 0.0
      %832 = vmatpush1.msra.mxu0 %v830
      %833 = vmatprep.subr.mxu0 0.0
      %834 = vmatpush1.msra.mxu0 %v829
      %835 = vmatprep.subr.mxu0 0.0
      %836 = vmatpush1.msra.mxu0 %v828
      %837 = vmatprep.subr.mxu0 0.0
      %838 = vmatpush1.msra.mxu0 %v827
      %839 = vmatprep.subr.mxu0 0.0
      %840 = vmatpush1.msra.mxu0 %v826
      %841 = vmatprep.subr.mxu0 0.0
      %842 = vmatpush1.msra.mxu0 %v825
      %843 = vmatprep.subr.mxu0 0.0
      %844 = vmatpush1.msra.mxu0 %v824
      %845 = vmatprep.subr.mxu0 0.0
      %846 = vmatpush1.msra.mxu0 %v823
      %847 = vmatprep.subr.mxu0 0.0
      %848 = vmatpush1.msra.mxu0 %v822
      %849 = vmatprep.subr.mxu0 0.0
      %850 = vmatpush1.msra.mxu0 %v821
      %851 = vmatprep.subr.mxu0 0.0
      %852 = vmatpush1.msra.mxu0 %v820
      %853 = vmatprep.subr.mxu0 0.0
      %854 = vmatpush1.msra.mxu0 %v819
      %855 = vmatprep.subr.mxu0 0.0
      %856 = vmatpush1.msra.mxu0 %v818
      %857 = vmatprep.subr.mxu0 0.0
      %858 = vmatpush1.msra.mxu0 %v817
      %859 = vmatprep.subr.mxu0 0.0
      %860 = vmatpush1.msra.mxu0 %v816
      %861 = vmatprep.subr.mxu0 0.0
      %862 = vmatpush1.msra.mxu0 %v815
      %863 = vmatprep.subr.mxu0 0.0
      %864 = vmatpush2.msra.mxu0 0.0
      %865 = vmatprep.subr.mxu0 0.0
      %866 = vmatpush2.msra.mxu0 0.0
      %867 = vmatprep.subr.mxu0 0.0
      %868 = vmatpush2.msra.mxu0 0.0
      %869 = vmatprep.subr.mxu0 0.0
      %870 = vmatpush2.msra.mxu0 0.0
      %871 = vmatprep.subr.mxu0 0.0
      %872 = vmatpush2.msra.mxu0 0.0
      %873 = vmatprep.subr.mxu0 0.0
      %874 = vmatpush2.msra.mxu0 0.0
      %875 = vmatprep.subr.mxu0 0.0
      %876 = vmatpush2.msra.mxu0 0.0
      %877 = vmatprep.subr.mxu0 0.0
      %878 = vmatpush2.msra.mxu0 0.0
      %879 = vmatprep.subr.mxu0 0.0
      %880 = vmatpush2.msra.mxu0 0.0
      %881 = vmatprep.subr.mxu0 0.0
      %882 = vmatpush2.msra.mxu0 0.0
      %883 = vmatprep.subr.mxu0 0.0
      %884 = vmatpush2.msra.mxu0 0.0
      %885 = vmatprep.subr.mxu0 0.0
      %886 = vmatpush2.msra.mxu0 0.0
      %887 = vmatprep.subr.mxu0 0.0
      %888 = vmatpush2.msra.mxu0 0.0
      %889 = vmatprep.subr.mxu0 0.0
      %890 = vmatpush2.msra.mxu0 0.0
      %891 = vmatprep.subr.mxu0 0.0
      %892 = vmatpush2.msra.mxu0 0.0
      %893 = vmatprep.subr.mxu0 0.0
      %894 = vmatpush2.msra.mxu0 0.0
      %895 = vmatprep.mubr.f32.mxu0 0.0
      %896 = vmatmul.mubr.f32.gmra.mxu0 %v619
      %v897 = vpop.f32.mrf.mxu0
      %v898 = vadd.f32 0.0, %v897
      %v899 = vpop.f32.mrf.mxu0
      %900 = vmatprep.mubr.f32.mxu0 0.0
      %901 = vmatmul.mubr.f32.gmra.mxu0 %v620
      %v902 = vpop.f32.mrf.mxu0
      %v903 = vadd.f32 0.0, %v902
      %v904 = vpop.f32.mrf.mxu0
      %905 = vdwg.mxu0
      %v906 = vadd.f32 %v806, %v898
      %v907 = vadd.f32 %v811, %v903
      %v908 = vld [vmem:[%s4] sm:$0x1]
      %v910 = vlaneseq
      %v911 = vshrl.u32 %v910, 7
      %v912 = vsub.s32 0, %v911
      %v913 = vrot.slane %v908, %v912
      %v915 = vadd.f32 %v906, %v913
      %v916 = vadd.f32 %v907, %v913
      %v917 = vmul.f32 %v915, 0.01
      %v918 = vmul.f32 %v916, 0.01
      %v919 = vmax.f32 %v915, %v917
      %v920 = vmax.f32 %v916, %v918
      %v921 = vadd.f32 %v919, %v264
      %v922 = vadd.f32 %v920, %v265
      %923 = vst [vmem:[%s262] sm:$0xff] %v921
      %924 = vst [vmem:[%s262 + $0x8] sm:$0xff] %v922
      %s925 = smul.u32 2, %s21
      %p926 = scmp.lt.s32.totalorder %s20, 1
      %s927 = scalar_select %p926, %s20, 1
      %p928 = scmp.lt.s32.totalorder %s925, 5
      %s929 = scalar_select %p928, %s925, 5
      %s930 = smul.addr %s927, 6
      %s931 = sadd.s32 %s929, %s930
      %s932 = smul.addr %s931, 8
      %s933 = scalar_lea.vmem %s5, %s932
      // Predicated region
      $region45: #{causal_cnn.6} parent=39 // pred_check
        %p934 = pneg %p160
      $region46: #{causal_cnn.6} parent=39 // pred_check_branch
        %936 = sbr.rel (%p934) target = $region48
      $region47: #{causal_cnn.6} parent=39 // pred_region
        %s937 = smul.u32 2, %s21
      $region48: #{causal_cnn.6} parent=39 // pred_fallthru
        _
    $region40: #{causal_cnn.6} parent=5 // pred_fallthru
      _
    %p938 = scmp.le.s32.totalorder 2, %s11
    // Predicated region
    $region49: #{causal_cnn.6} parent=5 // pred_check
      %p939 = pneg %p938
    $region50: #{causal_cnn.6} parent=5 // pred_check_branch
      %941 = sbr.rel (%p939) target = $region52
    $region51: #{causal_cnn.6} parent=5 // pred_region
      %s942 = ssub.s32 %s11, 2
      // Predicated region
      $region53: #{causal_cnn.6} parent=51 // pred_check
        %p943 = pneg %p166
      $region54: #{causal_cnn.6} parent=51 // pred_check_branch
        %945 = sbr.rel (%p943) target = $region56
      $region55: #{causal_cnn.6} parent=51 // pred_region
        %s946 = smul.u32 2, %s23
        %p947 = scmp.lt.s32.totalorder %s22, 1
        %s948 = scalar_select %p947, %s22, 1
        %p949 = scmp.lt.s32.totalorder %s946, 5
        %s950 = scalar_select %p949, %s946, 5
        %s951 = smul.addr %s948, 6
        %s952 = sadd.s32 %s950, %s951
        %s953 = smul.addr %s952, 8
        %s954 = scalar_lea.vmem %s5, %s953
      $region56: #{causal_cnn.6} parent=51 // pred_fallthru
        _
    $region52: #{causal_cnn.6} parent=5 // pred_fallthru
      _
  $region6: #{causal_cnn.6} parent=0 // loop_footer
    %s15 = sadd.s32 1, %s11
  $region7: #{causal_cnn.6} parent=0 // loop_footer_branch
    %10 = sbr.rel target = $region3
  $region8: #{causal_cnn.6} parent=0 // loop_exit
    _

// kernel: causal_cnn.4
$region0: #{causal_cnn.4}
  #allocation0 [shape = 'u32[]', space=smem, size = 0x4, offset = 0x4, fixed_abs, tag = 'smem constant byte address 0x4 - core index']
  #allocation1 [shape = 'u32[144,128]{1,0:T(1,128)}', space=vmem, size = 0x12000, scoped, tag = 'internal scratch']
  #allocation2 [shape = 'f32[16,128]{1,0:T(8,128)}', space=vmem, size = 0x2000, scoped, tag = 'scratch operand']
  %s0 = inlined_call_operand.vmem [shape: f32[2,48,128], index: 0, kind: input, shape index: {}]
  %s1 = inlined_call_operand.hbm [shape: f32[3,128,128], index: 1, kind: input, shape index: {}]
  %s2 = inlined_call_operand.vmem [shape: f32[1,128], index: 2, kind: input, shape index: {}]
  %s3 = inlined_call_operand.hbm [shape: f32[3,128,128], index: 3, kind: input, shape index: {}]
  %s4 = inlined_call_operand.vmem [shape: f32[1,128], index: 4, kind: input, shape index: {}]
  %s5 = inlined_call_operand.vmem [shape: f32[128,128], index: 5, kind: input, shape index: {}]
  %s6 = inlined_call_operand.vmem [shape: f32[1,128], index: 6, kind: input, shape index: {}]
  %s7 = inlined_call_operand.vmem [shape: f32[2,48,128], index: 7, kind: output, shape index: {}]
  %s8 = sld [smem:[#allocation0]]
  $region73: #{causal_cnn.4} parent=0
    _
  %s10 = ssub.s32 1, %s8
  %s11 = scalar_select 0, %s10, %s8
  $region1: #{causal_cnn.4} parent=0
    #allocation3 [shape = 'u8[196608]{0}', space=vmem, size = 0x30000, scoped, tag = 'input window, operand 1, single buffered']
    #allocation4 [shape = 's32[2]{0}', space=sflag, size = 0x8, scoped, tag = 'scoped memory for causal_cnn.4']
    #allocation5 [shape = 'u8[196608]{0}', space=vmem, size = 0x30000, scoped, tag = 'input window, operand 3, single buffered']
    #allocation6 [shape = 's32[1]{0}', space=sflag, size = 0x4, scoped, tag = 'scoped memory for causal_cnn.4']
    %12 = vsyncpa [#allocation4], 0
    %13 = vsyncpa [#allocation6], 0
    loop: start=0, step=1, limit=8
    $region2: #{causal_cnn.4} parent=1 // loop_pre_header
      _
    $region3: #{causal_cnn.4} parent=1 // loop_header
      %s15 = sphi 0, %s19
      %p16 = scmp.ge.s32.totalorder %s15, 8
      %s22 = sphi 0, %s34
      %s23 = sphi 0, %s30
      %s24 = sphi 0, %s22
      %s25 = sphi 0, %s23
      %s26 = sphi 0, %s24
      %s27 = sphi 0, %s25
      %s39 = sphi 0, %s41
      %s42 = sphi 0, %s39
      %s43 = sphi 0, %s42
      %s59 = sphi 0, %s43
      %s63 = sphi 0, %s63
      %s65 = sphi 0, %s63
      %s66 = sphi 0, %s65
      %s80 = sphi 0, %s66
      %s84 = sphi 0, %s84
      %s86 = sphi 0, %s84
      %s87 = sphi 0, %s86
      %s101 = sphi 0, %s87
      %s105 = sphi 0, %s105
      %s107 = sphi 0, %s105
      %s108 = sphi 0, %s107
      %s122 = sphi 0, %s108
      %s126 = sphi 0, %s126
      %s128 = sphi 0, %s126
      %s129 = sphi 0, %s128
      %s143 = sphi 0, %s129
      %s147 = sphi 0, %s147
      %s149 = sphi 0, %s147
      %s150 = sphi 0, %s149
      %s164 = sphi 0, %s150
      %s168 = sphi 0, %s168
      %s170 = sphi 0, %s168
      %s171 = sphi 0, %s170
      %s185 = sphi 0, %s171
      %s193 = sphi 0, %s195
      %s196 = sphi 0, %s193
      %s197 = sphi 0, %s196
      %s213 = sphi 0, %s197
    $region4: #{causal_cnn.4} parent=1 // loop_header_branch
      %18 = sbr.rel (%p16) target = $region8
    $region5: #{causal_cnn.4} parent=1 // loop_body
      %s20 = ssub.s32 %s15, 1
      %s21 = ssub.s32 %s15, 2
      %s28 = sadd.s32 1, %s23
      %p29 = scmp.ge.s32.totalorder %s28, 3
      %s30 = scalar_select %p29, 0, %s28
      %s31 = sadd.s32 1, %s22
      %s32 = scalar_select %p29, %s31, %s22
      %p33 = scmp.ge.s32.totalorder %s32, 2
      %s34 = scalar_select %p33, 0, %s32
      %s35 = ssub.s32 %s22, %s34
      %s36 = ssub.s32 %s23, %s30
      %s37 = sor.u32 %s35, %s36
      %p38 = scmp.eq.s32.totalorder %s37, 0
      %s40 = sadd.s32 %s39, 1
      %s41 = scalar_select %p38, %s39, %s40
      %p44 = pneg %p38
      %p45 = scmp.eq.s32.totalorder %s15, 5
      %p46 = por %p44, %p45
      %p47 = scmp.ne.s32.totalorder %s39, %s42
      %p48 = scmp.eq.s32.totalorder %s15, 0
      %p49 = por %p47, %p48
      %p50 = scmp.ne.s32.totalorder %s39, %s42
      %p51 = scmp.eq.s32.totalorder %s20, 5
      %p52 = por %p50, %p51
      %p53 = scmp.ne.s32.totalorder %s42, %s43
      %p54 = scmp.eq.s32.totalorder %s20, 0
      %p55 = por %p53, %p54
      %p56 = scmp.ne.s32.totalorder %s42, %s43
      %p57 = scmp.eq.s32.totalorder %s21, 5
      %p58 = por %p56, %p57
      %p60 = scmp.ne.s32.totalorder %s43, %s59
      %p61 = scmp.eq.s32.totalorder %s21, 0
      %p62 = por %p60, %p61
      %s64 = sadd.s32 %s63, 1
      %p67 = scmp.eq.s32.totalorder %s15, 5
      %p68 = scmp.ne.s32.totalorder %s63, %s65
      %p69 = scmp.eq.s32.totalorder %s15, 0
      %p70 = por %p68, %p69
      %p71 = scmp.ne.s32.totalorder %s63, %s65
      %p72 = scmp.eq.s32.totalorder %s20, 5
      %p73 = por %p71, %p72
      %p74 = scmp.ne.s32.totalorder %s65, %s66
      %p75 = scmp.eq.s32.totalorder %s20, 0
      %p76 = por %p74, %p75
      %p77 = scmp.ne.s32.totalorder %s65, %s66
      %p78 = scmp.eq.s32.totalorder %s21, 5
      %p79 = por %p77, %p78
      %p81 = scmp.ne.s32.totalorder %s66, %s80
      %p82 = scmp.eq.s32.totalorder %s21, 0
      %p83 = por %p81, %p82
      %s85 = sadd.s32 %s84, 1
      %p88 = scmp.eq.s32.totalorder %s15, 5
      %p89 = scmp.ne.s32.totalorder %s84, %s86
      %p90 = scmp.eq.s32.totalorder %s15, 0
      %p91 = por %p89, %p90
      %p92 = scmp.ne.s32.totalorder %s84, %s86
      %p93 = scmp.eq.s32.totalorder %s20, 5
      %p94 = por %p92, %p93
      %p95 = scmp.ne.s32.totalorder %s86, %s87
      %p96 = scmp.eq.s32.totalorder %s20, 0
      %p97 = por %p95, %p96
      %p98 = scmp.ne.s32.totalorder %s86, %s87
      %p99 = scmp.eq.s32.totalorder %s21, 5
      %p100 = por %p98, %p99
      %p102 = scmp.ne.s32.totalorder %s87, %s101
      %p103 = scmp.eq.s32.totalorder %s21, 0
      %p104 = por %p102, %p103
      %s106 = sadd.s32 %s105, 1
      %p109 = scmp.eq.s32.totalorder %s15, 5
      %p110 = scmp.ne.s32.totalorder %s105, %s107
      %p111 = scmp.eq.s32.totalorder %s15, 0
      %p112 = por %p110, %p111
      %p113 = scmp.ne.s32.totalorder %s105, %s107
      %p114 = scmp.eq.s32.totalorder %s20, 5
      %p115 = por %p113, %p114
      %p116 = scmp.ne.s32.totalorder %s107, %s108
      %p117 = scmp.eq.s32.totalorder %s20, 0
      %p118 = por %p116, %p117
      %p119 = scmp.ne.s32.totalorder %s107, %s108
      %p120 = scmp.eq.s32.totalorder %s21, 5
      %p121 = por %p119, %p120
      %p123 = scmp.ne.s32.totalorder %s108, %s122
      %p124 = scmp.eq.s32.totalorder %s21, 0
      %p125 = por %p123, %p124
      %s127 = sadd.s32 %s126, 1
      %p130 = scmp.eq.s32.totalorder %s15, 5
      %p131 = scmp.ne.s32.totalorder %s126, %s128
      %p132 = scmp.eq.s32.totalorder %s15, 0
      %p133 = por %p131, %p132
      %p134 = scmp.ne.s32.totalorder %s126, %s128
      %p135 = scmp.eq.s32.totalorder %s20, 5
      %p136 = por %p134, %p135
      %p137 = scmp.ne.s32.totalorder %s128, %s129
      %p138 = scmp.eq.s32.totalorder %s20, 0
      %p139 = por %p137, %p138
      %p140 = scmp.ne.s32.totalorder %s128, %s129
      %p141 = scmp.eq.s32.totalorder %s21, 5
      %p142 = por %p140, %p141
      %p144 = scmp.ne.s32.totalorder %s129, %s143
      %p145 = scmp.eq.s32.totalorder %s21, 0
      %p146 = por %p144, %p145
      %s148 = sadd.s32 %s147, 1
      %p151 = scmp.eq.s32.totalorder %s15, 5
      %p152 = scmp.ne.s32.totalorder %s147, %s149
      %p153 = scmp.eq.s32.totalorder %s15, 0
      %p154 = por %p152, %p153
      %p155 = scmp.ne.s32.totalorder %s147, %s149
      %p156 = scmp.eq.s32.totalorder %s20, 5
      %p157 = por %p155, %p156
      %p158 = scmp.ne.s32.totalorder %s149, %s150
      %p159 = scmp.eq.s32.totalorder %s20, 0
      %p160 = por %p158, %p159
      %p161 = scmp.ne.s32.totalorder %s149, %s150
      %p162 = scmp.eq.s32.totalorder %s21, 5
      %p163 = por %p161, %p162
      %p165 = scmp.ne.s32.totalorder %s150, %s164
      %p166 = scmp.eq.s32.totalorder %s21, 0
      %p167 = por %p165, %p166
      %s169 = sadd.s32 %s168, 1
      %p172 = scmp.eq.s32.totalorder %s15, 5
      %p173 = scmp.ne.s32.totalorder %s168, %s170
      %p174 = scmp.eq.s32.totalorder %s15, 0
      %p175 = por %p173, %p174
      %p176 = scmp.ne.s32.totalorder %s168, %s170
      %p177 = scmp.eq.s32.totalorder %s20, 5
      %p178 = por %p176, %p177
      %p179 = scmp.ne.s32.totalorder %s170, %s171
      %p180 = scmp.eq.s32.totalorder %s20, 0
      %p181 = por %p179, %p180
      %p182 = scmp.ne.s32.totalorder %s170, %s171
      %p183 = scmp.eq.s32.totalorder %s21, 5
      %p184 = por %p182, %p183
      %p186 = scmp.ne.s32.totalorder %s171, %s185
      %p187 = scmp.eq.s32.totalorder %s21, 0
      %p188 = por %p186, %p187
      %s189 = ssub.s32 %s22, %s34
      %s190 = ssub.s32 %s23, %s30
      %s191 = sor.u32 %s189, %s190
      %p192 = scmp.eq.s32.totalorder %s191, 0
      %s194 = sadd.s32 %s193, 1
      %s195 = scalar_select %p192, %s193, %s194
      %p198 = pneg %p192
      %p199 = scmp.eq.s32.totalorder %s15, 5
      %p200 = por %p198, %p199
      %p201 = scmp.ne.s32.totalorder %s193, %s196
      %p202 = scmp.eq.s32.totalorder %s15, 0
      %p203 = por %p201, %p202
      %p204 = scmp.ne.s32.totalorder %s193, %s196
      %p205 = scmp.eq.s32.totalorder %s20, 5
      %p206 = por %p204, %p205
      %p207 = scmp.ne.s32.totalorder %s196, %s197
      %p208 = scmp.eq.s32.totalorder %s20, 0
      %p209 = por %p207, %p208
      %p210 = scmp.ne.s32.totalorder %s196, %s197
      %p211 = scmp.eq.s32.totalorder %s21, 5
      %p212 = por %p210, %p211
      %p214 = scmp.ne.s32.totalorder %s197, %s213
      %p215 = scmp.eq.s32.totalorder %s21, 0
      %p216 = por %p214, %p215
      %p217 = scmp.le.s32.totalorder 1, %s15
      %p218 = scmp.lt.s32.totalorder %s15, 7
      %p219 = pnand %p217, %p218
      %p220 = pneg %p219
      // Predicated region
      $region9: #{causal_cnn.4} parent=5 // pred_check
        _
      $region10: #{causal_cnn.4} parent=5 // pred_check_branch
        %222 = sbr.rel (%p219) target = $region12
      $region11: #{causal_cnn.4} parent=5 // pred_region
        %s223 = ssub.s32 %s15, 1
        // Predicated region
        $region13: #{causal_cnn.4} parent=11 // pred_check
          %p224 = pneg %p76
        $region14: #{causal_cnn.4} parent=11 // pred_check_branch
          %226 = sbr.rel (%p224) target = $region16
        $region15: #{causal_cnn.4} parent=11 // pred_region
          %s228 = ssub.s32 6144, 6144
          %229 = vsyncadd [#allocation4], %s228
          %s230 = sshll.u32 [#allocation3], 4
          %s231 = int_to_ptr.vmem [resolvable:$true] %s230
          %236 = dma.hbm_to_vmem [thread:$0]  %s1, 6144, %s231, [#allocation4], 128, 128, 8
        $region16: #{causal_cnn.4} parent=11 // pred_fallthru
          _
        // Predicated region
        $region17: #{causal_cnn.4} parent=11 // pred_check
          %p237 = pneg %p97
        $region18: #{causal_cnn.4} parent=11 // pred_check_branch
          %239 = sbr.rel (%p237) target = $region20
        $region19: #{causal_cnn.4} parent=11 // pred_region
          _
        $region20: #{causal_cnn.4} parent=11 // pred_fallthru
          _
        // Predicated region
        $region21: #{causal_cnn.4} parent=11 // pred_check
          %p240 = pneg %p118
        $region22: #{causal_cnn.4} parent=11 // pred_check_branch
          %242 = sbr.rel (%p240) target = $region24
        $region23: #{causal_cnn.4} parent=11 // pred_region
          %s244 = ssub.s32 6144, 6144
          %245 = vsyncadd [#allocation6], %s244
          %s246 = sshll.u32 [#allocation5], 4
          %s247 = int_to_ptr.vmem [resolvable:$true] %s246
          %252 = dma.hbm_to_vmem [thread:$0]  %s3, 6144, %s247, [#allocation6], 128, 128, 8
        $region24: #{causal_cnn.4} parent=11 // pred_fallthru
          _
        // Predicated region
        $region25: #{causal_cnn.4} parent=11 // pred_check
          %p253 = pneg %p139
        $region26: #{causal_cnn.4} parent=11 // pred_check_branch
          %255 = sbr.rel (%p253) target = $region28
        $region27: #{causal_cnn.4} parent=11 // pred_region
          _
        $region28: #{causal_cnn.4} parent=11 // pred_fallthru
          _
        // Predicated region
        $region29: #{causal_cnn.4} parent=11 // pred_check
          %p256 = pneg %p160
        $region30: #{causal_cnn.4} parent=11 // pred_check_branch
          %258 = sbr.rel (%p256) target = $region32
        $region31: #{causal_cnn.4} parent=11 // pred_region
          _
        $region32: #{causal_cnn.4} parent=11 // pred_fallthru
          _
        // Predicated region
        $region33: #{causal_cnn.4} parent=11 // pred_check
          %p259 = pneg %p181
        $region34: #{causal_cnn.4} parent=11 // pred_check_branch
          %261 = sbr.rel (%p259) target = $region36
        $region35: #{causal_cnn.4} parent=11 // pred_region
          _
        $region36: #{causal_cnn.4} parent=11 // pred_fallthru
          _
      $region12: #{causal_cnn.4} parent=5 // pred_fallthru
        _
      %p262 = scmp.lt.s32.totalorder %s15, 6
      // Predicated region
      $region37: #{causal_cnn.4} parent=5 // pred_check
        %p263 = pneg %p262
      $region38: #{causal_cnn.4} parent=5 // pred_check_branch
        %265 = sbr.rel (%p263) target = $region40
      $region39: #{causal_cnn.4} parent=5 // pred_region
        // Predicated region
        $region41: #{causal_cnn.4} parent=39 // pred_check
          %p266 = pneg %p49
        $region42: #{causal_cnn.4} parent=39 // pred_check_branch
          %268 = sbr.rel (%p266) target = $region44
        $region43: #{causal_cnn.4} parent=39 // pred_region
          %s269 = smul.u32 2, %s23
          %p270 = scmp.lt.s32.totalorder %s22, 1
          %s271 = scalar_select %p270, %s22, 1
          %p272 = scmp.lt.s32.totalorder %s269, 5
          %s273 = scalar_select %p272, %s269, 5
          %s274 = smul.addr %s271, 6
          %s275 = sadd.s32 %s273, %s274
          %s276 = smul.addr %s275, 8
          %s277 = scalar_lea.vmem %s0, %s276
          %s278 = smul.u32 2, %s23
        $region44: #{causal_cnn.4} parent=39 // pred_fallthru
          _
      $region40: #{causal_cnn.4} parent=5 // pred_fallthru
        _
      %p279 = scmp.le.s32.totalorder 1, %s15
      %p280 = scmp.lt.s32.totalorder %s15, 7
      %p281 = pnand %p279, %p280
      %p282 = pneg %p281
      // Predicated region
      $region45: #{causal_cnn.4} parent=5 // pred_check
        _
      $region46: #{causal_cnn.4} parent=5 // pred_check_branch
        %284 = sbr.rel (%p281) target = $region48
      $region47: #{causal_cnn.4} parent=5 // pred_region
        %s285 = ssub.s32 %s15, 1
        // Predicated region
        $region49: #{causal_cnn.4} parent=47 // pred_check
          %p286 = pneg %p76
        $region50: #{causal_cnn.4} parent=47 // pred_check_branch
          %288 = sbr.rel (%p286) target = $region52
        $region51: #{causal_cnn.4} parent=47 // pred_region
          %289 = dma.done [#allocation4], 6144
        $region52: #{causal_cnn.4} parent=47 // pred_fallthru
          _
        // Predicated region
        $region53: #{causal_cnn.4} parent=47 // pred_check
          %p290 = pneg %p118
        $region54: #{causal_cnn.4} parent=47 // pred_check_branch
          %292 = sbr.rel (%p290) target = $region56
        $region55: #{causal_cnn.4} parent=47 // pred_region
          %293 = dma.done [#allocation6], 6144
        $region56: #{causal_cnn.4} parent=47 // pred_fallthru
          _
        %s294 = smul.u32 2, %s25
        %p295 = scmp.lt.s32.totalorder %s24, 1
        %s296 = scalar_select %p295, %s24, 1
        %p297 = scmp.lt.s32.totalorder %s294, 5
        %s298 = scalar_select %p297, %s294, 5
        %s299 = smul.addr %s296, 6
        %s300 = sadd.s32 %s298, %s299
        %s301 = smul.addr %s300, 8
        %s302 = scalar_lea.vmem %s0, %s301
        %p303 = pneg %p55
        %p304 = pneg %p52
        %p305 = pneg %p76
        %p306 = pneg %p73
        %p307 = pneg %p97
        %p308 = pneg %p94
        %p309 = pneg %p118
        %p310 = pneg %p115
        %p311 = pneg %p139
        %p312 = pneg %p136
        %p313 = pneg %p160
        %p314 = pneg %p157
        %p315 = pneg %p181
        %p316 = pneg %p178
        %p317 = pneg %p209
        %p318 = pneg %p206
        %s319 = smul.u32 2, %s25
        %p320 = scmp.lt.s32.totalorder %s24, 1
        %s321 = scalar_select %p320, %s24, 1
        %p322 = scmp.lt.s32.totalorder %s319, 5
        %s323 = scalar_select %p322, %s319, 5
        %s324 = smul.addr %s321, 6
        %s325 = sadd.s32 %s323, %s324
        %s326 = smul.addr %s325, 8
        %s327 = scalar_lea.vmem %s7, %s326
        %s328 = smul.u32 2, %s25
        %p329 = scmp.lt.s32.totalorder %s24, 1
        %s330 = scalar_select %p329, %s24, 1
        %p331 = scmp.lt.s32.totalorder %s328, 5
        %s332 = scalar_select %p331, %s328, 5
        %s333 = smul.addr %s330, 6
        %s334 = sadd.s32 %s332, %s333
        %s335 = smul.addr %s334, 8
        %s336 = scalar_lea.vmem %s0, %s335
        %s337 = smul.u32 2, %s25
        %s338 = smul.u32 2, %s25
        %p339 = scmp.lt.s32.totalorder %s24, 1
        %s340 = scalar_select %p339, %s24, 1
        %p341 = scmp.lt.s32.totalorder %s338, 5
        %s342 = scalar_select %p341, %s338, 5
        %s343 = smul.addr %s340, 6
        %s344 = sadd.s32 %s342, %s343
        %s345 = smul.addr %s344, 8
        %s346 = scalar_lea.vmem %s7, %s345
        %s347 = smul.u32 2, %s25
        %v348 = vld [vmem:[%s336] sm:$0xff]
        %v349 = vld [vmem:[%s336 + $0x8] sm:$0xff]
        %p350 = scmp.eq.s32.totalorder %s25, 0
        // Predicated region
        $region57: #{causal_cnn.4} parent=47 // pred_check
          %p351 = pneg %p350
        $region58: #{causal_cnn.4} parent=47 // pred_check_branch
          %353 = sbr.rel (%p351) target = $region60
        $region59: #{causal_cnn.4} parent=47 // pred_region
          %354 = vst [vmem:[#allocation2] sm:$0xff] 0.0
          %355 = vst [vmem:[#allocation2 + $0x8] sm:$0xff] 0.0
        $region60: #{causal_cnn.4} parent=47 // pred_fallthru
          _
        %v356 = vld [vmem:[#allocation2 + $0x8] sm:$0xff]
        %357 = vst [vmem:[#allocation2] sm:$0xff] %v348
        %358 = vst [vmem:[#allocation2 + $0x8] sm:$0xff] %v349
        %v359 = vld [vmem:[#allocation3] sm:$0xff]
        %v360 = vld [vmem:[#allocation3 + $0x8] sm:$0xff]
        %v361 = vld [vmem:[#allocation3 + $0x10] sm:$0xff]
        %v362 = vld [vmem:[#allocation3 + $0x18] sm:$0xff]
        %v363 = vld [vmem:[#allocation3 + $0x20] sm:$0xff]
        %v364 = vld [vmem:[#allocation3 + $0x28] sm:$0xff]
        %v365 = vld [vmem:[#allocation3 + $0x30] sm:$0xff]
        %v366 = vld [vmem:[#allocation3 + $0x38] sm:$0xff]
        %v367 = vld [vmem:[#allocation3 + $0x40] sm:$0xff]
        %v368 = vld [vmem:[#allocation3 + $0x48] sm:$0xff]
        %v369 = vld [vmem:[#allocation3 + $0x50] sm:$0xff]
        %v370 = vld [vmem:[#allocation3 + $0x58] sm:$0xff]
        %v371 = vld [vmem:[#allocation3 + $0x60] sm:$0xff]
        %v372 = vld [vmem:[#allocation3 + $0x68] sm:$0xff]
        %v373 = vld [vmem:[#allocation3 + $0x70] sm:$0xff]
        %v374 = vld [vmem:[#allocation3 + $0x78] sm:$0xff]
        %s375 = scalar_lea.vmem [#allocation3], 128
        %v376 = vld [vmem:[%s375] sm:$0xff]
        %v377 = vld [vmem:[%s375 + $0x8] sm:$0xff]
        %v378 = vld [vmem:[%s375 + $0x10] sm:$0xff]
        %v379 = vld [vmem:[%s375 + $0x18] sm:$0xff]
        %v380 = vld [vmem:[%s375 + $0x20] sm:$0xff]
        %v381 = vld [vmem:[%s375 + $0x28] sm:$0xff]
        %v382 = vld [vmem:[%s375 + $0x30] sm:$0xff]
        %v383 = vld [vmem:[%s375 + $0x38] sm:$0xff]
        %v384 = vld [vmem:[%s375 + $0x40] sm:$0xff]
        %v385 = vld [vmem:[%s375 + $0x48] sm:$0xff]
        %v386 = vld [vmem:[%s375 + $0x50] sm:$0xff]
        %v387 = vld [vmem:[%s375 + $0x58] sm:$0xff]
        %v388 = vld [vmem:[%s375 + $0x60] sm:$0xff]
        %v389 = vld [vmem:[%s375 + $0x68] sm:$0xff]
        %v390 = vld [vmem:[%s375 + $0x70] sm:$0xff]
        %v391 = vld [vmem:[%s375 + $0x78] sm:$0xff]
        %vm395 = vcmask 1042432
        %v396 = vrot.slane %v356, 5
        %v397 = vrot.slane %v348, 5
        %v398 = vsel %vm395, %v396, %v397
        %v399 = vrot.slane %v349, 5
        %v400 = vsel %vm395, %v397, %v399
        %404 = vmatprep.subr.mxu0 0.0
        %405 = vmatpush1.msra.mxu0 %v391
        %406 = vmatprep.subr.mxu0 0.0
        %407 = vmatpush1.msra.mxu0 %v390
        %408 = vmatprep.subr.mxu0 0.0
        %409 = vmatpush1.msra.mxu0 %v389
        %410 = vmatprep.subr.mxu0 0.0
        %411 = vmatpush1.msra.mxu0 %v388
        %412 = vmatprep.subr.mxu0 0.0
        %413 = vmatpush1.msra.mxu0 %v387
        %414 = vmatprep.subr.mxu0 0.0
        %415 = vmatpush1.msra.mxu0 %v386
        %416 = vmatprep.subr.mxu0 0.0
        %417 = vmatpush1.msra.mxu0 %v385
        %418 = vmatprep.subr.mxu0 0.0
        %419 = vmatpush1.msra.mxu0 %v384
        %420 = vmatprep.subr.mxu0 0.0
        %421 = vmatpush1.msra.mxu0 %v383
        %422 = vmatprep.subr.mxu0 0.0
        %423 = vmatpush1.msra.mxu0 %v382
        %424 = vmatprep.subr.mxu0 0.0
        %425 = vmatpush1.msra.mxu0 %v381
        %426 = vmatprep.subr.mxu0 0.0
        %427 = vmatpush1.msra.mxu0 %v380
        %428 = vmatprep.subr.mxu0 0.0
        %429 = vmatpush1.msra.mxu0 %v379
        %430 = vmatprep.subr.mxu0 0.0
        %431 = vmatpush1.msra.mxu0 %v378
        %432 = vmatprep.subr.mxu0 0.0
        %433 = vmatpush1.msra.mxu0 %v377
        %434 = vmatprep.subr.mxu0 0.0
        %435 = vmatpush1.msra.mxu0 %v376
        %436 = vmatprep.subr.mxu0 0.0
        %437 = vmatpush2.msra.mxu0 0.0
        %438 = vmatprep.subr.mxu0 0.0
        %439 = vmatpush2.msra.mxu0 0.0
        %440 = vmatprep.subr.mxu0 0.0
        %441 = vmatpush2.msra.mxu0 0.0
        %442 = vmatprep.subr.mxu0 0.0
        %443 = vmatpush2.msra.mxu0 0.0
        %444 = vmatprep.subr.mxu0 0.0
        %445 = vmatpush2.msra.mxu0 0.0
        %446 = vmatprep.subr.mxu0 0.0
        %447 = vmatpush2.msra.mxu0 0.0
        %448 = vmatprep.subr.mxu0 0.0
        %449 = vmatpush2.msra.mxu0 0.0
        %450 = vmatprep.subr.mxu0 0.0
        %451 = vmatpush2.msra.mxu0 0.0
        %452 = vmatprep.subr.mxu0 0.0
        %453 = vmatpush2.msra.mxu0 0.0
        %454 = vmatprep.subr.mxu0 0.0
        %455 = vmatpush2.msra.mxu0 0.0
        %456 = vmatprep.subr.mxu0 0.0
        %457 = vmatpush2.msra.mxu0 0.0
        %458 = vmatprep.subr.mxu0 0.0
        %459 = vmatpush2.msra.mxu0 0.0
        %460 = vmatprep.subr.mxu0 0.0
        %461 = vmatpush2.msra.mxu0 0.0
        %462 = vmatprep.subr.mxu0 0.0
        %463 = vmatpush2.msra.mxu0 0.0
        %464 = vmatprep.subr.mxu0 0.0
        %465 = vmatpush2.msra.mxu0 0.0
        %466 = vmatprep.subr.mxu0 0.0
        %467 = vmatpush2.msra.mxu0 0.0
        %468 = vmatprep.mubr.f32.mxu0 0.0
        %469 = vmatmul.mubr.f32.gmra.mxu0 %v398
        %v470 = vpop.f32.mrf.mxu0
        %v471 = vadd.f32 0.0, %v470
        %v472 = vpop.f32.mrf.mxu0
        %473 = vmatprep.mubr.f32.mxu0 0.0
        %474 = vmatmul.mubr.f32.gmra.mxu0 %v400
        %v475 = vpop.f32.mrf.mxu0
        %v476 = vadd.f32 0.0, %v475
        %v477 = vpop.f32.mrf.mxu0
        %478 = vmatprep.mubr.f32.mxu0 0.0
        %479 = vmatmul.mubr.f32.gmra.mxu0 %v399
        %v480 = vpop.f32.mrf.mxu0
        %v481 = vadd.f32 0.0, %v480
        %v482 = vpop.f32.mrf.mxu0
        %483 = vdwg.mxu0
        %vm484 = vcmask 1043456
        %v485 = vrot.slane %v356, 4
        %v486 = vrot.slane %v348, 4
        %v487 = vsel %vm484, %v485, %v486
        %v488 = vrot.slane %v349, 4
        %v489 = vsel %vm484, %v486, %v488
        %493 = vmatprep.subr.mxu0 0.0
        %494 = vmatpush1.msra.mxu0 %v374
        %495 = vmatprep.subr.mxu0 0.0
        %496 = vmatpush1.msra.mxu0 %v373
        %497 = vmatprep.subr.mxu0 0.0
        %498 = vmatpush1.msra.mxu0 %v372
        %499 = vmatprep.subr.mxu0 0.0
        %500 = vmatpush1.msra.mxu0 %v371
        %501 = vmatprep.subr.mxu0 0.0
        %502 = vmatpush1.msra.mxu0 %v370
        %503 = vmatprep.subr.mxu0 0.0
        %504 = vmatpush1.msra.mxu0 %v369
        %505 = vmatprep.subr.mxu0 0.0
        %506 = vmatpush1.msra.mxu0 %v368
        %507 = vmatprep.subr.mxu0 0.0
        %508 = vmatpush1.msra.mxu0 %v367
        %509 = vmatprep.subr.mxu0 0.0
        %510 = vmatpush1.msra.mxu0 %v366
        %511 = vmatprep.subr.mxu0 0.0
        %512 = vmatpush1.msra.mxu0 %v365
        %513 = vmatprep.subr.mxu0 0.0
        %514 = vmatpush1.msra.mxu0 %v364
        %515 = vmatprep.subr.mxu0 0.0
        %516 = vmatpush1.msra.mxu0 %v363
        %517 = vmatprep.subr.mxu0 0.0
        %518 = vmatpush1.msra.mxu0 %v362
        %519 = vmatprep.subr.mxu0 0.0
        %520 = vmatpush1.msra.mxu0 %v361
        %521 = vmatprep.subr.mxu0 0.0
        %522 = vmatpush1.msra.mxu0 %v360
        %523 = vmatprep.subr.mxu0 0.0
        %524 = vmatpush1.msra.mxu0 %v359
        %525 = vmatprep.subr.mxu0 0.0
        %526 = vmatpush2.msra.mxu0 0.0
        %527 = vmatprep.subr.mxu0 0.0
        %528 = vmatpush2.msra.mxu0 0.0
        %529 = vmatprep.subr.mxu0 0.0
        %530 = vmatpush2.msra.mxu0 0.0
        %531 = vmatprep.subr.mxu0 0.0
        %532 = vmatpush2.msra.mxu0 0.0
        %533 = vmatprep.subr.mxu0 0.0
        %534 = vmatpush2.msra.mxu0 0.0
        %535 = vmatprep.subr.mxu0 0.0
        %536 = vmatpush2.msra.mxu0 0.0
        %537 = vmatprep.subr.mxu0 0.0
        %538 = vmatpush2.msra.mxu0 0.0
        %539 = vmatprep.subr.mxu0 0.0
        %540 = vmatpush2.msra.mxu0 0.0
        %541 = vmatprep.subr.mxu0 0.0
        %542 = vmatpush2.msra.mxu0 0.0
        %543 = vmatprep.subr.mxu0 0.0
        %544 = vmatpush2.msra.mxu0 0.0
        %545 = vmatprep.subr.mxu0 0.0
        %546 = vmatpush2.msra.mxu0 0.0
        %547 = vmatprep.subr.mxu0 0.0
        %548 = vmatpush2.msra.mxu0 0.0
        %549 = vmatprep.subr.mxu0 0.0
        %550 = vmatpush2.msra.mxu0 0.0
        %551 = vmatprep.subr.mxu0 0.0
        %552 = vmatpush2.msra.mxu0 0.0
        %553 = vmatprep.subr.mxu0 0.0
        %554 = vmatpush2.msra.mxu0 0.0
        %555 = vmatprep.subr.mxu0 0.0
        %556 = vmatpush2.msra.mxu0 0.0
        %557 = vmatprep.mubr.f32.mxu0 0.0
        %558 = vmatmul.mubr.f32.gmra.mxu0 %v487
        %v559 = vpop.f32.mrf.mxu0
        %v560 = vadd.f32 %v471, %v559
        %v561 = vpop.f32.mrf.mxu0
        %562 = vmatprep.mubr.f32.mxu0 0.0
        %563 = vmatmul.mubr.f32.gmra.mxu0 %v489
        %v564 = vpop.f32.mrf.mxu0
        %v565 = vadd.f32 %v476, %v564
        %v566 = vpop.f32.mrf.mxu0
        %567 = vmatprep.mubr.f32.mxu0 0.0
        %568 = vmatmul.mubr.f32.gmra.mxu0 %v488
        %v569 = vpop.f32.mrf.mxu0
        %v570 = vadd.f32 %v481, %v569
        %v571 = vpop.f32.mrf.mxu0
        %572 = vdwg.mxu0
        %s573 = scalar_lea.vmem [#allocation3], 256
        %v574 = vld [vmem:[%s573] sm:$0xff]
        %v575 = vld [vmem:[%s573 + $0x8] sm:$0xff]
        %v576 = vld [vmem:[%s573 + $0x10] sm:$0xff]
        %v577 = vld [vmem:[%s573 + $0x18] sm:$0xff]
        %v578 = vld [vmem:[%s573 + $0x20] sm:$0xff]
        %v579 = vld [vmem:[%s573 + $0x28] sm:$0xff]
        %v580 = vld [vmem:[%s573 + $0x30] sm:$0xff]
        %v581 = vld [vmem:[%s573 + $0x38] sm:$0xff]
        %v582 = vld [vmem:[%s573 + $0x40] sm:$0xff]
        %v583 = vld [vmem:[%s573 + $0x48] sm:$0xff]
        %v584 = vld [vmem:[%s573 + $0x50] sm:$0xff]
        %v585 = vld [vmem:[%s573 + $0x58] sm:$0xff]
        %v586 = vld [vmem:[%s573 + $0x60] sm:$0xff]
        %v587 = vld [vmem:[%s573 + $0x68] sm:$0xff]
        %v588 = vld [vmem:[%s573 + $0x70] sm:$0xff]
        %v589 = vld [vmem:[%s573 + $0x78] sm:$0xff]
        %vm590 = vcmask 1041408
        %v591 = vrot.slane %v356, 6
        %v592 = vrot.slane %v348, 6
        %v593 = vsel %vm590, %v591, %v592
        %v594 = vrot.slane %v349, 6
        %v595 = vsel %vm590, %v592, %v594
        %599 = vmatprep.subr.mxu0 0.0
        %600 = vmatpush1.msra.mxu0 %v589
        %601 = vmatprep.subr.mxu0 0.0
        %602 = vmatpush1.msra.mxu0 %v588
        %603 = vmatprep.subr.mxu0 0.0
        %604 = vmatpush1.msra.mxu0 %v587
        %605 = vmatprep.subr.mxu0 0.0
        %606 = vmatpush1.msra.mxu0 %v586
        %607 = vmatprep.subr.mxu0 0.0
        %608 = vmatpush1.msra.mxu0 %v585
        %609 = vmatprep.subr.mxu0 0.0
        %610 = vmatpush1.msra.mxu0 %v584
        %611 = vmatprep.subr.mxu0 0.0
        %612 = vmatpush1.msra.mxu0 %v583
        %613 = vmatprep.subr.mxu0 0.0
        %614 = vmatpush1.msra.mxu0 %v582
        %615 = vmatprep.subr.mxu0 0.0
        %616 = vmatpush1.msra.mxu0 %v581
        %617 = vmatprep.subr.mxu0 0.0
        %618 = vmatpush1.msra.mxu0 %v580
        %619 = vmatprep.subr.mxu0 0.0
        %620 = vmatpush1.msra.mxu0 %v579
        %621 = vmatprep.subr.mxu0 0.0
        %622 = vmatpush1.msra.mxu0 %v578
        %623 = vmatprep.subr.mxu0 0.0
        %624 = vmatpush1.msra.mxu0 %v577
        %625 = vmatprep.subr.mxu0 0.0
        %626 = vmatpush1.msra.mxu0 %v576
        %627 = vmatprep.subr.mxu0 0.0
        %628 = vmatpush1.msra.mxu0 %v575
        %629 = vmatprep.subr.mxu0 0.0
        %630 = vmatpush1.msra.mxu0 %v574
        %631 = vmatprep.subr.mxu0 0.0
        %632 = vmatpush2.msra.mxu0 0.0
        %633 = vmatprep.subr.mxu0 0.0
        %634 = vmatpush2.msra.mxu0 0.0
        %635 = vmatprep.subr.mxu0 0.0
        %636 = vmatpush2.msra.mxu0 0.0
        %637 = vmatprep.subr.mxu0 0.0
        %638 = vmatpush2.msra.mxu0 0.0
        %639 = vmatprep.subr.mxu0 0.0
        %640 = vmatpush2.msra.mxu0 0.0
        %641 = vmatprep.subr.mxu0 0.0
        %642 = vmatpush2.msra.mxu0 0.0
        %643 = vmatprep.subr.mxu0 0.0
        %644 = vmatpush2.msra.mxu0 0.0
        %645 = vmatprep.subr.mxu0 0.0
        %646 = vmatpush2.msra.mxu0 0.0
        %647 = vmatprep.subr.mxu0 0.0
        %648 = vmatpush2.msra.mxu0 0.0
        %649 = vmatprep.subr.mxu0 0.0
        %650 = vmatpush2.msra.mxu0 0.0
        %651 = vmatprep.subr.mxu0 0.0
        %652 = vmatpush2.msra.mxu0 0.0
        %653 = vmatprep.subr.mxu0 0.0
        %654 = vmatpush2.msra.mxu0 0.0
        %655 = vmatprep.subr.mxu0 0.0
        %656 = vmatpush2.msra.mxu0 0.0
        %657 = vmatprep.subr.mxu0 0.0
        %658 = vmatpush2.msra.mxu0 0.0
        %659 = vmatprep.subr.mxu0 0.0
        %660 = vmatpush2.msra.mxu0 0.0
        %661 = vmatprep.subr.mxu0 0.0
        %662 = vmatpush2.msra.mxu0 0.0
        %663 = vmatprep.mubr.f32.mxu0 0.0
        %664 = vmatmul.mubr.f32.gmra.mxu0 %v593
        %v665 = vpop.f32.mrf.mxu0
        %v666 = vadd.f32 0.0, %v665
        %v667 = vpop.f32.mrf.mxu0
        %668 = vmatprep.mubr.f32.mxu0 0.0
        %669 = vmatmul.mubr.f32.gmra.mxu0 %v595
        %v670 = vpop.f32.mrf.mxu0
        %v671 = vadd.f32 0.0, %v670
        %v672 = vpop.f32.mrf.mxu0
        %673 = vmatprep.mubr.f32.mxu0 0.0
        %674 = vmatmul.mubr.f32.gmra.mxu0 %v594
        %v675 = vpop.f32.mrf.mxu0
        %v676 = vadd.f32 0.0, %v675
        %v677 = vpop.f32.mrf.mxu0
        %678 = vdwg.mxu0
        %v679 = vadd.f32 %v560, %v666
        %v680 = vadd.f32 %v565, %v671
        %v681 = vadd.f32 %v570, %v676
        %v682 = vld [vmem:[%s2] sm:$0x1]
        %v684 = vlaneseq
        %v685 = vshrl.u32 %v684, 7
        %v686 = vsub.s32 0, %v685
        %v687 = vrot.slane %v682, %v686
        %v689 = vadd.f32 %v679, %v687
        %v690 = vadd.f32 %v680, %v687
        %v691 = vadd.f32 %v681, %v687
        %v692 = vmul.f32 %v689, 0.01
        %v693 = vmul.f32 %v690, 0.01
        %v694 = vmul.f32 %v691, 0.01
        %v695 = vmax.f32 %v689, %v692
        %v696 = vmax.f32 %v690, %v693
        %v697 = vmax.f32 %v691, %v694
        %v698 = vlaneseq
        %v699 = vshrl.u32 %v698, 7
        %v700 = vadd.s32 %v699, 8
        %v701 = vadd.s32 %v699, 16
        %s702 = smul.u32 %s25, 16
        %v703 = vstv %s702
        %v704 = vadd.s32 %v699, %v703
        %v705 = vadd.s32 %v700, %v703
        %v706 = vadd.s32 %v701, %v703
        %vm707 = vcmp.ge.s32.totalorder %v704, 2
        %vm708 = vcmp.ge.s32.totalorder %v705, 2
        %vm709 = vcmp.ge.s32.totalorder %v706, 2
        %v710 = vsel %vm707, 1, 0
        %v711 = vsel %vm708, 1, 0
        %v712 = vsel %vm709, 1, 0
        %vm713 = vcmp.eq.s32.totalorder %v710, 1
        %vm714 = vcmp.eq.s32.totalorder %v711, 1
        %vm715 = vcmp.eq.s32.totalorder %v712, 1
        %v716 = vsel %vm713, %v695, 0.0
        %v717 = vsel %vm714, %v696, 0.0
        %v718 = vsel %vm715, %v697, 0.0
        %v719 = vld [vmem:[#allocation5] sm:$0xff]
        %v720 = vld [vmem:[#allocation5 + $0x8] sm:$0xff]
        %v721 = vld [vmem:[#allocation5 + $0x10] sm:$0xff]
        %v722 = vld [vmem:[#allocation5 + $0x18] sm:$0xff]
        %v723 = vld [vmem:[#allocation5 + $0x20] sm:$0xff]
        %v724 = vld [vmem:[#allocation5 + $0x28] sm:$0xff]
        %v725 = vld [vmem:[#allocation5 + $0x30] sm:$0xff]
        %v726 = vld [vmem:[#allocation5 + $0x38] sm:$0xff]
        %v727 = vld [vmem:[#allocation5 + $0x40] sm:$0xff]
        %v728 = vld [vmem:[#allocation5 + $0x48] sm:$0xff]
        %v729 = vld [vmem:[#allocation5 + $0x50] sm:$0xff]
        %v730 = vld [vmem:[#allocation5 + $0x58] sm:$0xff]
        %v731 = vld [vmem:[#allocation5 + $0x60] sm:$0xff]
        %v732 = vld [vmem:[#allocation5 + $0x68] sm:$0xff]
        %v733 = vld [vmem:[#allocation5 + $0x70] sm:$0xff]
        %v734 = vld [vmem:[#allocation5 + $0x78] sm:$0xff]
        %s735 = scalar_lea.vmem [#allocation5], 128
        %v736 = vld [vmem:[%s735] sm:$0xff]
        %v737 = vld [vmem:[%s735 + $0x8] sm:$0xff]
        %v738 = vld [vmem:[%s735 + $0x10] sm:$0xff]
        %v739 = vld [vmem:[%s735 + $0x18] sm:$0xff]
        %v740 = vld [vmem:[%s735 + $0x20] sm:$0xff]
        %v741 = vld [vmem:[%s735 + $0x28] sm:$0xff]
        %v742 = vld [vmem:[%s735 + $0x30] sm:$0xff]
        %v743 = vld [vmem:[%s735 + $0x38] sm:$0xff]
        %v744 = vld [vmem:[%s735 + $0x40] sm:$0xff]
        %v745 = vld [vmem:[%s735 + $0x48] sm:$0xff]
        %v746 = vld [vmem:[%s735 + $0x50] sm:$0xff]
        %v747 = vld [vmem:[%s735 + $0x58] sm:$0xff]
        %v748 = vld [vmem:[%s735 + $0x60] sm:$0xff]
        %v749 = vld [vmem:[%s735 + $0x68] sm:$0xff]
        %v750 = vld [vmem:[%s735 + $0x70] sm:$0xff]
        %v751 = vld [vmem:[%s735 + $0x78] sm:$0xff]
        %vm755 = vcmask 1046528
        %v756 = vrot.slane %v716, 1
        %v757 = vrot.slane %v717, 1
        %v758 = vsel %vm755, %v756, %v757
        %v759 = vrot.slane %v718, 1
        %v760 = vsel %vm755, %v757, %v759
        %763 = vmatprep.subr.mxu0 0.0
        %764 = vmatpush1.msra.mxu0 %v751
        %765 = vmatprep.subr.mxu0 0.0
        %766 = vmatpush1.msra.mxu0 %v750
        %767 = vmatprep.subr.mxu0 0.0
        %768 = vmatpush1.msra.mxu0 %v749
        %769 = vmatprep.subr.mxu0 0.0
        %770 = vmatpush1.msra.mxu0 %v748
        %771 = vmatprep.subr.mxu0 0.0
        %772 = vmatpush1.msra.mxu0 %v747
        %773 = vmatprep.subr.mxu0 0.0
        %774 = vmatpush1.msra.mxu0 %v746
        %775 = vmatprep.subr.mxu0 0.0
        %776 = vmatpush1.msra.mxu0 %v745
        %777 = vmatprep.subr.mxu0 0.0
        %778 = vmatpush1.msra.mxu0 %v744
        %779 = vmatprep.subr.mxu0 0.0
        %780 = vmatpush1.msra.mxu0 %v743
        %781 = vmatprep.subr.mxu0 0.0
        %782 = vmatpush1.msra.mxu0 %v742
        %783 = vmatprep.subr.mxu0 0.0
        %784 = vmatpush1.msra.mxu0 %v741
        %785 = vmatprep.subr.mxu0 0.0
        %786 = vmatpush1.msra.mxu0 %v740
        %787 = vmatprep.subr.mxu0 0.0
        %788 = vmatpush1.msra.mxu0 %v739
        %789 = vmatprep.subr.mxu0 0.0
        %790 = vmatpush1.msra.mxu0 %v738
        %791 = vmatprep.subr.mxu0 0.0
        %792 = vmatpush1.msra.mxu0 %v737
        %793 = vmatprep.subr.mxu0 0.0
        %794 = vmatpush1.msra.mxu0 %v736
        %795 = vmatprep.subr.mxu0 0.0
        %796 = vmatpush2.msra.mxu0 0.0
        %797 = vmatprep.subr.mxu0 0.0
        %798 = vmatpush2.msra.mxu0 0.0
        %799 = vmatprep.subr.mxu0 0.0
        %800 = vmatpush2.msra.mxu0 0.0
        %801 = vmatprep.subr.mxu0 0.0
        %802 = vmatpush2.msra.mxu0 0.0
        %803 = vmatprep.subr.mxu0 0.0
        %804 = vmatpush2.msra.mxu0 0.0
        %805 = vmatprep.subr.mxu0 0.0
        %806 = vmatpush2.msra.mxu0 0.0
        %807 = vmatprep.subr.mxu0 0.0
        %808 = vmatpush2.msra.mxu0 0.0
        %809 = vmatprep.subr.mxu0 0.0
        %810 = vmatpush2.msra.mxu0 0.0
        %811 = vmatprep.subr.mxu0 0.0
        %812 = vmatpush2.msra.mxu0 0.0
        %813 = vmatprep.subr.mxu0 0.0
        %814 = vmatpush2.msra.mxu0 0.0
        %815 = vmatprep.subr.mxu0 0.0
        %816 = vmatpush2.msra.mxu0 0.0
        %817 = vmatprep.subr.mxu0 0.0
        %818 = vmatpush2.msra.mxu0 0.0
        %819 = vmatprep.subr.mxu0 0.0
        %820 = vmatpush2.msra.mxu0 0.0
        %821 = vmatprep.subr.mxu0 0.0
        %822 = vmatpush2.msra.mxu0 0.0
        %823 = vmatprep.subr.mxu0 0.0
        %824 = vmatpush2.msra.mxu0 0.0
        %825 = vmatprep.subr.mxu0 0.0
        %826 = vmatpush2.msra.mxu0 0.0
        %827 = vmatprep.mubr.f32.mxu0 0.0
        %828 = vmatmul.mubr.f32.gmra.mxu0 %v758
        %v829 = vpop.f32.mrf.mxu0
        %v830 = vadd.f32 0.0, %v829
        %v831 = vpop.f32.mrf.mxu0
        %832 = vmatprep.mubr.f32.mxu0 0.0
        %833 = vmatmul.mubr.f32.gmra.mxu0 %v760
        %v834 = vpop.f32.mrf.mxu0
        %v835 = vadd.f32 0.0, %v834
        %v836 = vpop.f32.mrf.mxu0
        %837 = vdwg.mxu0
        %838 = vmatprep.subr.mxu0 0.0
        %839 = vmatpush1.msra.mxu0 %v734
        %840 = vmatprep.subr.mxu0 0.0
        %841 = vmatpush1.msra.mxu0 %v733
        %842 = vmatprep.subr.mxu0 0.0
        %843 = vmatpush1.msra.mxu0 %v732
        %844 = vmatprep.subr.mxu0 0.0
        %845 = vmatpush1.msra.mxu0 %v731
        %846 = vmatprep.subr.mxu0 0.0
        %847 = vmatpush1.msra.mxu0 %v730
        %848 = vmatprep.subr.mxu0 0.0
        %849 = vmatpush1.msra.mxu0 %v729
        %850 = vmatprep.subr.mxu0 0.0
        %851 = vmatpush1.msra.mxu0 %v728
        %852 = vmatprep.subr.mxu0 0.0
        %853 = vmatpush1.msra.mxu0 %v727
        %854 = vmatprep.subr.mxu0 0.0
        %855 = vmatpush1.msra.mxu0 %v726
        %856 = vmatprep.subr.mxu0 0.0
        %857 = vmatpush1.msra.mxu0 %v725
        %858 = vmatprep.subr.mxu0 0.0
        %859 = vmatpush1.msra.mxu0 %v724
        %860 = vmatprep.subr.mxu0 0.0
        %861 = vmatpush1.msra.mxu0 %v723
        %862 = vmatprep.subr.mxu0 0.0
        %863 = vmatpush1.msra.mxu0 %v722
        %864 = vmatprep.subr.mxu0 0.0
        %865 = vmatpush1.msra.mxu0 %v721
        %866 = vmatprep.subr.mxu0 0.0
        %867 = vmatpush1.msra.mxu0 %v720
        %868 = vmatprep.subr.mxu0 0.0
        %869 = vmatpush1.msra.mxu0 %v719
        %870 = vmatprep.subr.mxu0 0.0
        %871 = vmatpush2.msra.mxu0 0.0
        %872 = vmatprep.subr.mxu0 0.0
        %873 = vmatpush2.msra.mxu0 0.0
        %874 = vmatprep.subr.mxu0 0.0
        %875 = vmatpush2.msra.mxu0 0.0
        %876 = vmatprep.subr.mxu0 0.0
        %877 = vmatpush2.msra.mxu0 0.0
        %878 = vmatprep.subr.mxu0 0.0
        %879 = vmatpush2.msra.mxu0 0.0
        %880 = vmatprep.subr.mxu0 0.0
        %881 = vmatpush2.msra.mxu0 0.0
        %882 = vmatprep.subr.mxu0 0.0
        %883 = vmatpush2.msra.mxu0 0.0
        %884 = vmatprep.subr.mxu0 0.0
        %885 = vmatpush2.msra.mxu0 0.0
        %886 = vmatprep.subr.mxu0 0.0
        %887 = vmatpush2.msra.mxu0 0.0
        %888 = vmatprep.subr.mxu0 0.0
        %889 = vmatpush2.msra.mxu0 0.0
        %890 = vmatprep.subr.mxu0 0.0
        %891 = vmatpush2.msra.mxu0 0.0
        %892 = vmatprep.subr.mxu0 0.0
        %893 = vmatpush2.msra.mxu0 0.0
        %894 = vmatprep.subr.mxu0 0.0
        %895 = vmatpush2.msra.mxu0 0.0
        %896 = vmatprep.subr.mxu0 0.0
        %897 = vmatpush2.msra.mxu0 0.0
        %898 = vmatprep.subr.mxu0 0.0
        %899 = vmatpush2.msra.mxu0 0.0
        %900 = vmatprep.subr.mxu0 0.0
        %901 = vmatpush2.msra.mxu0 0.0
        %902 = vmatprep.mubr.f32.mxu0 0.0
        %903 = vmatmul.mubr.f32.gmra.mxu0 %v716
        %v904 = vpop.f32.mrf.mxu0
        %v905 = vadd.f32 %v830, %v904
        %v906 = vpop.f32.mrf.mxu0
        %907 = vmatprep.mubr.f32.mxu0 0.0
        %908 = vmatmul.mubr.f32.gmra.mxu0 %v717
        %v909 = vpop.f32.mrf.mxu0
        %v910 = vadd.f32 %v835, %v909
        %v911 = vpop.f32.mrf.mxu0
        %912 = vdwg.mxu0
        %s913 = scalar_lea.vmem [#allocation5], 256
        %v914 = vld [vmem:[%s913] sm:$0xff]
        %v915 = vld [vmem:[%s913 + $0x8] sm:$0xff]
        %v916 = vld [vmem:[%s913 + $0x10] sm:$0xff]
        %v917 = vld [vmem:[%s913 + $0x18] sm:$0xff]
        %v918 = vld [vmem:[%s913 + $0x20] sm:$0xff]
        %v919 = vld [vmem:[%s913 + $0x28] sm:$0xff]
        %v920 = vld [vmem:[%s913 + $0x30] sm:$0xff]
        %v921 = vld [vmem:[%s913 + $0x38] sm:$0xff]
        %v922 = vld [vmem:[%s913 + $0x40] sm:$0xff]
        %v923 = vld [vmem:[%s913 + $0x48] sm:$0xff]
        %v924 = vld [vmem:[%s913 + $0x50] sm:$0xff]
        %v925 = vld [vmem:[%s913 + $0x58] sm:$0xff]
        %v926 = vld [vmem:[%s913 + $0x60] sm:$0xff]
        %v927 = vld [vmem:[%s913 + $0x68] sm:$0xff]
        %v928 = vld [vmem:[%s913 + $0x70] sm:$0xff]
        %v929 = vld [vmem:[%s913 + $0x78] sm:$0xff]
        %vm930 = vcmask 1045504
        %v931 = vrot.slane %v716, 2
        %v932 = vrot.slane %v717, 2
        %v933 = vsel %vm930, %v931, %v932
        %v934 = vrot.slane %v718, 2
        %v935 = vsel %vm930, %v932, %v934
        %938 = vmatprep.subr.mxu0 0.0
        %939 = vmatpush1.msra.mxu0 %v929
        %940 = vmatprep.subr.mxu0 0.0
        %941 = vmatpush1.msra.mxu0 %v928
        %942 = vmatprep.subr.mxu0 0.0
        %943 = vmatpush1.msra.mxu0 %v927
        %944 = vmatprep.subr.mxu0 0.0
        %945 = vmatpush1.msra.mxu0 %v926
        %946 = vmatprep.subr.mxu0 0.0
        %947 = vmatpush1.msra.mxu0 %v925
        %948 = vmatprep.subr.mxu0 0.0
        %949 = vmatpush1.msra.mxu0 %v924
        %950 = vmatprep.subr.mxu0 0.0
        %951 = vmatpush1.msra.mxu0 %v923
        %952 = vmatprep.subr.mxu0 0.0
        %953 = vmatpush1.msra.mxu0 %v922
        %954 = vmatprep.subr.mxu0 0.0
        %955 = vmatpush1.msra.mxu0 %v921
        %956 = vmatprep.subr.mxu0 0.0
        %957 = vmatpush1.msra.mxu0 %v920
        %958 = vmatprep.subr.mxu0 0.0
        %959 = vmatpush1.msra.mxu0 %v919
        %960 = vmatprep.subr.mxu0 0.0
        %961 = vmatpush1.msra.mxu0 %v918
        %962 = vmatprep.subr.mxu0 0.0
        %963 = vmatpush1.msra.mxu0 %v917
        %964 = vmatprep.subr.mxu0 0.0
        %965 = vmatpush1.msra.mxu0 %v916
        %966 = vmatprep.subr.mxu0 0.0
        %967 = vmatpush1.msra.mxu0 %v915
        %968 = vmatprep.subr.mxu0 0.0
        %969 = vmatpush1.msra.mxu0 %v914
        %970 = vmatprep.subr.mxu0 0.0
        %971 = vmatpush2.msra.mxu0 0.0
        %972 = vmatprep.subr.mxu0 0.0
        %973 = vmatpush2.msra.mxu0 0.0
        %974 = vmatprep.subr.mxu0 0.0
        %975 = vmatpush2.msra.mxu0 0.0
        %976 = vmatprep.subr.mxu0 0.0
        %977 = vmatpush2.msra.mxu0 0.0
        %978 = vmatprep.subr.mxu0 0.0
        %979 = vmatpush2.msra.mxu0 0.0
        %980 = vmatprep.subr.mxu0 0.0
        %981 = vmatpush2.msra.mxu0 0.0
        %982 = vmatprep.subr.mxu0 0.0
        %983 = vmatpush2.msra.mxu0 0.0
        %984 = vmatprep.subr.mxu0 0.0
        %985 = vmatpush2.msra.mxu0 0.0
        %986 = vmatprep.subr.mxu0 0.0
        %987 = vmatpush2.msra.mxu0 0.0
        %988 = vmatprep.subr.mxu0 0.0
        %989 = vmatpush2.msra.mxu0 0.0
        %990 = vmatprep.subr.mxu0 0.0
        %991 = vmatpush2.msra.mxu0 0.0
        %992 = vmatprep.subr.mxu0 0.0
        %993 = vmatpush2.msra.mxu0 0.0
        %994 = vmatprep.subr.mxu0 0.0
        %995 = vmatpush2.msra.mxu0 0.0
        %996 = vmatprep.subr.mxu0 0.0
        %997 = vmatpush2.msra.mxu0 0.0
        %998 = vmatprep.subr.mxu0 0.0
        %999 = vmatpush2.msra.mxu0 0.0
        %1000 = vmatprep.subr.mxu0 0.0
        %1001 = vmatpush2.msra.mxu0 0.0
        %1002 = vmatprep.mubr.f32.mxu0 0.0
        %1003 = vmatmul.mubr.f32.gmra.mxu0 %v933
        %v1004 = vpop.f32.mrf.mxu0
        %v1005 = vadd.f32 0.0, %v1004
        %v1006 = vpop.f32.mrf.mxu0
        %1007 = vmatprep.mubr.f32.mxu0 0.0
        %1008 = vmatmul.mubr.f32.gmra.mxu0 %v935
        %v1009 = vpop.f32.mrf.mxu0
        %v1010 = vadd.f32 0.0, %v1009
        %v1011 = vpop.f32.mrf.mxu0
        %1012 = vdwg.mxu0
        %v1013 = vadd.f32 %v905, %v1005
        %v1014 = vadd.f32 %v910, %v1010
        %v1015 = vld [vmem:[%s4] sm:$0x1]
        %v1017 = vlaneseq
        %v1018 = vshrl.u32 %v1017, 7
        %v1019 = vsub.s32 0, %v1018
        %v1020 = vrot.slane %v1015, %v1019
        %v1022 = vadd.f32 %v1013, %v1020
        %v1023 = vadd.f32 %v1014, %v1020
        %v1024 = vmul.f32 %v1022, 0.01
        %v1025 = vmul.f32 %v1023, 0.01
        %v1026 = vmax.f32 %v1022, %v1024
        %v1027 = vmax.f32 %v1023, %v1025
        %v1028 = vld [vmem:[%s5] sm:$0xff]
        %v1029 = vld [vmem:[%s5 + $0x8] sm:$0xff]
        %v1030 = vld [vmem:[%s5 + $0x10] sm:$0xff]
        %v1031 = vld [vmem:[%s5 + $0x18] sm:$0xff]
        %v1032 = vld [vmem:[%s5 + $0x20] sm:$0xff]
        %v1033 = vld [vmem:[%s5 + $0x28] sm:$0xff]
        %v1034 = vld [vmem:[%s5 + $0x30] sm:$0xff]
        %v1035 = vld [vmem:[%s5 + $0x38] sm:$0xff]
        %v1036 = vld [vmem:[%s5 + $0x40] sm:$0xff]
        %v1037 = vld [vmem:[%s5 + $0x48] sm:$0xff]
        %v1038 = vld [vmem:[%s5 + $0x50] sm:$0xff]
        %v1039 = vld [vmem:[%s5 + $0x58] sm:$0xff]
        %v1040 = vld [vmem:[%s5 + $0x60] sm:$0xff]
        %v1041 = vld [vmem:[%s5 + $0x68] sm:$0xff]
        %v1042 = vld [vmem:[%s5 + $0x70] sm:$0xff]
        %v1043 = vld [vmem:[%s5 + $0x78] sm:$0xff]
        %v1044 = vld [vmem:[%s6] sm:$0x1]
        %v1046 = vlaneseq
        %v1047 = vshrl.u32 %v1046, 7
        %v1048 = vsub.s32 0, %v1047
        %v1049 = vrot.slane %v1044, %v1048
        %1051 = vmatprep.subr.mxu0 0.0
        %1052 = vmatpush1.msra.mxu0 %v1043
        %1053 = vmatprep.subr.mxu0 0.0
        %1054 = vmatpush1.msra.mxu0 %v1042
        %1055 = vmatprep.subr.mxu0 0.0
        %1056 = vmatpush1.msra.mxu0 %v1041
        %1057 = vmatprep.subr.mxu0 0.0
        %1058 = vmatpush1.msra.mxu0 %v1040
        %1059 = vmatprep.subr.mxu0 0.0
        %1060 = vmatpush1.msra.mxu0 %v1039
        %1061 = vmatprep.subr.mxu0 0.0
        %1062 = vmatpush1.msra.mxu0 %v1038
        %1063 = vmatprep.subr.mxu0 0.0
        %1064 = vmatpush1.msra.mxu0 %v1037
        %1065 = vmatprep.subr.mxu0 0.0
        %1066 = vmatpush1.msra.mxu0 %v1036
        %1067 = vmatprep.subr.mxu0 0.0
        %1068 = vmatpush1.msra.mxu0 %v1035
        %1069 = vmatprep.subr.mxu0 0.0
        %1070 = vmatpush1.msra.mxu0 %v1034
        %1071 = vmatprep.subr.mxu0 0.0
        %1072 = vmatpush1.msra.mxu0 %v1033
        %1073 = vmatprep.subr.mxu0 0.0
        %1074 = vmatpush1.msra.mxu0 %v1032
        %1075 = vmatprep.subr.mxu0 0.0
        %1076 = vmatpush1.msra.mxu0 %v1031
        %1077 = vmatprep.subr.mxu0 0.0
        %1078 = vmatpush1.msra.mxu0 %v1030
        %1079 = vmatprep.subr.mxu0 0.0
        %1080 = vmatpush1.msra.mxu0 %v1029
        %1081 = vmatprep.subr.mxu0 0.0
        %1082 = vmatpush1.msra.mxu0 %v1028
        %1083 = vmatprep.subr.mxu0 0.0
        %1084 = vmatpush2.msra.mxu0 0.0
        %1085 = vmatprep.subr.mxu0 0.0
        %1086 = vmatpush2.msra.mxu0 0.0
        %1087 = vmatprep.subr.mxu0 0.0
        %1088 = vmatpush2.msra.mxu0 0.0
        %1089 = vmatprep.subr.mxu0 0.0
        %1090 = vmatpush2.msra.mxu0 0.0
        %1091 = vmatprep.subr.mxu0 0.0
        %1092 = vmatpush2.msra.mxu0 0.0
        %1093 = vmatprep.subr.mxu0 0.0
        %1094 = vmatpush2.msra.mxu0 0.0
        %1095 = vmatprep.subr.mxu0 0.0
        %1096 = vmatpush2.msra.mxu0 0.0
        %1097 = vmatprep.subr.mxu0 0.0
        %1098 = vmatpush2.msra.mxu0 0.0
        %1099 = vmatprep.subr.mxu0 0.0
        %1100 = vmatpush2.msra.mxu0 0.0
        %1101 = vmatprep.subr.mxu0 0.0
        %1102 = vmatpush2.msra.mxu0 0.0
        %1103 = vmatprep.subr.mxu0 0.0
        %1104 = vmatpush2.msra.mxu0 0.0
        %1105 = vmatprep.subr.mxu0 0.0
        %1106 = vmatpush2.msra.mxu0 0.0
        %1107 = vmatprep.subr.mxu0 0.0
        %1108 = vmatpush2.msra.mxu0 0.0
        %1109 = vmatprep.subr.mxu0 0.0
        %1110 = vmatpush2.msra.mxu0 0.0
        %1111 = vmatprep.subr.mxu0 0.0
        %1112 = vmatpush2.msra.mxu0 0.0
        %1113 = vmatprep.subr.mxu0 0.0
        %1114 = vmatpush2.msra.mxu0 0.0
        %1115 = vmatprep.mubr.f32.mxu0 0.0
        %1116 = vmatmul.mubr.f32.gmra.mxu0 %v348
        %v1117 = vpop.f32.mrf.mxu0
        %v1118 = vadd.f32 %v1049, %v1117
        %v1119 = vpop.f32.mrf.mxu0
        %1120 = vmatprep.mubr.f32.mxu0 0.0
        %1121 = vmatmul.mubr.f32.gmra.mxu0 %v349
        %v1122 = vpop.f32.mrf.mxu0
        %v1123 = vadd.f32 %v1049, %v1122
        %v1124 = vpop.f32.mrf.mxu0
        %1125 = vdwg.mxu0
        %v1126 = vadd.f32 %v1026, %v1118
        %v1127 = vadd.f32 %v1027, %v1123
        %1128 = vst [vmem:[%s346] sm:$0xff] %v1126
        %1129 = vst [vmem:[%s346 + $0x8] sm:$0xff] %v1127
        %s1130 = smul.u32 2, %s25
        %p1131 = scmp.lt.s32.totalorder %s24, 1
        %s1132 = scalar_select %p1131, %s24, 1
        %p1133 = scmp.lt.s32.totalorder %s1130, 5
        %s1134 = scalar_select %p1133, %s1130, 5
        %s1135 = smul.addr %s1132, 6
        %s1136 = sadd.s32 %s1134, %s1135
        %s1137 = smul.addr %s1136, 8
        %s1138 = scalar_lea.vmem %s7, %s1137
        // Predicated region
        $region61: #{causal_cnn.4} parent=47 // pred_check
          %p1139 = pneg %p206
        $region62: #{causal_cnn.4} parent=47 // pred_check_branch
          %1141 = sbr.rel (%p1139) target = $region64
        $region63: #{causal_cnn.4} parent=47 // pred_region
          %s1142 = smul.u32 2, %s25
        $region64: #{causal_cnn.4} parent=47 // pred_fallthru
          _
      $region48: #{causal_cnn.4} parent=5 // pred_fallthru
        _
      %p1143 = scmp.le.s32.totalorder 2, %s15
      // Predicated region
      $region65: #{causal_cnn.4} parent=5 // pred_check
        %p1144 = pneg %p1143
      $region66: #{causal_cnn.4} parent=5 // pred_check_branch
        %1146 = sbr.rel (%p1144) target = $region68
      $region67: #{causal_cnn.4} parent=5 // pred_region
        %s1147 = ssub.s32 %s15, 2
        // Predicated region
        $region69: #{causal_cnn.4} parent=67 // pred_check
          %p1148 = pneg %p212
        $region70: #{causal_cnn.4} parent=67 // pred_check_branch
          %1150 = sbr.rel (%p1148) target = $region72
        $region71: #{causal_cnn.4} parent=67 // pred_region
          %s1151 = smul.u32 2, %s27
          %p1152 = scmp.lt.s32.totalorder %s26, 1
          %s1153 = scalar_select %p1152, %s26, 1
          %p1154 = scmp.lt.s32.totalorder %s1151, 5
          %s1155 = scalar_select %p1154, %s1151, 5
          %s1156 = smul.addr %s1153, 6
          %s1157 = sadd.s32 %s1155, %s1156
          %s1158 = smul.addr %s1157, 8
          %s1159 = scalar_lea.vmem %s7, %s1158
        $region72: #{causal_cnn.4} parent=67 // pred_fallthru
          _
      $region68: #{causal_cnn.4} parent=5 // pred_fallthru
        _
    $region6: #{causal_cnn.4} parent=1 // loop_footer
      %s19 = sadd.s32 1, %s15
    $region7: #{causal_cnn.4} parent=1 // loop_footer_branch
      %14 = sbr.rel target = $region3
    $region8: #{causal_cnn.4} parent=1 // loop_exit
      _
    %1160 = vsyncpa [#allocation4], 1
    %s1161 = scalar_lea.sflag [#allocation4], 1
    %1162 = vsyncpa %s1161, 1
    %1163 = vsyncpa [#allocation6], 1

// kernel: causal_cnn.7
$region0: #{causal_cnn.7}
  #allocation0 [shape = 'u32[]', space=smem, size = 0x4, offset = 0x4, fixed_abs, tag = 'smem constant byte address 0x4 - core index']
  #allocation1 [shape = 'u32[144,128]{1,0:T(1,128)}', space=vmem, size = 0x12000, scoped, tag = 'internal scratch']
  #allocation2 [shape = 'f32[32,128]{1,0:T(8,128)}', space=vmem, size = 0x4000, scoped, tag = 'scratch operand']
  %s0 = inlined_call_operand.vmem [shape: f32[2,48,128], index: 0, kind: input, shape index: {}]
  %s1 = inlined_call_operand.vmem [shape: f32[3,128,128], index: 1, kind: input, shape index: {}]
  %s2 = inlined_call_operand.vmem [shape: f32[1,128], index: 2, kind: input, shape index: {}]
  %s3 = inlined_call_operand.vmem [shape: f32[3,128,128], index: 3, kind: input, shape index: {}]
  %s4 = inlined_call_operand.vmem [shape: f32[1,128], index: 4, kind: input, shape index: {}]
  %s5 = inlined_call_operand.vmem [shape: f32[128,128], index: 5, kind: input, shape index: {}]
  %s6 = inlined_call_operand.vmem [shape: f32[1,128], index: 6, kind: input, shape index: {}]
  %s7 = inlined_call_operand.vmem [shape: f32[2,48,128], index: 7, kind: output, shape index: {}]
  %s8 = sld [smem:[#allocation0]]
  $region65: #{causal_cnn.7} parent=0
    _
  %s10 = ssub.s32 1, %s8
  %s11 = scalar_select 0, %s10, %s8
  loop: start=0, step=1, limit=8
  $region2: #{causal_cnn.7} parent=0 // loop_pre_header
    _
  $region3: #{causal_cnn.7} parent=0 // loop_header
    %s13 = sphi 0, %s17
    %p14 = scmp.ge.s32.totalorder %s13, 8
    %s20 = sphi 0, %s32
    %s21 = sphi 0, %s28
    %s22 = sphi 0, %s20
    %s23 = sphi 0, %s21
    %s24 = sphi 0, %s22
    %s25 = sphi 0, %s23
    %s37 = sphi 0, %s39
    %s40 = sphi 0, %s37
    %s41 = sphi 0, %s40
    %s57 = sphi 0, %s41
    %s61 = sphi 0, %s61
    %s63 = sphi 0, %s61
    %s64 = sphi 0, %s63
    %s78 = sphi 0, %s64
    %s82 = sphi 0, %s82
    %s84 = sphi 0, %s82
    %s85 = sphi 0, %s84
    %s99 = sphi 0, %s85
    %s103 = sphi 0, %s103
    %s105 = sphi 0, %s103
    %s106 = sphi 0, %s105
    %s120 = sphi 0, %s106
    %s124 = sphi 0, %s124
    %s126 = sphi 0, %s124
    %s127 = sphi 0, %s126
    %s141 = sphi 0, %s127
    %s145 = sphi 0, %s145
    %s147 = sphi 0, %s145
    %s148 = sphi 0, %s147
    %s162 = sphi 0, %s148
    %s166 = sphi 0, %s166
    %s168 = sphi 0, %s166
    %s169 = sphi 0, %s168
    %s183 = sphi 0, %s169
    %s191 = sphi 0, %s193
    %s194 = sphi 0, %s191
    %s195 = sphi 0, %s194
    %s211 = sphi 0, %s195
  $region4: #{causal_cnn.7} parent=0 // loop_header_branch
    %16 = sbr.rel (%p14) target = $region8
  $region5: #{causal_cnn.7} parent=0 // loop_body
    %s18 = ssub.s32 %s13, 1
    %s19 = ssub.s32 %s13, 2
    %s26 = sadd.s32 1, %s21
    %p27 = scmp.ge.s32.totalorder %s26, 3
    %s28 = scalar_select %p27, 0, %s26
    %s29 = sadd.s32 1, %s20
    %s30 = scalar_select %p27, %s29, %s20
    %p31 = scmp.ge.s32.totalorder %s30, 2
    %s32 = scalar_select %p31, 0, %s30
    %s33 = ssub.s32 %s20, %s32
    %s34 = ssub.s32 %s21, %s28
    %s35 = sor.u32 %s33, %s34
    %p36 = scmp.eq.s32.totalorder %s35, 0
    %s38 = sadd.s32 %s37, 1
    %s39 = scalar_select %p36, %s37, %s38
    %p42 = pneg %p36
    %p43 = scmp.eq.s32.totalorder %s13, 5
    %p44 = por %p42, %p43
    %p45 = scmp.ne.s32.totalorder %s37, %s40
    %p46 = scmp.eq.s32.totalorder %s13, 0
    %p47 = por %p45, %p46
    %p48 = scmp.ne.s32.totalorder %s37, %s40
    %p49 = scmp.eq.s32.totalorder %s18, 5
    %p50 = por %p48, %p49
    %p51 = scmp.ne.s32.totalorder %s40, %s41
    %p52 = scmp.eq.s32.totalorder %s18, 0
    %p53 = por %p51, %p52
    %p54 = scmp.ne.s32.totalorder %s40, %s41
    %p55 = scmp.eq.s32.totalorder %s19, 5
    %p56 = por %p54, %p55
    %p58 = scmp.ne.s32.totalorder %s41, %s57
    %p59 = scmp.eq.s32.totalorder %s19, 0
    %p60 = por %p58, %p59
    %s62 = sadd.s32 %s61, 1
    %p65 = scmp.eq.s32.totalorder %s13, 5
    %p66 = scmp.ne.s32.totalorder %s61, %s63
    %p67 = scmp.eq.s32.totalorder %s13, 0
    %p68 = por %p66, %p67
    %p69 = scmp.ne.s32.totalorder %s61, %s63
    %p70 = scmp.eq.s32.totalorder %s18, 5
    %p71 = por %p69, %p70
    %p72 = scmp.ne.s32.totalorder %s63, %s64
    %p73 = scmp.eq.s32.totalorder %s18, 0
    %p74 = por %p72, %p73
    %p75 = scmp.ne.s32.totalorder %s63, %s64
    %p76 = scmp.eq.s32.totalorder %s19, 5
    %p77 = por %p75, %p76
    %p79 = scmp.ne.s32.totalorder %s64, %s78
    %p80 = scmp.eq.s32.totalorder %s19, 0
    %p81 = por %p79, %p80
    %s83 = sadd.s32 %s82, 1
    %p86 = scmp.eq.s32.totalorder %s13, 5
    %p87 = scmp.ne.s32.totalorder %s82, %s84
    %p88 = scmp.eq.s32.totalorder %s13, 0
    %p89 = por %p87, %p88
    %p90 = scmp.ne.s32.totalorder %s82, %s84
    %p91 = scmp.eq.s32.totalorder %s18, 5
    %p92 = por %p90, %p91
    %p93 = scmp.ne.s32.totalorder %s84, %s85
    %p94 = scmp.eq.s32.totalorder %s18, 0
    %p95 = por %p93, %p94
    %p96 = scmp.ne.s32.totalorder %s84, %s85
    %p97 = scmp.eq.s32.totalorder %s19, 5
    %p98 = por %p96, %p97
    %p100 = scmp.ne.s32.totalorder %s85, %s99
    %p101 = scmp.eq.s32.totalorder %s19, 0
    %p102 = por %p100, %p101
    %s104 = sadd.s32 %s103, 1
    %p107 = scmp.eq.s32.totalorder %s13, 5
    %p108 = scmp.ne.s32.totalorder %s103, %s105
    %p109 = scmp.eq.s32.totalorder %s13, 0
    %p110 = por %p108, %p109
    %p111 = scmp.ne.s32.totalorder %s103, %s105
    %p112 = scmp.eq.s32.totalorder %s18, 5
    %p113 = por %p111, %p112
    %p114 = scmp.ne.s32.totalorder %s105, %s106
    %p115 = scmp.eq.s32.totalorder %s18, 0
    %p116 = por %p114, %p115
    %p117 = scmp.ne.s32.totalorder %s105, %s106
    %p118 = scmp.eq.s32.totalorder %s19, 5
    %p119 = por %p117, %p118
    %p121 = scmp.ne.s32.totalorder %s106, %s120
    %p122 = scmp.eq.s32.totalorder %s19, 0
    %p123 = por %p121, %p122
    %s125 = sadd.s32 %s124, 1
    %p128 = scmp.eq.s32.totalorder %s13, 5
    %p129 = scmp.ne.s32.totalorder %s124, %s126
    %p130 = scmp.eq.s32.totalorder %s13, 0
    %p131 = por %p129, %p130
    %p132 = scmp.ne.s32.totalorder %s124, %s126
    %p133 = scmp.eq.s32.totalorder %s18, 5
    %p134 = por %p132, %p133
    %p135 = scmp.ne.s32.totalorder %s126, %s127
    %p136 = scmp.eq.s32.totalorder %s18, 0
    %p137 = por %p135, %p136
    %p138 = scmp.ne.s32.totalorder %s126, %s127
    %p139 = scmp.eq.s32.totalorder %s19, 5
    %p140 = por %p138, %p139
    %p142 = scmp.ne.s32.totalorder %s127, %s141
    %p143 = scmp.eq.s32.totalorder %s19, 0
    %p144 = por %p142, %p143
    %s146 = sadd.s32 %s145, 1
    %p149 = scmp.eq.s32.totalorder %s13, 5
    %p150 = scmp.ne.s32.totalorder %s145, %s147
    %p151 = scmp.eq.s32.totalorder %s13, 0
    %p152 = por %p150, %p151
    %p153 = scmp.ne.s32.totalorder %s145, %s147
    %p154 = scmp.eq.s32.totalorder %s18, 5
    %p155 = por %p153, %p154
    %p156 = scmp.ne.s32.totalorder %s147, %s148
    %p157 = scmp.eq.s32.totalorder %s18, 0
    %p158 = por %p156, %p157
    %p159 = scmp.ne.s32.totalorder %s147, %s148
    %p160 = scmp.eq.s32.totalorder %s19, 5
    %p161 = por %p159, %p160
    %p163 = scmp.ne.s32.totalorder %s148, %s162
    %p164 = scmp.eq.s32.totalorder %s19, 0
    %p165 = por %p163, %p164
    %s167 = sadd.s32 %s166, 1
    %p170 = scmp.eq.s32.totalorder %s13, 5
    %p171 = scmp.ne.s32.totalorder %s166, %s168
    %p172 = scmp.eq.s32.totalorder %s13, 0
    %p173 = por %p171, %p172
    %p174 = scmp.ne.s32.totalorder %s166, %s168
    %p175 = scmp.eq.s32.totalorder %s18, 5
    %p176 = por %p174, %p175
    %p177 = scmp.ne.s32.totalorder %s168, %s169
    %p178 = scmp.eq.s32.totalorder %s18, 0
    %p179 = por %p177, %p178
    %p180 = scmp.ne.s32.totalorder %s168, %s169
    %p181 = scmp.eq.s32.totalorder %s19, 5
    %p182 = por %p180, %p181
    %p184 = scmp.ne.s32.totalorder %s169, %s183
    %p185 = scmp.eq.s32.totalorder %s19, 0
    %p186 = por %p184, %p185
    %s187 = ssub.s32 %s20, %s32
    %s188 = ssub.s32 %s21, %s28
    %s189 = sor.u32 %s187, %s188
    %p190 = scmp.eq.s32.totalorder %s189, 0
    %s192 = sadd.s32 %s191, 1
    %s193 = scalar_select %p190, %s191, %s192
    %p196 = pneg %p190
    %p197 = scmp.eq.s32.totalorder %s13, 5
    %p198 = por %p196, %p197
    %p199 = scmp.ne.s32.totalorder %s191, %s194
    %p200 = scmp.eq.s32.totalorder %s13, 0
    %p201 = por %p199, %p200
    %p202 = scmp.ne.s32.totalorder %s191, %s194
    %p203 = scmp.eq.s32.totalorder %s18, 5
    %p204 = por %p202, %p203
    %p205 = scmp.ne.s32.totalorder %s194, %s195
    %p206 = scmp.eq.s32.totalorder %s18, 0
    %p207 = por %p205, %p206
    %p208 = scmp.ne.s32.totalorder %s194, %s195
    %p209 = scmp.eq.s32.totalorder %s19, 5
    %p210 = por %p208, %p209
    %p212 = scmp.ne.s32.totalorder %s195, %s211
    %p213 = scmp.eq.s32.totalorder %s19, 0
    %p214 = por %p212, %p213
    %p215 = scmp.le.s32.totalorder 1, %s13
    %p216 = scmp.lt.s32.totalorder %s13, 7
    %p217 = pnand %p215, %p216
    %p218 = pneg %p217
    // Predicated region
    $region9: #{causal_cnn.7} parent=5 // pred_check
      _
    $region10: #{causal_cnn.7} parent=5 // pred_check_branch
      %220 = sbr.rel (%p217) target = $region12
    $region11: #{causal_cnn.7} parent=5 // pred_region
      %s221 = ssub.s32 %s13, 1
      // Predicated region
      $region13: #{causal_cnn.7} parent=11 // pred_check
        %p222 = pneg %p74
      $region14: #{causal_cnn.7} parent=11 // pred_check_branch
        %224 = sbr.rel (%p222) target = $region16
      $region15: #{causal_cnn.7} parent=11 // pred_region
        _
      $region16: #{causal_cnn.7} parent=11 // pred_fallthru
        _
      // Predicated region
      $region17: #{causal_cnn.7} parent=11 // pred_check
        %p225 = pneg %p95
      $region18: #{causal_cnn.7} parent=11 // pred_check_branch
        %227 = sbr.rel (%p225) target = $region20
      $region19: #{causal_cnn.7} parent=11 // pred_region
        _
      $region20: #{causal_cnn.7} parent=11 // pred_fallthru
        _
      // Predicated region
      $region21: #{causal_cnn.7} parent=11 // pred_check
        %p228 = pneg %p116
      $region22: #{causal_cnn.7} parent=11 // pred_check_branch
        %230 = sbr.rel (%p228) target = $region24
      $region23: #{causal_cnn.7} parent=11 // pred_region
        _
      $region24: #{causal_cnn.7} parent=11 // pred_fallthru
        _
      // Predicated region
      $region25: #{causal_cnn.7} parent=11 // pred_check
        %p231 = pneg %p137
      $region26: #{causal_cnn.7} parent=11 // pred_check_branch
        %233 = sbr.rel (%p231) target = $region28
      $region27: #{causal_cnn.7} parent=11 // pred_region
        _
      $region28: #{causal_cnn.7} parent=11 // pred_fallthru
        _
      // Predicated region
      $region29: #{causal_cnn.7} parent=11 // pred_check
        %p234 = pneg %p158
      $region30: #{causal_cnn.7} parent=11 // pred_check_branch
        %236 = sbr.rel (%p234) target = $region32
      $region31: #{causal_cnn.7} parent=11 // pred_region
        _
      $region32: #{causal_cnn.7} parent=11 // pred_fallthru
        _
      // Predicated region
      $region33: #{causal_cnn.7} parent=11 // pred_check
        %p237 = pneg %p179
      $region34: #{causal_cnn.7} parent=11 // pred_check_branch
        %239 = sbr.rel (%p237) target = $region36
      $region35: #{causal_cnn.7} parent=11 // pred_region
        _
      $region36: #{causal_cnn.7} parent=11 // pred_fallthru
        _
    $region12: #{causal_cnn.7} parent=5 // pred_fallthru
      _
    %p240 = scmp.lt.s32.totalorder %s13, 6
    // Predicated region
    $region37: #{causal_cnn.7} parent=5 // pred_check
      %p241 = pneg %p240
    $region38: #{causal_cnn.7} parent=5 // pred_check_branch
      %243 = sbr.rel (%p241) target = $region40
    $region39: #{causal_cnn.7} parent=5 // pred_region
      // Predicated region
      $region41: #{causal_cnn.7} parent=39 // pred_check
        %p244 = pneg %p47
      $region42: #{causal_cnn.7} parent=39 // pred_check_branch
        %246 = sbr.rel (%p244) target = $region44
      $region43: #{causal_cnn.7} parent=39 // pred_region
        %s247 = smul.u32 2, %s21
        %p248 = scmp.lt.s32.totalorder %s20, 1
        %s249 = scalar_select %p248, %s20, 1
        %p250 = scmp.lt.s32.totalorder %s247, 5
        %s251 = scalar_select %p250, %s247, 5
        %s252 = smul.addr %s249, 6
        %s253 = sadd.s32 %s251, %s252
        %s254 = smul.addr %s253, 8
        %s255 = scalar_lea.vmem %s0, %s254
        %s256 = smul.u32 2, %s21
      $region44: #{causal_cnn.7} parent=39 // pred_fallthru
        _
    $region40: #{causal_cnn.7} parent=5 // pred_fallthru
      _
    %p257 = scmp.le.s32.totalorder 1, %s13
    %p258 = scmp.lt.s32.totalorder %s13, 7
    %p259 = pnand %p257, %p258
    %p260 = pneg %p259
    // Predicated region
    $region45: #{causal_cnn.7} parent=5 // pred_check
      _
    $region46: #{causal_cnn.7} parent=5 // pred_check_branch
      %262 = sbr.rel (%p259) target = $region48
    $region47: #{causal_cnn.7} parent=5 // pred_region
      %s263 = ssub.s32 %s13, 1
      %s264 = smul.u32 2, %s23
      %p265 = scmp.lt.s32.totalorder %s22, 1
      %s266 = scalar_select %p265, %s22, 1
      %p267 = scmp.lt.s32.totalorder %s264, 5
      %s268 = scalar_select %p267, %s264, 5
      %s269 = smul.addr %s266, 6
      %s270 = sadd.s32 %s268, %s269
      %s271 = smul.addr %s270, 8
      %s272 = scalar_lea.vmem %s0, %s271
      %p273 = pneg %p53
      %p274 = pneg %p50
      %p275 = pneg %p74
      %p276 = pneg %p71
      %p277 = pneg %p95
      %p278 = pneg %p92
      %p279 = pneg %p116
      %p280 = pneg %p113
      %p281 = pneg %p137
      %p282 = pneg %p134
      %p283 = pneg %p158
      %p284 = pneg %p155
      %p285 = pneg %p179
      %p286 = pneg %p176
      %p287 = pneg %p207
      %p288 = pneg %p204
      %s289 = smul.u32 2, %s23
      %p290 = scmp.lt.s32.totalorder %s22, 1
      %s291 = scalar_select %p290, %s22, 1
      %p292 = scmp.lt.s32.totalorder %s289, 5
      %s293 = scalar_select %p292, %s289, 5
      %s294 = smul.addr %s291, 6
      %s295 = sadd.s32 %s293, %s294
      %s296 = smul.addr %s295, 8
      %s297 = scalar_lea.vmem %s7, %s296
      %s298 = smul.u32 2, %s23
      %p299 = scmp.lt.s32.totalorder %s22, 1
      %s300 = scalar_select %p299, %s22, 1
      %p301 = scmp.lt.s32.totalorder %s298, 5
      %s302 = scalar_select %p301, %s298, 5
      %s303 = smul.addr %s300, 6
      %s304 = sadd.s32 %s302, %s303
      %s305 = smul.addr %s304, 8
      %s306 = scalar_lea.vmem %s0, %s305
      %s307 = smul.u32 2, %s23
      %s308 = smul.u32 2, %s23
      %p309 = scmp.lt.s32.totalorder %s22, 1
      %s310 = scalar_select %p309, %s22, 1
      %p311 = scmp.lt.s32.totalorder %s308, 5
      %s312 = scalar_select %p311, %s308, 5
      %s313 = smul.addr %s310, 6
      %s314 = sadd.s32 %s312, %s313
      %s315 = smul.addr %s314, 8
      %s316 = scalar_lea.vmem %s7, %s315
      %s317 = smul.u32 2, %s23
      %v318 = vld [vmem:[%s306] sm:$0xff]
      %v319 = vld [vmem:[%s306 + $0x8] sm:$0xff]
      %p320 = scmp.eq.s32.totalorder %s23, 0
      // Predicated region
      $region49: #{causal_cnn.7} parent=47 // pred_check
        %p321 = pneg %p320
      $region50: #{causal_cnn.7} parent=47 // pred_check_branch
        %323 = sbr.rel (%p321) target = $region52
      $region51: #{causal_cnn.7} parent=47 // pred_region
        %324 = vst [vmem:[#allocation2] sm:$0xff] 0.0
        %325 = vst [vmem:[#allocation2 + $0x8] sm:$0xff] 0.0
        %326 = vst [vmem:[#allocation2 + $0x10] sm:$0xff] 0.0
        %327 = vst [vmem:[#allocation2 + $0x18] sm:$0xff] 0.0
      $region52: #{causal_cnn.7} parent=47 // pred_fallthru
        _
      %v328 = vld [vmem:[#allocation2] sm:$0xff]
      %v329 = vld [vmem:[#allocation2 + $0x8] sm:$0xff]
      %v330 = vld [vmem:[#allocation2 + $0x10] sm:$0xff]
      %v331 = vld [vmem:[#allocation2 + $0x18] sm:$0xff]
      %332 = vst [vmem:[#allocation2] sm:$0xff] %v330
      %333 = vst [vmem:[#allocation2 + $0x8] sm:$0xff] %v331
      %334 = vst [vmem:[#allocation2 + $0x10] sm:$0xff] %v318
      %335 = vst [vmem:[#allocation2 + $0x18] sm:$0xff] %v319
      %v336 = vld [vmem:[%s1] sm:$0xff]
      %v337 = vld [vmem:[%s1 + $0x8] sm:$0xff]
      %v338 = vld [vmem:[%s1 + $0x10] sm:$0xff]
      %v339 = vld [vmem:[%s1 + $0x18] sm:$0xff]
      %v340 = vld [vmem:[%s1 + $0x20] sm:$0xff]
      %v341 = vld [vmem:[%s1 + $0x28] sm:$0xff]
      %v342 = vld [vmem:[%s1 + $0x30] sm:$0xff]
      %v343 = vld [vmem:[%s1 + $0x38] sm:$0xff]
      %v344 = vld [vmem:[%s1 + $0x40] sm:$0xff]
      %v345 = vld [vmem:[%s1 + $0x48] sm:$0xff]
      %v346 = vld [vmem:[%s1 + $0x50] sm:$0xff]
      %v347 = vld [vmem:[%s1 + $0x58] sm:$0xff]
      %v348 = vld [vmem:[%s1 + $0x60] sm:$0xff]
      %v349 = vld [vmem:[%s1 + $0x68] sm:$0xff]
      %v350 = vld [vmem:[%s1 + $0x70] sm:$0xff]
      %v351 = vld [vmem:[%s1 + $0x78] sm:$0xff]
      %s352 = scalar_lea.vmem %s1, 128
      %v353 = vld [vmem:[%s352] sm:$0xff]
      %v354 = vld [vmem:[%s352 + $0x8] sm:$0xff]
      %v355 = vld [vmem:[%s352 + $0x10] sm:$0xff]
      %v356 = vld [vmem:[%s352 + $0x18] sm:$0xff]
      %v357 = vld [vmem:[%s352 + $0x20] sm:$0xff]
      %v358 = vld [vmem:[%s352 + $0x28] sm:$0xff]
      %v359 = vld [vmem:[%s352 + $0x30] sm:$0xff]
      %v360 = vld [vmem:[%s352 + $0x38] sm:$0xff]
      %v361 = vld [vmem:[%s352 + $0x40] sm:$0xff]
      %v362 = vld [vmem:[%s352 + $0x48] sm:$0xff]
      %v363 = vld [vmem:[%s352 + $0x50] sm:$0xff]
      %v364 = vld [vmem:[%s352 + $0x58] sm:$0xff]
      %v365 = vld [vmem:[%s352 + $0x60] sm:$0xff]
      %v366 = vld [vmem:[%s352 + $0x68] sm:$0xff]
      %v367 = vld [vmem:[%s352 + $0x70] sm:$0xff]
      %v368 = vld [vmem:[%s352 + $0x78] sm:$0xff]
      %369 = vmatprep.subr.mxu0 0.0
      %370 = vmatpush1.msra.mxu0 %v368
      %371 = vmatprep.subr.mxu0 0.0
      %372 = vmatpush1.msra.mxu0 %v367
      %373 = vmatprep.subr.mxu0 0.0
      %374 = vmatpush1.msra.mxu0 %v366
      %375 = vmatprep.subr.mxu0 0.0
      %376 = vmatpush1.msra.mxu0 %v365
      %377 = vmatprep.subr.mxu0 0.0
      %378 = vmatpush1.msra.mxu0 %v364
      %379 = vmatprep.subr.mxu0 0.0
      %380 = vmatpush1.msra.mxu0 %v363
      %381 = vmatprep.subr.mxu0 0.0
      %382 = vmatpush1.msra.mxu0 %v362
      %383 = vmatprep.subr.mxu0 0.0
      %384 = vmatpush1.msra.mxu0 %v361
      %385 = vmatprep.subr.mxu0 0.0
      %386 = vmatpush1.msra.mxu0 %v360
      %387 = vmatprep.subr.mxu0 0.0
      %388 = vmatpush1.msra.mxu0 %v359
      %389 = vmatprep.subr.mxu0 0.0
      %390 = vmatpush1.msra.mxu0 %v358
      %391 = vmatprep.subr.mxu0 0.0
      %392 = vmatpush1.msra.mxu0 %v357
      %393 = vmatprep.subr.mxu0 0.0
      %394 = vmatpush1.msra.mxu0 %v356
      %395 = vmatprep.subr.mxu0 0.0
      %396 = vmatpush1.msra.mxu0 %v355
      %397 = vmatprep.subr.mxu0 0.0
      %398 = vmatpush1.msra.mxu0 %v354
      %399 = vmatprep.subr.mxu0 0.0
      %400 = vmatpush1.msra.mxu0 %v353
      %401 = vmatprep.subr.mxu0 0.0
      %402 = vmatpush2.msra.mxu0 0.0
      %403 = vmatprep.subr.mxu0 0.0
      %404 = vmatpush2.msra.mxu0 0.0
      %405 = vmatprep.subr.mxu0 0.0
      %406 = vmatpush2.msra.mxu0 0.0
      %407 = vmatprep.subr.mxu0 0.0
      %408 = vmatpush2.msra.mxu0 0.0
      %409 = vmatprep.subr.mxu0 0.0
      %410 = vmatpush2.msra.mxu0 0.0
      %411 = vmatprep.subr.mxu0 0.0
      %412 = vmatpush2.msra.mxu0 0.0
      %413 = vmatprep.subr.mxu0 0.0
      %414 = vmatpush2.msra.mxu0 0.0
      %415 = vmatprep.subr.mxu0 0.0
      %416 = vmatpush2.msra.mxu0 0.0
      %417 = vmatprep.subr.mxu0 0.0
      %418 = vmatpush2.msra.mxu0 0.0
      %419 = vmatprep.subr.mxu0 0.0
      %420 = vmatpush2.msra.mxu0 0.0
      %421 = vmatprep.subr.mxu0 0.0
      %422 = vmatpush2.msra.mxu0 0.0
      %423 = vmatprep.subr.mxu0 0.0
      %424 = vmatpush2.msra.mxu0 0.0
      %425 = vmatprep.subr.mxu0 0.0
      %426 = vmatpush2.msra.mxu0 0.0
      %427 = vmatprep.subr.mxu0 0.0
      %428 = vmatpush2.msra.mxu0 0.0
      %429 = vmatprep.subr.mxu0 0.0
      %430 = vmatpush2.msra.mxu0 0.0
      %431 = vmatprep.subr.mxu0 0.0
      %432 = vmatpush2.msra.mxu0 0.0
      %433 = vmatprep.mubr.f32.mxu0 0.0
      %434 = vmatmul.mubr.f32.gmra.mxu0 %v329
      %v435 = vpop.f32.mrf.mxu0
      %v436 = vadd.f32 0.0, %v435
      %v437 = vpop.f32.mrf.mxu0
      %438 = vmatprep.mubr.f32.mxu0 0.0
      %439 = vmatmul.mubr.f32.gmra.mxu0 %v330
      %v440 = vpop.f32.mrf.mxu0
      %v441 = vadd.f32 0.0, %v440
      %v442 = vpop.f32.mrf.mxu0
      %443 = vmatprep.mubr.f32.mxu0 0.0
      %444 = vmatmul.mubr.f32.gmra.mxu0 %v331
      %v445 = vpop.f32.mrf.mxu0
      %v446 = vadd.f32 0.0, %v445
      %v447 = vpop.f32.mrf.mxu0
      %448 = vmatprep.mubr.f32.mxu0 0.0
      %449 = vmatmul.mubr.f32.gmra.mxu0 %v318
      %v450 = vpop.f32.mrf.mxu0
      %v451 = vadd.f32 0.0, %v450
      %v452 = vpop.f32.mrf.mxu0
      %453 = vdwg.mxu0
      %454 = vmatprep.subr.mxu0 0.0
      %455 = vmatpush1.msra.mxu0 %v351
      %456 = vmatprep.subr.mxu0 0.0
      %457 = vmatpush1.msra.mxu0 %v350
      %458 = vmatprep.subr.mxu0 0.0
      %459 = vmatpush1.msra.mxu0 %v349
      %460 = vmatprep.subr.mxu0 0.0
      %461 = vmatpush1.msra.mxu0 %v348
      %462 = vmatprep.subr.mxu0 0.0
      %463 = vmatpush1.msra.mxu0 %v347
      %464 = vmatprep.subr.mxu0 0.0
      %465 = vmatpush1.msra.mxu0 %v346
      %466 = vmatprep.subr.mxu0 0.0
      %467 = vmatpush1.msra.mxu0 %v345
      %468 = vmatprep.subr.mxu0 0.0
      %469 = vmatpush1.msra.mxu0 %v344
      %470 = vmatprep.subr.mxu0 0.0
      %471 = vmatpush1.msra.mxu0 %v343
      %472 = vmatprep.subr.mxu0 0.0
      %473 = vmatpush1.msra.mxu0 %v342
      %474 = vmatprep.subr.mxu0 0.0
      %475 = vmatpush1.msra.mxu0 %v341
      %476 = vmatprep.subr.mxu0 0.0
      %477 = vmatpush1.msra.mxu0 %v340
      %478 = vmatprep.subr.mxu0 0.0
      %479 = vmatpush1.msra.mxu0 %v339
      %480 = vmatprep.subr.mxu0 0.0
      %481 = vmatpush1.msra.mxu0 %v338
      %482 = vmatprep.subr.mxu0 0.0
      %483 = vmatpush1.msra.mxu0 %v337
      %484 = vmatprep.subr.mxu0 0.0
      %485 = vmatpush1.msra.mxu0 %v336
      %486 = vmatprep.subr.mxu0 0.0
      %487 = vmatpush2.msra.mxu0 0.0
      %488 = vmatprep.subr.mxu0 0.0
      %489 = vmatpush2.msra.mxu0 0.0
      %490 = vmatprep.subr.mxu0 0.0
      %491 = vmatpush2.msra.mxu0 0.0
      %492 = vmatprep.subr.mxu0 0.0
      %493 = vmatpush2.msra.mxu0 0.0
      %494 = vmatprep.subr.mxu0 0.0
      %495 = vmatpush2.msra.mxu0 0.0
      %496 = vmatprep.subr.mxu0 0.0
      %497 = vmatpush2.msra.mxu0 0.0
      %498 = vmatprep.subr.mxu0 0.0
      %499 = vmatpush2.msra.mxu0 0.0
      %500 = vmatprep.subr.mxu0 0.0
      %501 = vmatpush2.msra.mxu0 0.0
      %502 = vmatprep.subr.mxu0 0.0
      %503 = vmatpush2.msra.mxu0 0.0
      %504 = vmatprep.subr.mxu0 0.0
      %505 = vmatpush2.msra.mxu0 0.0
      %506 = vmatprep.subr.mxu0 0.0
      %507 = vmatpush2.msra.mxu0 0.0
      %508 = vmatprep.subr.mxu0 0.0
      %509 = vmatpush2.msra.mxu0 0.0
      %510 = vmatprep.subr.mxu0 0.0
      %511 = vmatpush2.msra.mxu0 0.0
      %512 = vmatprep.subr.mxu0 0.0
      %513 = vmatpush2.msra.mxu0 0.0
      %514 = vmatprep.subr.mxu0 0.0
      %515 = vmatpush2.msra.mxu0 0.0
      %516 = vmatprep.subr.mxu0 0.0
      %517 = vmatpush2.msra.mxu0 0.0
      %518 = vmatprep.mubr.f32.mxu0 0.0
      %519 = vmatmul.mubr.f32.gmra.mxu0 %v328
      %v520 = vpop.f32.mrf.mxu0
      %v521 = vadd.f32 %v436, %v520
      %v522 = vpop.f32.mrf.mxu0
      %523 = vmatprep.mubr.f32.mxu0 0.0
      %524 = vmatmul.mubr.f32.gmra.mxu0 %v329
      %v525 = vpop.f32.mrf.mxu0
      %v526 = vadd.f32 %v441, %v525
      %v527 = vpop.f32.mrf.mxu0
      %528 = vmatprep.mubr.f32.mxu0 0.0
      %529 = vmatmul.mubr.f32.gmra.mxu0 %v330
      %v530 = vpop.f32.mrf.mxu0
      %v531 = vadd.f32 %v446, %v530
      %v532 = vpop.f32.mrf.mxu0
      %533 = vmatprep.mubr.f32.mxu0 0.0
      %534 = vmatmul.mubr.f32.gmra.mxu0 %v331
      %v535 = vpop.f32.mrf.mxu0
      %v536 = vadd.f32 %v451, %v535
      %v537 = vpop.f32.mrf.mxu0
      %538 = vdwg.mxu0
      %s539 = scalar_lea.vmem %s1, 256
      %v540 = vld [vmem:[%s539] sm:$0xff]
      %v541 = vld [vmem:[%s539 + $0x8] sm:$0xff]
      %v542 = vld [vmem:[%s539 + $0x10] sm:$0xff]
      %v543 = vld [vmem:[%s539 + $0x18] sm:$0xff]
      %v544 = vld [vmem:[%s539 + $0x20] sm:$0xff]
      %v545 = vld [vmem:[%s539 + $0x28] sm:$0xff]
      %v546 = vld [vmem:[%s539 + $0x30] sm:$0xff]
      %v547 = vld [vmem:[%s539 + $0x38] sm:$0xff]
      %v548 = vld [vmem:[%s539 + $0x40] sm:$0xff]
      %v549 = vld [vmem:[%s539 + $0x48] sm:$0xff]
      %v550 = vld [vmem:[%s539 + $0x50] sm:$0xff]
      %v551 = vld [vmem:[%s539 + $0x58] sm:$0xff]
      %v552 = vld [vmem:[%s539 + $0x60] sm:$0xff]
      %v553 = vld [vmem:[%s539 + $0x68] sm:$0xff]
      %v554 = vld [vmem:[%s539 + $0x70] sm:$0xff]
      %v555 = vld [vmem:[%s539 + $0x78] sm:$0xff]
      %556 = vmatprep.subr.mxu0 0.0
      %557 = vmatpush1.msra.mxu0 %v555
      %558 = vmatprep.subr.mxu0 0.0
      %559 = vmatpush1.msra.mxu0 %v554
      %560 = vmatprep.subr.mxu0 0.0
      %561 = vmatpush1.msra.mxu0 %v553
      %562 = vmatprep.subr.mxu0 0.0
      %563 = vmatpush1.msra.mxu0 %v552
      %564 = vmatprep.subr.mxu0 0.0
      %565 = vmatpush1.msra.mxu0 %v551
      %566 = vmatprep.subr.mxu0 0.0
      %567 = vmatpush1.msra.mxu0 %v550
      %568 = vmatprep.subr.mxu0 0.0
      %569 = vmatpush1.msra.mxu0 %v549
      %570 = vmatprep.subr.mxu0 0.0
      %571 = vmatpush1.msra.mxu0 %v548
      %572 = vmatprep.subr.mxu0 0.0
      %573 = vmatpush1.msra.mxu0 %v547
      %574 = vmatprep.subr.mxu0 0.0
      %575 = vmatpush1.msra.mxu0 %v546
      %576 = vmatprep.subr.mxu0 0.0
      %577 = vmatpush1.msra.mxu0 %v545
      %578 = vmatprep.subr.mxu0 0.0
      %579 = vmatpush1.msra.mxu0 %v544
      %580 = vmatprep.subr.mxu0 0.0
      %581 = vmatpush1.msra.mxu0 %v543
      %582 = vmatprep.subr.mxu0 0.0
      %583 = vmatpush1.msra.mxu0 %v542
      %584 = vmatprep.subr.mxu0 0.0
      %585 = vmatpush1.msra.mxu0 %v541
      %586 = vmatprep.subr.mxu0 0.0
      %587 = vmatpush1.msra.mxu0 %v540
      %588 = vmatprep.subr.mxu0 0.0
      %589 = vmatpush2.msra.mxu0 0.0
      %590 = vmatprep.subr.mxu0 0.0
      %591 = vmatpush2.msra.mxu0 0.0
      %592 = vmatprep.subr.mxu0 0.0
      %593 = vmatpush2.msra.mxu0 0.0
      %594 = vmatprep.subr.mxu0 0.0
      %595 = vmatpush2.msra.mxu0 0.0
      %596 = vmatprep.subr.mxu0 0.0
      %597 = vmatpush2.msra.mxu0 0.0
      %598 = vmatprep.subr.mxu0 0.0
      %599 = vmatpush2.msra.mxu0 0.0
      %600 = vmatprep.subr.mxu0 0.0
      %601 = vmatpush2.msra.mxu0 0.0
      %602 = vmatprep.subr.mxu0 0.0
      %603 = vmatpush2.msra.mxu0 0.0
      %604 = vmatprep.subr.mxu0 0.0
      %605 = vmatpush2.msra.mxu0 0.0
      %606 = vmatprep.subr.mxu0 0.0
      %607 = vmatpush2.msra.mxu0 0.0
      %608 = vmatprep.subr.mxu0 0.0
      %609 = vmatpush2.msra.mxu0 0.0
      %610 = vmatprep.subr.mxu0 0.0
      %611 = vmatpush2.msra.mxu0 0.0
      %612 = vmatprep.subr.mxu0 0.0
      %613 = vmatpush2.msra.mxu0 0.0
      %614 = vmatprep.subr.mxu0 0.0
      %615 = vmatpush2.msra.mxu0 0.0
      %616 = vmatprep.subr.mxu0 0.0
      %617 = vmatpush2.msra.mxu0 0.0
      %618 = vmatprep.subr.mxu0 0.0
      %619 = vmatpush2.msra.mxu0 0.0
      %620 = vmatprep.mubr.f32.mxu0 0.0
      %621 = vmatmul.mubr.f32.gmra.mxu0 %v330
      %v622 = vpop.f32.mrf.mxu0
      %v623 = vadd.f32 0.0, %v622
      %v624 = vpop.f32.mrf.mxu0
      %625 = vmatprep.mubr.f32.mxu0 0.0
      %626 = vmatmul.mubr.f32.gmra.mxu0 %v331
      %v627 = vpop.f32.mrf.mxu0
      %v628 = vadd.f32 0.0, %v627
      %v629 = vpop.f32.mrf.mxu0
      %630 = vmatprep.mubr.f32.mxu0 0.0
      %631 = vmatmul.mubr.f32.gmra.mxu0 %v318
      %v632 = vpop.f32.mrf.mxu0
      %v633 = vadd.f32 0.0, %v632
      %v634 = vpop.f32.mrf.mxu0
      %635 = vmatprep.mubr.f32.mxu0 0.0
      %636 = vmatmul.mubr.f32.gmra.mxu0 %v319
      %v637 = vpop.f32.mrf.mxu0
      %v638 = vadd.f32 0.0, %v637
      %v639 = vpop.f32.mrf.mxu0
      %640 = vdwg.mxu0
      %v641 = vadd.f32 %v521, %v623
      %v642 = vadd.f32 %v526, %v628
      %v643 = vadd.f32 %v531, %v633
      %v644 = vadd.f32 %v536, %v638
      %v645 = vld [vmem:[%s2] sm:$0x1]
      %v647 = vlaneseq
      %v648 = vshrl.u32 %v647, 7
      %v649 = vsub.s32 0, %v648
      %v650 = vrot.slane %v645, %v649
      %v652 = vadd.f32 %v641, %v650
      %v653 = vadd.f32 %v642, %v650
      %v654 = vadd.f32 %v643, %v650
      %v655 = vadd.f32 %v644, %v650
      %v656 = vmul.f32 %v652, 0.01
      %v657 = vmul.f32 %v653, 0.01
      %v658 = vmul.f32 %v654, 0.01
      %v659 = vmul.f32 %v655, 0.01
      %v660 = vmax.f32 %v652, %v656
      %v661 = vmax.f32 %v653, %v657
      %v662 = vmax.f32 %v654, %v658
      %v663 = vmax.f32 %v655, %v659
      %v664 = vlaneseq
      %v665 = vshrl.u32 %v664, 7
      %v666 = vadd.s32 %v665, 8
      %v667 = vadd.s32 %v665, 16
      %v668 = vadd.s32 %v665, 24
      %s669 = smul.u32 %s23, 16
      %v670 = vstv %s669
      %v671 = vadd.s32 %v665, %v670
      %v672 = vadd.s32 %v666, %v670
      %v673 = vadd.s32 %v667, %v670
      %v674 = vadd.s32 %v668, %v670
      %vm675 = vcmp.ge.s32.totalorder %v671, 16
      %vm676 = vcmp.ge.s32.totalorder %v672, 16
      %vm677 = vcmp.ge.s32.totalorder %v673, 16
      %vm678 = vcmp.ge.s32.totalorder %v674, 16
      %v679 = vsel %vm675, 1, 0
      %v680 = vsel %vm676, 1, 0
      %v681 = vsel %vm677, 1, 0
      %v682 = vsel %vm678, 1, 0
      %vm683 = vcmp.eq.s32.totalorder %v679, 1
      %vm684 = vcmp.eq.s32.totalorder %v680, 1
      %vm685 = vcmp.eq.s32.totalorder %v681, 1
      %vm686 = vcmp.eq.s32.totalorder %v682, 1
      %v687 = vsel %vm683, %v660, 0.0
      %v688 = vsel %vm684, %v661, 0.0
      %v689 = vsel %vm685, %v662, 0.0
      %v690 = vsel %vm686, %v663, 0.0
      %v691 = vld [vmem:[%s3] sm:$0xff]
      %v692 = vld [vmem:[%s3 + $0x8] sm:$0xff]
      %v693 = vld [vmem:[%s3 + $0x10] sm:$0xff]
      %v694 = vld [vmem:[%s3 + $0x18] sm:$0xff]
      %v695 = vld [vmem:[%s3 + $0x20] sm:$0xff]
      %v696 = vld [vmem:[%s3 + $0x28] sm:$0xff]
      %v697 = vld [vmem:[%s3 + $0x30] sm:$0xff]
      %v698 = vld [vmem:[%s3 + $0x38] sm:$0xff]
      %v699 = vld [vmem:[%s3 + $0x40] sm:$0xff]
      %v700 = vld [vmem:[%s3 + $0x48] sm:$0xff]
      %v701 = vld [vmem:[%s3 + $0x50] sm:$0xff]
      %v702 = vld [vmem:[%s3 + $0x58] sm:$0xff]
      %v703 = vld [vmem:[%s3 + $0x60] sm:$0xff]
      %v704 = vld [vmem:[%s3 + $0x68] sm:$0xff]
      %v705 = vld [vmem:[%s3 + $0x70] sm:$0xff]
      %v706 = vld [vmem:[%s3 + $0x78] sm:$0xff]
      %s707 = scalar_lea.vmem %s3, 128
      %v708 = vld [vmem:[%s707] sm:$0xff]
      %v709 = vld [vmem:[%s707 + $0x8] sm:$0xff]
      %v710 = vld [vmem:[%s707 + $0x10] sm:$0xff]
      %v711 = vld [vmem:[%s707 + $0x18] sm:$0xff]
      %v712 = vld [vmem:[%s707 + $0x20] sm:$0xff]
      %v713 = vld [vmem:[%s707 + $0x28] sm:$0xff]
      %v714 = vld [vmem:[%s707 + $0x30] sm:$0xff]
      %v715 = vld [vmem:[%s707 + $0x38] sm:$0xff]
      %v716 = vld [vmem:[%s707 + $0x40] sm:$0xff]
      %v717 = vld [vmem:[%s707 + $0x48] sm:$0xff]
      %v718 = vld [vmem:[%s707 + $0x50] sm:$0xff]
      %v719 = vld [vmem:[%s707 + $0x58] sm:$0xff]
      %v720 = vld [vmem:[%s707 + $0x60] sm:$0xff]
      %v721 = vld [vmem:[%s707 + $0x68] sm:$0xff]
      %v722 = vld [vmem:[%s707 + $0x70] sm:$0xff]
      %v723 = vld [vmem:[%s707 + $0x78] sm:$0xff]
      %724 = vmatprep.subr.mxu0 0.0
      %725 = vmatpush1.msra.mxu0 %v723
      %726 = vmatprep.subr.mxu0 0.0
      %727 = vmatpush1.msra.mxu0 %v722
      %728 = vmatprep.subr.mxu0 0.0
      %729 = vmatpush1.msra.mxu0 %v721
      %730 = vmatprep.subr.mxu0 0.0
      %731 = vmatpush1.msra.mxu0 %v720
      %732 = vmatprep.subr.mxu0 0.0
      %733 = vmatpush1.msra.mxu0 %v719
      %734 = vmatprep.subr.mxu0 0.0
      %735 = vmatpush1.msra.mxu0 %v718
      %736 = vmatprep.subr.mxu0 0.0
      %737 = vmatpush1.msra.mxu0 %v717
      %738 = vmatprep.subr.mxu0 0.0
      %739 = vmatpush1.msra.mxu0 %v716
      %740 = vmatprep.subr.mxu0 0.0
      %741 = vmatpush1.msra.mxu0 %v715
      %742 = vmatprep.subr.mxu0 0.0
      %743 = vmatpush1.msra.mxu0 %v714
      %744 = vmatprep.subr.mxu0 0.0
      %745 = vmatpush1.msra.mxu0 %v713
      %746 = vmatprep.subr.mxu0 0.0
      %747 = vmatpush1.msra.mxu0 %v712
      %748 = vmatprep.subr.mxu0 0.0
      %749 = vmatpush1.msra.mxu0 %v711
      %750 = vmatprep.subr.mxu0 0.0
      %751 = vmatpush1.msra.mxu0 %v710
      %752 = vmatprep.subr.mxu0 0.0
      %753 = vmatpush1.msra.mxu0 %v709
      %754 = vmatprep.subr.mxu0 0.0
      %755 = vmatpush1.msra.mxu0 %v708
      %756 = vmatprep.subr.mxu0 0.0
      %757 = vmatpush2.msra.mxu0 0.0
      %758 = vmatprep.subr.mxu0 0.0
      %759 = vmatpush2.msra.mxu0 0.0
      %760 = vmatprep.subr.mxu0 0.0
      %761 = vmatpush2.msra.mxu0 0.0
      %762 = vmatprep.subr.mxu0 0.0
      %763 = vmatpush2.msra.mxu0 0.0
      %764 = vmatprep.subr.mxu0 0.0
      %765 = vmatpush2.msra.mxu0 0.0
      %766 = vmatprep.subr.mxu0 0.0
      %767 = vmatpush2.msra.mxu0 0.0
      %768 = vmatprep.subr.mxu0 0.0
      %769 = vmatpush2.msra.mxu0 0.0
      %770 = vmatprep.subr.mxu0 0.0
      %771 = vmatpush2.msra.mxu0 0.0
      %772 = vmatprep.subr.mxu0 0.0
      %773 = vmatpush2.msra.mxu0 0.0
      %774 = vmatprep.subr.mxu0 0.0
      %775 = vmatpush2.msra.mxu0 0.0
      %776 = vmatprep.subr.mxu0 0.0
      %777 = vmatpush2.msra.mxu0 0.0
      %778 = vmatprep.subr.mxu0 0.0
      %779 = vmatpush2.msra.mxu0 0.0
      %780 = vmatprep.subr.mxu0 0.0
      %781 = vmatpush2.msra.mxu0 0.0
      %782 = vmatprep.subr.mxu0 0.0
      %783 = vmatpush2.msra.mxu0 0.0
      %784 = vmatprep.subr.mxu0 0.0
      %785 = vmatpush2.msra.mxu0 0.0
      %786 = vmatprep.subr.mxu0 0.0
      %787 = vmatpush2.msra.mxu0 0.0
      %788 = vmatprep.mubr.f32.mxu0 0.0
      %789 = vmatmul.mubr.f32.gmra.mxu0 %v688
      %v790 = vpop.f32.mrf.mxu0
      %v791 = vadd.f32 0.0, %v790
      %v792 = vpop.f32.mrf.mxu0
      %793 = vmatprep.mubr.f32.mxu0 0.0
      %794 = vmatmul.mubr.f32.gmra.mxu0 %v689
      %v795 = vpop.f32.mrf.mxu0
      %v796 = vadd.f32 0.0, %v795
      %v797 = vpop.f32.mrf.mxu0
      %798 = vdwg.mxu0
      %799 = vmatprep.subr.mxu0 0.0
      %800 = vmatpush1.msra.mxu0 %v706
      %801 = vmatprep.subr.mxu0 0.0
      %802 = vmatpush1.msra.mxu0 %v705
      %803 = vmatprep.subr.mxu0 0.0
      %804 = vmatpush1.msra.mxu0 %v704
      %805 = vmatprep.subr.mxu0 0.0
      %806 = vmatpush1.msra.mxu0 %v703
      %807 = vmatprep.subr.mxu0 0.0
      %808 = vmatpush1.msra.mxu0 %v702
      %809 = vmatprep.subr.mxu0 0.0
      %810 = vmatpush1.msra.mxu0 %v701
      %811 = vmatprep.subr.mxu0 0.0
      %812 = vmatpush1.msra.mxu0 %v700
      %813 = vmatprep.subr.mxu0 0.0
      %814 = vmatpush1.msra.mxu0 %v699
      %815 = vmatprep.subr.mxu0 0.0
      %816 = vmatpush1.msra.mxu0 %v698
      %817 = vmatprep.subr.mxu0 0.0
      %818 = vmatpush1.msra.mxu0 %v697
      %819 = vmatprep.subr.mxu0 0.0
      %820 = vmatpush1.msra.mxu0 %v696
      %821 = vmatprep.subr.mxu0 0.0
      %822 = vmatpush1.msra.mxu0 %v695
      %823 = vmatprep.subr.mxu0 0.0
      %824 = vmatpush1.msra.mxu0 %v694
      %825 = vmatprep.subr.mxu0 0.0
      %826 = vmatpush1.msra.mxu0 %v693
      %827 = vmatprep.subr.mxu0 0.0
      %828 = vmatpush1.msra.mxu0 %v692
      %829 = vmatprep.subr.mxu0 0.0
      %830 = vmatpush1.msra.mxu0 %v691
      %831 = vmatprep.subr.mxu0 0.0
      %832 = vmatpush2.msra.mxu0 0.0
      %833 = vmatprep.subr.mxu0 0.0
      %834 = vmatpush2.msra.mxu0 0.0
      %835 = vmatprep.subr.mxu0 0.0
      %836 = vmatpush2.msra.mxu0 0.0
      %837 = vmatprep.subr.mxu0 0.0
      %838 = vmatpush2.msra.mxu0 0.0
      %839 = vmatprep.subr.mxu0 0.0
      %840 = vmatpush2.msra.mxu0 0.0
      %841 = vmatprep.subr.mxu0 0.0
      %842 = vmatpush2.msra.mxu0 0.0
      %843 = vmatprep.subr.mxu0 0.0
      %844 = vmatpush2.msra.mxu0 0.0
      %845 = vmatprep.subr.mxu0 0.0
      %846 = vmatpush2.msra.mxu0 0.0
      %847 = vmatprep.subr.mxu0 0.0
      %848 = vmatpush2.msra.mxu0 0.0
      %849 = vmatprep.subr.mxu0 0.0
      %850 = vmatpush2.msra.mxu0 0.0
      %851 = vmatprep.subr.mxu0 0.0
      %852 = vmatpush2.msra.mxu0 0.0
      %853 = vmatprep.subr.mxu0 0.0
      %854 = vmatpush2.msra.mxu0 0.0
      %855 = vmatprep.subr.mxu0 0.0
      %856 = vmatpush2.msra.mxu0 0.0
      %857 = vmatprep.subr.mxu0 0.0
      %858 = vmatpush2.msra.mxu0 0.0
      %859 = vmatprep.subr.mxu0 0.0
      %860 = vmatpush2.msra.mxu0 0.0
      %861 = vmatprep.subr.mxu0 0.0
      %862 = vmatpush2.msra.mxu0 0.0
      %863 = vmatprep.mubr.f32.mxu0 0.0
      %864 = vmatmul.mubr.f32.gmra.mxu0 %v687
      %v865 = vpop.f32.mrf.mxu0
      %v866 = vadd.f32 %v791, %v865
      %v867 = vpop.f32.mrf.mxu0
      %868 = vmatprep.mubr.f32.mxu0 0.0
      %869 = vmatmul.mubr.f32.gmra.mxu0 %v688
      %v870 = vpop.f32.mrf.mxu0
      %v871 = vadd.f32 %v796, %v870
      %v872 = vpop.f32.mrf.mxu0
      %873 = vdwg.mxu0
      %s874 = scalar_lea.vmem %s3, 256
      %v875 = vld [vmem:[%s874] sm:$0xff]
      %v876 = vld [vmem:[%s874 + $0x8] sm:$0xff]
      %v877 = vld [vmem:[%s874 + $0x10] sm:$0xff]
      %v878 = vld [vmem:[%s874 + $0x18] sm:$0xff]
      %v879 = vld [vmem:[%s874 + $0x20] sm:$0xff]
      %v880 = vld [vmem:[%s874 + $0x28] sm:$0xff]
      %v881 = vld [vmem:[%s874 + $0x30] sm:$0xff]
      %v882 = vld [vmem:[%s874 + $0x38] sm:$0xff]
      %v883 = vld [vmem:[%s874 + $0x40] sm:$0xff]
      %v884 = vld [vmem:[%s874 + $0x48] sm:$0xff]
      %v885 = vld [vmem:[%s874 + $0x50] sm:$0xff]
      %v886 = vld [vmem:[%s874 + $0x58] sm:$0xff]
      %v887 = vld [vmem:[%s874 + $0x60] sm:$0xff]
      %v888 = vld [vmem:[%s874 + $0x68] sm:$0xff]
      %v889 = vld [vmem:[%s874 + $0x70] sm:$0xff]
      %v890 = vld [vmem:[%s874 + $0x78] sm:$0xff]
      %891 = vmatprep.subr.mxu0 0.0
      %892 = vmatpush1.msra.mxu0 %v890
      %893 = vmatprep.subr.mxu0 0.0
      %894 = vmatpush1.msra.mxu0 %v889
      %895 = vmatprep.subr.mxu0 0.0
      %896 = vmatpush1.msra.mxu0 %v888
      %897 = vmatprep.subr.mxu0 0.0
      %898 = vmatpush1.msra.mxu0 %v887
      %899 = vmatprep.subr.mxu0 0.0
      %900 = vmatpush1.msra.mxu0 %v886
      %901 = vmatprep.subr.mxu0 0.0
      %902 = vmatpush1.msra.mxu0 %v885
      %903 = vmatprep.subr.mxu0 0.0
      %904 = vmatpush1.msra.mxu0 %v884
      %905 = vmatprep.subr.mxu0 0.0
      %906 = vmatpush1.msra.mxu0 %v883
      %907 = vmatprep.subr.mxu0 0.0
      %908 = vmatpush1.msra.mxu0 %v882
      %909 = vmatprep.subr.mxu0 0.0
      %910 = vmatpush1.msra.mxu0 %v881
      %911 = vmatprep.subr.mxu0 0.0
      %912 = vmatpush1.msra.mxu0 %v880
      %913 = vmatprep.subr.mxu0 0.0
      %914 = vmatpush1.msra.mxu0 %v879
      %915 = vmatprep.subr.mxu0 0.0
      %916 = vmatpush1.msra.mxu0 %v878
      %917 = vmatprep.subr.mxu0 0.0
      %918 = vmatpush1.msra.mxu0 %v877
      %919 = vmatprep.subr.mxu0 0.0
      %920 = vmatpush1.msra.mxu0 %v876
      %921 = vmatprep.subr.mxu0 0.0
      %922 = vmatpush1.msra.mxu0 %v875
      %923 = vmatprep.subr.mxu0 0.0
      %924 = vmatpush2.msra.mxu0 0.0
      %925 = vmatprep.subr.mxu0 0.0
      %926 = vmatpush2.msra.mxu0 0.0
      %927 = vmatprep.subr.mxu0 0.0
      %928 = vmatpush2.msra.mxu0 0.0
      %929 = vmatprep.subr.mxu0 0.0
      %930 = vmatpush2.msra.mxu0 0.0
      %931 = vmatprep.subr.mxu0 0.0
      %932 = vmatpush2.msra.mxu0 0.0
      %933 = vmatprep.subr.mxu0 0.0
      %934 = vmatpush2.msra.mxu0 0.0
      %935 = vmatprep.subr.mxu0 0.0
      %936 = vmatpush2.msra.mxu0 0.0
      %937 = vmatprep.subr.mxu0 0.0
      %938 = vmatpush2.msra.mxu0 0.0
      %939 = vmatprep.subr.mxu0 0.0
      %940 = vmatpush2.msra.mxu0 0.0
      %941 = vmatprep.subr.mxu0 0.0
      %942 = vmatpush2.msra.mxu0 0.0
      %943 = vmatprep.subr.mxu0 0.0
      %944 = vmatpush2.msra.mxu0 0.0
      %945 = vmatprep.subr.mxu0 0.0
      %946 = vmatpush2.msra.mxu0 0.0
      %947 = vmatprep.subr.mxu0 0.0
      %948 = vmatpush2.msra.mxu0 0.0
      %949 = vmatprep.subr.mxu0 0.0
      %950 = vmatpush2.msra.mxu0 0.0
      %951 = vmatprep.subr.mxu0 0.0
      %952 = vmatpush2.msra.mxu0 0.0
      %953 = vmatprep.subr.mxu0 0.0
      %954 = vmatpush2.msra.mxu0 0.0
      %955 = vmatprep.mubr.f32.mxu0 0.0
      %956 = vmatmul.mubr.f32.gmra.mxu0 %v689
      %v957 = vpop.f32.mrf.mxu0
      %v958 = vadd.f32 0.0, %v957
      %v959 = vpop.f32.mrf.mxu0
      %960 = vmatprep.mubr.f32.mxu0 0.0
      %961 = vmatmul.mubr.f32.gmra.mxu0 %v690
      %v962 = vpop.f32.mrf.mxu0
      %v963 = vadd.f32 0.0, %v962
      %v964 = vpop.f32.mrf.mxu0
      %965 = vdwg.mxu0
      %v966 = vadd.f32 %v866, %v958
      %v967 = vadd.f32 %v871, %v963
      %v968 = vld [vmem:[%s4] sm:$0x1]
      %v970 = vlaneseq
      %v971 = vshrl.u32 %v970, 7
      %v972 = vsub.s32 0, %v971
      %v973 = vrot.slane %v968, %v972
      %v975 = vadd.f32 %v966, %v973
      %v976 = vadd.f32 %v967, %v973
      %v977 = vmul.f32 %v975, 0.01
      %v978 = vmul.f32 %v976, 0.01
      %v979 = vmax.f32 %v975, %v977
      %v980 = vmax.f32 %v976, %v978
      %v981 = vld [vmem:[%s5] sm:$0xff]
      %v982 = vld [vmem:[%s5 + $0x8] sm:$0xff]
      %v983 = vld [vmem:[%s5 + $0x10] sm:$0xff]
      %v984 = vld [vmem:[%s5 + $0x18] sm:$0xff]
      %v985 = vld [vmem:[%s5 + $0x20] sm:$0xff]
      %v986 = vld [vmem:[%s5 + $0x28] sm:$0xff]
      %v987 = vld [vmem:[%s5 + $0x30] sm:$0xff]
      %v988 = vld [vmem:[%s5 + $0x38] sm:$0xff]
      %v989 = vld [vmem:[%s5 + $0x40] sm:$0xff]
      %v990 = vld [vmem:[%s5 + $0x48] sm:$0xff]
      %v991 = vld [vmem:[%s5 + $0x50] sm:$0xff]
      %v992 = vld [vmem:[%s5 + $0x58] sm:$0xff]
      %v993 = vld [vmem:[%s5 + $0x60] sm:$0xff]
      %v994 = vld [vmem:[%s5 + $0x68] sm:$0xff]
      %v995 = vld [vmem:[%s5 + $0x70] sm:$0xff]
      %v996 = vld [vmem:[%s5 + $0x78] sm:$0xff]
      %v997 = vld [vmem:[%s6] sm:$0x1]
      %v999 = vlaneseq
      %v1000 = vshrl.u32 %v999, 7
      %v1001 = vsub.s32 0, %v1000
      %v1002 = vrot.slane %v997, %v1001
      %1004 = vmatprep.subr.mxu0 0.0
      %1005 = vmatpush1.msra.mxu0 %v996
      %1006 = vmatprep.subr.mxu0 0.0
      %1007 = vmatpush1.msra.mxu0 %v995
      %1008 = vmatprep.subr.mxu0 0.0
      %1009 = vmatpush1.msra.mxu0 %v994
      %1010 = vmatprep.subr.mxu0 0.0
      %1011 = vmatpush1.msra.mxu0 %v993
      %1012 = vmatprep.subr.mxu0 0.0
      %1013 = vmatpush1.msra.mxu0 %v992
      %1014 = vmatprep.subr.mxu0 0.0
      %1015 = vmatpush1.msra.mxu0 %v991
      %1016 = vmatprep.subr.mxu0 0.0
      %1017 = vmatpush1.msra.mxu0 %v990
      %1018 = vmatprep.subr.mxu0 0.0
      %1019 = vmatpush1.msra.mxu0 %v989
      %1020 = vmatprep.subr.mxu0 0.0
      %1021 = vmatpush1.msra.mxu0 %v988
      %1022 = vmatprep.subr.mxu0 0.0
      %1023 = vmatpush1.msra.mxu0 %v987
      %1024 = vmatprep.subr.mxu0 0.0
      %1025 = vmatpush1.msra.mxu0 %v986
      %1026 = vmatprep.subr.mxu0 0.0
      %1027 = vmatpush1.msra.mxu0 %v985
      %1028 = vmatprep.subr.mxu0 0.0
      %1029 = vmatpush1.msra.mxu0 %v984
      %1030 = vmatprep.subr.mxu0 0.0
      %1031 = vmatpush1.msra.mxu0 %v983
      %1032 = vmatprep.subr.mxu0 0.0
      %1033 = vmatpush1.msra.mxu0 %v982
      %1034 = vmatprep.subr.mxu0 0.0
      %1035 = vmatpush1.msra.mxu0 %v981
      %1036 = vmatprep.subr.mxu0 0.0
      %1037 = vmatpush2.msra.mxu0 0.0
      %1038 = vmatprep.subr.mxu0 0.0
      %1039 = vmatpush2.msra.mxu0 0.0
      %1040 = vmatprep.subr.mxu0 0.0
      %1041 = vmatpush2.msra.mxu0 0.0
      %1042 = vmatprep.subr.mxu0 0.0
      %1043 = vmatpush2.msra.mxu0 0.0
      %1044 = vmatprep.subr.mxu0 0.0
      %1045 = vmatpush2.msra.mxu0 0.0
      %1046 = vmatprep.subr.mxu0 0.0
      %1047 = vmatpush2.msra.mxu0 0.0
      %1048 = vmatprep.subr.mxu0 0.0
      %1049 = vmatpush2.msra.mxu0 0.0
      %1050 = vmatprep.subr.mxu0 0.0
      %1051 = vmatpush2.msra.mxu0 0.0
      %1052 = vmatprep.subr.mxu0 0.0
      %1053 = vmatpush2.msra.mxu0 0.0
      %1054 = vmatprep.subr.mxu0 0.0
      %1055 = vmatpush2.msra.mxu0 0.0
      %1056 = vmatprep.subr.mxu0 0.0
      %1057 = vmatpush2.msra.mxu0 0.0
      %1058 = vmatprep.subr.mxu0 0.0
      %1059 = vmatpush2.msra.mxu0 0.0
      %1060 = vmatprep.subr.mxu0 0.0
      %1061 = vmatpush2.msra.mxu0 0.0
      %1062 = vmatprep.subr.mxu0 0.0
      %1063 = vmatpush2.msra.mxu0 0.0
      %1064 = vmatprep.subr.mxu0 0.0
      %1065 = vmatpush2.msra.mxu0 0.0
      %1066 = vmatprep.subr.mxu0 0.0
      %1067 = vmatpush2.msra.mxu0 0.0
      %1068 = vmatprep.mubr.f32.mxu0 0.0
      %1069 = vmatmul.mubr.f32.gmra.mxu0 %v318
      %v1070 = vpop.f32.mrf.mxu0
      %v1071 = vadd.f32 %v1002, %v1070
      %v1072 = vpop.f32.mrf.mxu0
      %1073 = vmatprep.mubr.f32.mxu0 0.0
      %1074 = vmatmul.mubr.f32.gmra.mxu0 %v319
      %v1075 = vpop.f32.mrf.mxu0
      %v1076 = vadd.f32 %v1002, %v1075
      %v1077 = vpop.f32.mrf.mxu0
      %1078 = vdwg.mxu0
      %v1079 = vadd.f32 %v979, %v1071
      %v1080 = vadd.f32 %v980, %v1076
      %1081 = vst [vmem:[%s316] sm:$0xff] %v1079
      %1082 = vst [vmem:[%s316 + $0x8] sm:$0xff] %v1080
      %s1083 = smul.u32 2, %s23
      %p1084 = scmp.lt.s32.totalorder %s22, 1
      %s1085 = scalar_select %p1084, %s22, 1
      %p1086 = scmp.lt.s32.totalorder %s1083, 5
      %s1087 = scalar_select %p1086, %s1083, 5
      %s1088 = smul.addr %s1085, 6
      %s1089 = sadd.s32 %s1087, %s1088
      %s1090 = smul.addr %s1089, 8
      %s1091 = scalar_lea.vmem %s7, %s1090
      // Predicated region
      $region53: #{causal_cnn.7} parent=47 // pred_check
        %p1092 = pneg %p204
      $region54: #{causal_cnn.7} parent=47 // pred_check_branch
        %1094 = sbr.rel (%p1092) target = $region56
      $region55: #{causal_cnn.7} parent=47 // pred_region
        %s1095 = smul.u32 2, %s23
      $region56: #{causal_cnn.7} parent=47 // pred_fallthru
        _
    $region48: #{causal_cnn.7} parent=5 // pred_fallthru
      _
    %p1096 = scmp.le.s32.totalorder 2, %s13
    // Predicated region
    $region57: #{causal_cnn.7} parent=5 // pred_check
      %p1097 = pneg %p1096
    $region58: #{causal_cnn.7} parent=5 // pred_check_branch
      %1099 = sbr.rel (%p1097) target = $region60
    $region59: #{causal_cnn.7} parent=5 // pred_region
      %s1100 = ssub.s32 %s13, 2
      // Predicated region
      $region61: #{causal_cnn.7} parent=59 // pred_check
        %p1101 = pneg %p210
      $region62: #{causal_cnn.7} parent=59 // pred_check_branch
        %1103 = sbr.rel (%p1101) target = $region64
      $region63: #{causal_cnn.7} parent=59 // pred_region
        %s1104 = smul.u32 2, %s25
        %p1105 = scmp.lt.s32.totalorder %s24, 1
        %s1106 = scalar_select %p1105, %s24, 1
        %p1107 = scmp.lt.s32.totalorder %s1104, 5
        %s1108 = scalar_select %p1107, %s1104, 5
        %s1109 = smul.addr %s1106, 6
        %s1110 = sadd.s32 %s1108, %s1109
        %s1111 = smul.addr %s1110, 8
        %s1112 = scalar_lea.vmem %s7, %s1111
      $region64: #{causal_cnn.7} parent=59 // pred_fallthru
        _
    $region60: #{causal_cnn.7} parent=5 // pred_fallthru
      _
  $region6: #{causal_cnn.7} parent=0 // loop_footer
    %s17 = sadd.s32 1, %s13
  $region7: #{causal_cnn.7} parent=0 // loop_footer_branch
    %12 = sbr.rel target = $region3
  $region8: #{causal_cnn.7} parent=0 // loop_exit
    _

</llo_original>
